<compile_context>
chip_gen: v5e
topology: v5e:2x2
jax: 0.10.0
libtpu: 0.0.40
codegen_flags: <defaults>
</compile_context>

<pallas_src>
import functools

import jax
import jax.numpy as jnp
from jax.experimental import pallas as pl
from jax.experimental.pallas import tpu as pltpu


def _round_up(x, m):
    return ((x + m - 1) // m) * m


def _pick_tile_rows(n_valid, halo_p, batch, target=1024):
    """Tile rows: multiple of halo_p, ~target, with a few grid steps for megacore."""
    cap = -(-n_valid // halo_p)                    # halo_p-chunks covering n_valid
    t = max(1, min(target // halo_p, cap))
    while batch * (-(-cap // t)) < 4 and t > 1:    # give each core >1 step if possible
        t = max(1, t // 2)
    return halo_p * t


def _rpn_kernel(x_main_ref, x_halo_ref, wc_ref, bc_ref, wh_ref, bh_ref,
                out_ref, win_ref, col_ref, *, cin, tile, wp, halo_p):
    # 1) Assemble the contiguous padded-row window (tile + halo_p, Cin) in VMEM
    #    from the non-overlapping main tile and the small halo chunk (both
    #    auto-pipelined straight from HBM, already bf16).
    win_ref[0:tile, :] = x_main_ref[0]
    win_ref[tile:tile + halo_p, :] = x_halo_ref[0]

    # 2) In-VMEM im2col: nine statically shifted (tile, Cin) copies packed into
    #    one (tile, 9*Cin) bf16 operand.  dy*wp offsets are 8-aligned (wp % 8 == 0).
    for dy in range(3):
        for dx in range(3):
            tap = dy * 3 + dx
            off = dy * wp + dx
            col_ref[:, tap * cin:(tap + 1) * cin] = win_ref[off:off + tile, :]

    # 3) 3x3 conv == single (tile, 9*Cin) @ (9*Cin, Cmid) matmul, f32 acc, bias, ReLU.
    h = jnp.dot(col_ref[...], wc_ref[...], preferred_element_type=jnp.float32)
    h = jnp.maximum(h + bc_ref[...], 0.0)

    # 4) Fused 1x1 heads: columns = [locs(4A) | scores interleaved bg,fg (2A) | pad].
    head = jnp.dot(h.astype(wh_ref.dtype), wh_ref[...],
                   preferred_element_type=jnp.float32) + bh_ref[...]
    out_ref[0] = head.astype(out_ref.dtype)


def rpn_forward(x_nchw, params, n_anchor, tile_rows=None):
    """Returns (rpn_scores, rpn_locs, rpn_fg_scores) matching PyTorch semantics.

    rpn_scores: (B, H*W*A, 2), rpn_locs: (B, H*W*A, 4), rpn_fg_scores: (B, H*W*A)
    """
    B, Cin, H, W = x_nchw.shape
    Cmid = params["w_conv"].shape[-1]
    A = n_anchor

    # Padded row stride rounded to a sublane multiple so dy*Wp tap offsets are
    # 8-aligned; the extra zero columns are discarded by the wrapper unpack.
    Wp = _round_up(W + 2, 8)
    halo = 2 * Wp + 2                      # max static tap offset
    halo_p = _round_up(halo, 8)            # halo chunk rows (divides tile_rows)
    n_valid = H * Wp                       # flattened output rows we keep

    if tile_rows is None:
        tile_rows = _pick_tile_rows(n_valid, halo_p, B)
    else:
        tile_rows = halo_p * max(1, -(-tile_rows // halo_p))
    n_tiles = -(-n_valid // tile_rows)
    p_out = n_tiles * tile_rows
    p_in = p_out + halo_p
    hchunks = tile_rows // halo_p

    # ---- glue (plain JAX): NCHW -> NHWC, zero-pad, flatten, cast bf16 ----
    x = jnp.transpose(x_nchw, (0, 2, 3, 1))                       # (B, H, W, Cin)
    xp = jnp.pad(x, ((0, 0), (1, 1), (1, Wp - W - 1), (0, 0)))     # (B, H+2, Wp, Cin)
    xflat = xp.reshape(B, (H + 2) * Wp, Cin)
    xflat = jnp.pad(xflat, ((0, 0), (0, p_in - (H + 2) * Wp), (0, 0)))
    xflat = xflat.astype(jnp.bfloat16)                             # halves input DMA

    # ---- fused head: [locs(4A) | scores interleaved bg,fg (2A) | pad to 128] ----
    nh = _round_up(6 * A, 128)
    w_head = jnp.concatenate([params["w_loc"], params["w_score"]], axis=1)
    w_head = jnp.pad(w_head, ((0, 0), (0, nh - 6 * A))).astype(jnp.bfloat16)
    b_head = jnp.concatenate([params["b_loc"], params["b_score"]], axis=1)
    b_head = jnp.pad(b_head, ((0, 0), (0, nh - 6 * A))).astype(jnp.float32)

    w_conv = params["w_conv"].astype(jnp.bfloat16)                 # (9*Cin, Cmid)
    b_conv = params["b_conv"].astype(jnp.float32)                  # (1, Cmid)

    kern = functools.partial(_rpn_kernel, cin=Cin, tile=tile_rows, wp=Wp,
                             halo_p=halo_p)
    grid_spec = pltpu.PrefetchScalarGridSpec(
        num_scalar_prefetch=0,
        grid=(B, n_tiles),
        in_specs=[
            # non-overlapping main row tile
            pl.BlockSpec((1, tile_rows, Cin), lambda b, t: (b, t, 0)),
            # halo chunk = first halo_p rows of the next tile (same HBM array,
            # different BlockSpec) -- overlap expressed without HBM duplication
            pl.BlockSpec((1, halo_p, Cin), lambda b, t: (b, (t + 1) * hchunks, 0)),
            pl.BlockSpec((9 * Cin, Cmid), lambda b, t: (0, 0)),
            pl.BlockSpec((1, Cmid), lambda b, t: (0, 0)),
            pl.BlockSpec((Cmid, nh), lambda b, t: (0, 0)),
            pl.BlockSpec((1, nh), lambda b, t: (0, 0)),
        ],
        out_specs=pl.BlockSpec((1, tile_rows, nh), lambda b, t: (b, t, 0)),
        scratch_shapes=[
            pltpu.VMEM((tile_rows + halo_p, Cin), jnp.bfloat16),   # window
            pltpu.VMEM((tile_rows, 9 * Cin), jnp.bfloat16),        # im2col
        ],
    )

    # Explicit VMEM budget (review: raise above the scoped default when tiles grow).
    vmem_bytes = (
        2 * (tile_rows + halo_p) * Cin * 2        # double-buffered bf16 input blocks
        + 2 * tile_rows * nh * 4                  # double-buffered f32 output block
        + 2 * (9 * Cin * Cmid + Cmid * nh) * 2    # double-buffered bf16 weights
        + (tile_rows + halo_p) * Cin * 2          # window scratch
        + tile_rows * 9 * Cin * 2                 # im2col scratch
        + tile_rows * (Cmid + nh) * 4             # matmul intermediates
    )
    vmem_limit = int(min(max(2 * vmem_bytes, 32 << 20), 56 << 20))

    out = pl.pallas_call(
        kern,
        out_shape=jax.ShapeDtypeStruct((B, p_out, nh), jnp.float32),
        grid_spec=grid_spec,
        compiler_params=pltpu.CompilerParams(
            dimension_semantics=("parallel", "parallel"),
            vmem_limit_bytes=vmem_limit),
    )(xflat, xflat, w_conv, b_conv, w_head, b_head)

    # ---- unpack the lane-dense output (drop padded rows / garbage columns) ----
    out = out[:, :n_valid, :].reshape(B, H, Wp, nh)[:, :, :W, :]   # (B, H, W, nh)
    rpn_locs = out[..., :4 * A].reshape(B, H * W * A, 4)
    rpn_scores = out[..., 4 * A:6 * A].reshape(B, H * W * A, 2)    # [bg, fg] per anchor
    # softmax([bg, fg])[1] == sigmoid(fg - bg); tiny elementwise op in the wrapper,
    # bit-consistent with the stored logits.
    rpn_fg_scores = jax.nn.sigmoid(rpn_scores[..., 1] - rpn_scores[..., 0])
    # TODO(synk): ProposalCreator (anchor decode + clip + top-k + NMS) producing
    # rois / roi_indices is not defined in the provided module source and is not
    # implemented here.
    return rpn_scores, rpn_locs, rpn_fg_scores


def _make_params(key, cin, cmid, n_anchor):
    ks = jax.random.split(key, 6)
    std = 0.01  # nn.init.normal_(weight, 0, 0.01)
    return {
        "w_conv": std * jax.random.normal(ks[0], (9 * cin, cmid), jnp.float32),
        "b_conv": 0.01 * jax.random.normal(ks[1], (1, cmid), jnp.float32),
        "w_loc": std * jax.random.normal(ks[2], (cmid, n_anchor * 4), jnp.float32),
        "b_loc": 0.01 * jax.random.normal(ks[3], (1, n_anchor * 4), jnp.float32),
        "w_score": std * jax.random.normal(ks[4], (cmid, n_anchor * 2), jnp.float32),
        "b_score": 0.01 * jax.random.normal(ks[5], (1, n_anchor * 2), jnp.float32),
    }


def _reference(x_nchw, params, n_anchor):
    B, Cin, H, W = x_nchw.shape
    Cmid = params["w_conv"].shape[-1]
    x = jnp.transpose(x_nchw, (0, 2, 3, 1))
    w4 = params["w_conv"].reshape(3, 3, Cin, Cmid)                 # HWIO
    h = jax.lax.conv_general_dilated(
        x, w4, window_strides=(1, 1), padding="SAME",
        dimension_numbers=("NHWC", "HWIO", "NHWC"))
    h = jnp.maximum(h + params["b_conv"].reshape(1, 1, 1, -1), 0.0)
    locs = jnp.einsum("bhwc,cd->bhwd", h, params["w_loc"]) + params["b_loc"]
    scores = jnp.einsum("bhwc,cd->bhwd", h, params["w_score"]) + params["b_score"]
    rpn_locs = locs.reshape(B, -1, 4)
    rpn_scores = scores.reshape(B, -1, 2)
    sm = jax.nn.softmax(scores.reshape(B, H, W, n_anchor, 2), axis=-1)
    rpn_fg = sm[..., 1].reshape(B, -1)
    return rpn_scores, rpn_locs, rpn_fg


if __name__ == "__main__":
    # "Small" config (module defaults are 512/512 channels); 128 channels keeps
    # the im2col lane offsets 128-aligned while staying tiny.
    B, Cin, Cmid, H, W = 2, 128, 128, 16, 16
    n_anchor = 9  # base_anchor_length default

    key = jax.random.PRNGKey(0)
    kx, kp = jax.random.split(key)
    x = jax.random.normal(kx, (B, Cin, H, W), jnp.float32)         # NCHW like PyTorch
    params = _make_params(kp, Cin, Cmid, n_anchor)

    rpn_scores, rpn_locs, rpn_fg = jax.block_until_ready(
        rpn_forward(x, params, n_anchor))

    ref_scores, ref_locs, ref_fg = _reference(x, params, n_anchor)

    assert rpn_scores.shape == (B, H * W * n_anchor, 2)
    assert rpn_locs.shape == (B, H * W * n_anchor, 4)
    assert rpn_fg.shape == (B, H * W * n_anchor)
    # bf16 MXU operands (f32 accumulation) -> relaxed tolerance vs f32 reference.
    assert jnp.allclose(rpn_scores, ref_scores, rtol=2e-2, atol=5e-3)
    assert jnp.allclose(rpn_locs, ref_locs, rtol=2e-2, atol=5e-3)
    assert jnp.allclose(rpn_fg, ref_fg, rtol=2e-2, atol=5e-3)

    print("KERNEL_OK")
</pallas_src>

<mosaic_0001>
module attributes {stable_mosaic.version = 11 : i64} {
  func.func @_rpn_kernel(%arg0: i32, %arg1: i32, %arg2: memref<1x168x128xbf16, #tpu.memory_space<vmem>>, %arg3: memref<1x56x128xbf16, #tpu.memory_space<vmem>>, %arg4: memref<1152x128xbf16, #tpu.memory_space<vmem>>, %arg5: memref<1x128xf32, #tpu.memory_space<vmem>>, %arg6: memref<128x128xbf16, #tpu.memory_space<vmem>>, %arg7: memref<1x128xf32, #tpu.memory_space<vmem>>, %arg8: memref<1x168x128xf32, #tpu.memory_space<vmem>>, %arg9: memref<224x128xbf16, #tpu.memory_space<vmem>>, %arg10: memref<168x1152xbf16, #tpu.memory_space<vmem>>) attributes {dimension_semantics = [#tpu.dimension_semantics<parallel>, #tpu.dimension_semantics<parallel>], iteration_bounds = array<i64: 2, 3>, scalar_prefetch = 0 : i64, scratch_operands = 2 : i64, tpu.core_type = #tpu.core_type<tc>, window_params = [{transform_indices = @transform_0, window_bounds = array<i64: 1, 168, 128>}, {transform_indices = @transform_1, window_bounds = array<i64: 1, 56, 128>}, {pipeline_mode = #tpu.pipeline_mode<synchronous>, transform_indices = @transform_2, window_bounds = array<i64: 1152, 128>}, {pipeline_mode = #tpu.pipeline_mode<synchronous>, transform_indices = @transform_3, window_bounds = array<i64: 1, 128>}, {pipeline_mode = #tpu.pipeline_mode<synchronous>, transform_indices = @transform_4, window_bounds = array<i64: 128, 128>}, {pipeline_mode = #tpu.pipeline_mode<synchronous>, transform_indices = @transform_5, window_bounds = array<i64: 1, 128>}, {transform_indices = @transform_6, window_bounds = array<i64: 1, 168, 128>}]} {
    %c0 = arith.constant 0 : index
    %c0_0 = arith.constant 0 : index
    %c0_1 = arith.constant 0 : index
    %0 = vector.load %arg2[%c0, %c0_0, %c0_1] : memref<1x168x128xbf16, #tpu.memory_space<vmem>>, vector<1x168x128xbf16>
    %1 = vector.shape_cast %0 : vector<1x168x128xbf16> to vector<168x128xbf16>
    %c0_2 = arith.constant 0 : index
    %c0_3 = arith.constant 0 : index
    %2 = vector.load %arg9[%c0_2, %c0_3] : memref<224x128xbf16, #tpu.memory_space<vmem>>, vector<168x128xbf16>
    tpu.vector_store %arg9[%c0_2, %c0_3], %1 {strides = array<i32>} : memref<224x128xbf16, #tpu.memory_space<vmem>>, vector<168x128xbf16>,
    %c0_4 = arith.constant 0 : index
    %c0_5 = arith.constant 0 : index
    %c0_6 = arith.constant 0 : index
    %3 = vector.load %arg3[%c0_4, %c0_5, %c0_6] : memref<1x56x128xbf16, #tpu.memory_space<vmem>>, vector<1x56x128xbf16>
    %4 = vector.shape_cast %3 : vector<1x56x128xbf16> to vector<56x128xbf16>
    %c168 = arith.constant 168 : index
    %c0_7 = arith.constant 0 : index
    %5 = vector.load %arg9[%c168, %c0_7] : memref<224x128xbf16, #tpu.memory_space<vmem>>, vector<56x128xbf16>
    tpu.vector_store %arg9[%c168, %c0_7], %4 {strides = array<i32>} : memref<224x128xbf16, #tpu.memory_space<vmem>>, vector<56x128xbf16>,
    %c0_8 = arith.constant 0 : index
    %c0_9 = arith.constant 0 : index
    %6 = vector.load %arg9[%c0_8, %c0_9] : memref<224x128xbf16, #tpu.memory_space<vmem>>, vector<168x128xbf16>
    %c0_10 = arith.constant 0 : index
    %c0_11 = arith.constant 0 : index
    %7 = vector.load %arg10[%c0_10, %c0_11] : memref<168x1152xbf16, #tpu.memory_space<vmem>>, vector<168x128xbf16>
    tpu.vector_store %arg10[%c0_10, %c0_11], %6 {strides = array<i32>} : memref<168x1152xbf16, #tpu.memory_space<vmem>>, vector<168x128xbf16>,
    %c1 = arith.constant 1 : index
    %c0_12 = arith.constant 0 : index
    %8 = vector.load %arg9[%c1, %c0_12] : memref<224x128xbf16, #tpu.memory_space<vmem>>, vector<168x128xbf16>
    %c0_13 = arith.constant 0 : index
    %c128 = arith.constant 128 : index
    %9 = vector.load %arg10[%c0_13, %c128] : memref<168x1152xbf16, #tpu.memory_space<vmem>>, vector<168x128xbf16>
    tpu.vector_store %arg10[%c0_13, %c128], %8 {strides = array<i32>} : memref<168x1152xbf16, #tpu.memory_space<vmem>>, vector<168x128xbf16>,
    %c2 = arith.constant 2 : index
    %c0_14 = arith.constant 0 : index
    %10 = vector.load %arg9[%c2, %c0_14] : memref<224x128xbf16, #tpu.memory_space<vmem>>, vector<168x128xbf16>
    %c0_15 = arith.constant 0 : index
    %c256 = arith.constant 256 : index
    %11 = vector.load %arg10[%c0_15, %c256] : memref<168x1152xbf16, #tpu.memory_space<vmem>>, vector<168x128xbf16>
    tpu.vector_store %arg10[%c0_15, %c256], %10 {strides = array<i32>} : memref<168x1152xbf16, #tpu.memory_space<vmem>>, vector<168x128xbf16>,
    %c24 = arith.constant 24 : index
    %c0_16 = arith.constant 0 : index
    %12 = vector.load %arg9[%c24, %c0_16] : memref<224x128xbf16, #tpu.memory_space<vmem>>, vector<168x128xbf16>
    %c0_17 = arith.constant 0 : index
    %c384 = arith.constant 384 : index
    %13 = vector.load %arg10[%c0_17, %c384] : memref<168x1152xbf16, #tpu.memory_space<vmem>>, vector<168x128xbf16>
    tpu.vector_store %arg10[%c0_17, %c384], %12 {strides = array<i32>} : memref<168x1152xbf16, #tpu.memory_space<vmem>>, vector<168x128xbf16>,
    %c25 = arith.constant 25 : index
    %c0_18 = arith.constant 0 : index
    %14 = vector.load %arg9[%c25, %c0_18] : memref<224x128xbf16, #tpu.memory_space<vmem>>, vector<168x128xbf16>
    %c0_19 = arith.constant 0 : index
    %c512 = arith.constant 512 : index
    %15 = vector.load %arg10[%c0_19, %c512] : memref<168x1152xbf16, #tpu.memory_space<vmem>>, vector<168x128xbf16>
    tpu.vector_store %arg10[%c0_19, %c512], %14 {strides = array<i32>} : memref<168x1152xbf16, #tpu.memory_space<vmem>>, vector<168x128xbf16>,
    %c26 = arith.constant 26 : index
    %c0_20 = arith.constant 0 : index
    %16 = vector.load %arg9[%c26, %c0_20] : memref<224x128xbf16, #tpu.memory_space<vmem>>, vector<168x128xbf16>
    %c0_21 = arith.constant 0 : index
    %c640 = arith.constant 640 : index
    %17 = vector.load %arg10[%c0_21, %c640] : memref<168x1152xbf16, #tpu.memory_space<vmem>>, vector<168x128xbf16>
    tpu.vector_store %arg10[%c0_21, %c640], %16 {strides = array<i32>} : memref<168x1152xbf16, #tpu.memory_space<vmem>>, vector<168x128xbf16>,
    %c48 = arith.constant 48 : index
    %c0_22 = arith.constant 0 : index
    %18 = vector.load %arg9[%c48, %c0_22] : memref<224x128xbf16, #tpu.memory_space<vmem>>, vector<168x128xbf16>
    %c0_23 = arith.constant 0 : index
    %c768 = arith.constant 768 : index
    %19 = vector.load %arg10[%c0_23, %c768] : memref<168x1152xbf16, #tpu.memory_space<vmem>>, vector<168x128xbf16>
    tpu.vector_store %arg10[%c0_23, %c768], %18 {strides = array<i32>} : memref<168x1152xbf16, #tpu.memory_space<vmem>>, vector<168x128xbf16>,
    %c49 = arith.constant 49 : index
    %c0_24 = arith.constant 0 : index
    %20 = vector.load %arg9[%c49, %c0_24] : memref<224x128xbf16, #tpu.memory_space<vmem>>, vector<168x128xbf16>
    %c0_25 = arith.constant 0 : index
    %c896 = arith.constant 896 : index
    %21 = vector.load %arg10[%c0_25, %c896] : memref<168x1152xbf16, #tpu.memory_space<vmem>>, vector<168x128xbf16>
    tpu.vector_store %arg10[%c0_25, %c896], %20 {strides = array<i32>} : memref<168x1152xbf16, #tpu.memory_space<vmem>>, vector<168x128xbf16>,
    %c50 = arith.constant 50 : index
    %c0_26 = arith.constant 0 : index
    %22 = vector.load %arg9[%c50, %c0_26] : memref<224x128xbf16, #tpu.memory_space<vmem>>, vector<168x128xbf16>
    %c0_27 = arith.constant 0 : index
    %c1024 = arith.constant 1024 : index
    %23 = vector.load %arg10[%c0_27, %c1024] : memref<168x1152xbf16, #tpu.memory_space<vmem>>, vector<168x128xbf16>
    tpu.vector_store %arg10[%c0_27, %c1024], %22 {strides = array<i32>} : memref<168x1152xbf16, #tpu.memory_space<vmem>>, vector<168x128xbf16>,
    %c0_28 = arith.constant 0 : index
    %c0_29 = arith.constant 0 : index
    %24 = vector.load %arg10[%c0_28, %c0_29] : memref<168x1152xbf16, #tpu.memory_space<vmem>>, vector<168x1152xbf16>
    %c0_30 = arith.constant 0 : index
    %c0_31 = arith.constant 0 : index
    %25 = vector.load %arg4[%c0_30, %c0_31] : memref<1152x128xbf16, #tpu.memory_space<vmem>>, vector<1152x128xbf16>
    %cst = arith.constant dense<0.000000e+00> : vector<168x128xf32>
    %26 = tpu.matmul %24, %25, %cst {dimension_numbers = #tpu.dot_dimension_numbers<[1], [0], [0], [1], [0, 0, 1, 1], [], []>} : vector<168x1152xbf16>, vector<1152x128xbf16>, vector<168x128xf32> -> vector<168x128xf32>
    %c0_32 = arith.constant 0 : index
    %c0_33 = arith.constant 0 : index
    %27 = vector.load %arg5[%c0_32, %c0_33] : memref<1x128xf32, #tpu.memory_space<vmem>>, vector<1x128xf32>
    %28 = vector.broadcast %27 : vector<1x128xf32> to vector<168x128xf32>
    %29 = arith.addf %26, %28 : vector<168x128xf32>
    %cst_34 = arith.constant 0.000000e+00 : f32
    %30 = vector.broadcast %cst_34 : f32 to vector<168x128xf32>
    %31 = arith.maximumf %29, %30 : vector<168x128xf32>
    %32 = arith.truncf %31 : vector<168x128xf32> to vector<168x128xbf16>
    %c0_35 = arith.constant 0 : index
    %c0_36 = arith.constant 0 : index
    %33 = vector.load %arg6[%c0_35, %c0_36] : memref<128x128xbf16, #tpu.memory_space<vmem>>, vector<128x128xbf16>
    %cst_37 = arith.constant dense<0.000000e+00> : vector<168x128xf32>
    %34 = tpu.matmul %32, %33, %cst_37 {dimension_numbers = #tpu.dot_dimension_numbers<[1], [0], [0], [1], [0, 0, 1, 1], [], []>} : vector<168x128xbf16>, vector<128x128xbf16>, vector<168x128xf32> -> vector<168x128xf32>
    %c0_38 = arith.constant 0 : index
    %c0_39 = arith.constant 0 : index
    %35 = vector.load %arg7[%c0_38, %c0_39] : memref<1x128xf32, #tpu.memory_space<vmem>>, vector<1x128xf32>
    %36 = vector.broadcast %35 : vector<1x128xf32> to vector<168x128xf32>
    %37 = arith.addf %34, %36 : vector<168x128xf32>
    %c0_40 = arith.constant 0 : index
    %c0_41 = arith.constant 0 : index
    %c0_42 = arith.constant 0 : index
    %38 = vector.load %arg8[%c0_40, %c0_41, %c0_42] : memref<1x168x128xf32, #tpu.memory_space<vmem>>, vector<1x168x128xf32>
    %39 = vector.shape_cast %38 : vector<1x168x128xf32> to vector<168x128xf32>
    %40 = vector.shape_cast %37 : vector<168x128xf32> to vector<1x168x128xf32>
    tpu.vector_store %arg8[%c0_40, %c0_41, %c0_42], %40 {strides = array<i32>} : memref<1x168x128xf32, #tpu.memory_space<vmem>>, vector<1x168x128xf32>,
    return
  }
  func.func @transform_0(%arg0: i32, %arg1: i32) -> (i32, i32, i32) {
    %c0_i32 = arith.constant 0 : i32
    %c0_i32_0 = arith.constant 0 : i32
    return %arg0, %arg1, %c0_i32 : i32, i32, i32
  }
  func.func @transform_1(%arg0: i32, %arg1: i32) -> (i32, i32, i32) {
    %c1_i32 = arith.constant 1 : i32
    %0 = arith.addi %arg1, %c1_i32 : i32
    %c3_i32 = arith.constant 3 : i32
    %1 = arith.muli %0, %c3_i32 : i32
    %c0_i32 = arith.constant 0 : i32
    %c0_i32_0 = arith.constant 0 : i32
    return %arg0, %1, %c0_i32 : i32, i32, i32
  }
  func.func @transform_2(%arg0: i32, %arg1: i32) -> (i32, i32) {
    %c0_i32 = arith.constant 0 : i32
    %c0_i32_0 = arith.constant 0 : i32
    %c0_i32_1 = arith.constant 0 : i32
    return %c0_i32, %c0_i32_0 : i32, i32
  }
  func.func @transform_3(%arg0: i32, %arg1: i32) -> (i32, i32) {
    %c0_i32 = arith.constant 0 : i32
    %c0_i32_0 = arith.constant 0 : i32
    %c0_i32_1 = arith.constant 0 : i32
    return %c0_i32, %c0_i32_0 : i32, i32
  }
  func.func @transform_4(%arg0: i32, %arg1: i32) -> (i32, i32) {
    %c0_i32 = arith.constant 0 : i32
    %c0_i32_0 = arith.constant 0 : i32
    %c0_i32_1 = arith.constant 0 : i32
    return %c0_i32, %c0_i32_0 : i32, i32
  }
  func.func @transform_5(%arg0: i32, %arg1: i32) -> (i32, i32) {
    %c0_i32 = arith.constant 0 : i32
    %c0_i32_0 = arith.constant 0 : i32
    %c0_i32_1 = arith.constant 0 : i32
    return %c0_i32, %c0_i32_0 : i32, i32
  }
  func.func @transform_6(%arg0: i32, %arg1: i32) -> (i32, i32, i32) {
    %c0_i32 = arith.constant 0 : i32
    %c0_i32_0 = arith.constant 0 : i32
    return %arg0, %arg1, %c0_i32 : i32, i32, i32
  }
}

</mosaic_0001>

<llo_original>
// kernel: tpu_custom_call.1
$region0: #{tpu_custom_call.1}
  #allocation0 [shape = 'u32[]', space=smem, size = 0x4, offset = 0x4, fixed_abs, tag = 'smem constant byte address 0x4 - core index']
  #allocation1 [shape = 'u32[72,128]{1,0:T(1,128)}', space=vmem, size = 0x9000, scoped, tag = 'internal scratch']
  #allocation2 [shape = 'bf16[224,128]{1,0:T(8,128)(2,1)}', space=vmem, size = 0xe000, scoped, tag = 'scratch operand']
  #allocation3 [shape = 'bf16[168,1152]{1,0:T(8,128)(2,1)}', space=vmem, size = 0x5e800, scoped, tag = 'scratch operand']
  %s0 = inlined_call_operand.hbm [shape: bf16[2,560,128], index: 0, kind: input, shape index: {}]
  %s1 = inlined_call_operand.hbm [shape: bf16[2,560,128], index: 1, kind: input, shape index: {}]
  %s2 = inlined_call_operand.hbm [shape: bf16[1152,128], index: 2, kind: input, shape index: {}]
  %s3 = inlined_call_operand.vmem [shape: f32[1,128], index: 3, kind: input, shape index: {}]
  %s4 = inlined_call_operand.hbm [shape: bf16[128,128], index: 4, kind: input, shape index: {}]
  %s5 = inlined_call_operand.vmem [shape: f32[1,128], index: 5, kind: input, shape index: {}]
  %s6 = inlined_call_operand.hbm [shape: f32[2,504,128], index: 6, kind: output, shape index: {}]
  %s7 = sld [smem:[#allocation0]]
  $region73: #{tpu_custom_call.1} parent=0
    _
  %s9 = ssub.s32 1, %s7
  %s10 = scalar_select 0, %s9, %s7
  $region1: #{tpu_custom_call.1} parent=0
    #allocation4 [shape = 'u8[86016]{0}', space=vmem, size = 0x15000, scoped, tag = 'input window, operand 0']
    #allocation5 [shape = 's32[2]{0}', space=sflag, size = 0x8, scoped, tag = 'scoped memory for tpu_custom_call.1']
    #allocation6 [shape = 's32[2]{0}', space=sflag, size = 0x8, scoped, tag = 'scoped memory for tpu_custom_call.1']
    #allocation7 [shape = 'u8[28672]{0}', space=vmem, size = 0x7000, scoped, tag = 'input window, operand 1']
    #allocation8 [shape = 's32[2]{0}', space=sflag, size = 0x8, scoped, tag = 'scoped memory for tpu_custom_call.1']
    #allocation9 [shape = 'u8[294912]{0}', space=vmem, size = 0x48000, scoped, tag = 'input window, operand 2, single buffered']
    #allocation10 [shape = 'u8[32768]{0}', space=vmem, size = 0x8000, scoped, tag = 'input window, operand 4, single buffered']
    #allocation11 [shape = 's32[1]{0}', space=sflag, size = 0x4, scoped, tag = 'scoped memory for tpu_custom_call.1']
    #allocation12 [shape = 'u8[172032]{0}', space=vmem, size = 0x2a000, scoped, tag = 'output window, operand 0']
    %11 = vsyncpa [#allocation5], 0
    %s12 = scalar_lea.sflag [#allocation5], 1
    %13 = vsyncpa %s12, 0
    %14 = vsyncpa [#allocation8], 0
    %s15 = scalar_lea.sflag [#allocation8], 1
    %16 = vsyncpa %s15, 0
    %17 = vsyncpa [#allocation11], 0
    %18 = vsyncpa [#allocation6], 0
    %s19 = scalar_lea.sflag [#allocation6], 1
    %20 = vsyncpa %s19, 0
    loop: start=0, step=1, limit=8
    $region2: #{tpu_custom_call.1} parent=1 // loop_pre_header
      _
    $region3: #{tpu_custom_call.1} parent=1 // loop_header
      %s22 = sphi 0, %s26
      %p23 = scmp.ge.s32.totalorder %s22, 8
      %s29 = sphi 0, %s41
      %s30 = sphi 0, %s37
      %s31 = sphi 0, %s29
      %s32 = sphi 0, %s30
      %s33 = sphi 0, %s31
      %s34 = sphi 0, %s32
      %s46 = sphi 0, %s48
      %s49 = sphi 0, %s46
      %s50 = sphi 0, %s49
      %s66 = sphi 0, %s50
      %s78 = sphi 0, %s80
      %s81 = sphi 0, %s78
      %s82 = sphi 0, %s81
      %s98 = sphi 0, %s82
      %s102 = sphi 0, %s102
      %s104 = sphi 0, %s102
      %s105 = sphi 0, %s104
      %s119 = sphi 0, %s105
      %s123 = sphi 0, %s123
      %s125 = sphi 0, %s123
      %s126 = sphi 0, %s125
      %s140 = sphi 0, %s126
      %s144 = sphi 0, %s144
      %s146 = sphi 0, %s144
      %s147 = sphi 0, %s146
      %s161 = sphi 0, %s147
      %s165 = sphi 0, %s165
      %s167 = sphi 0, %s165
      %s168 = sphi 0, %s167
      %s182 = sphi 0, %s168
      %s190 = sphi 0, %s192
      %s193 = sphi 0, %s190
      %s194 = sphi 0, %s193
      %s210 = sphi 0, %s194
    $region4: #{tpu_custom_call.1} parent=1 // loop_header_branch
      %25 = sbr.rel (%p23) target = $region8
    $region5: #{tpu_custom_call.1} parent=1 // loop_body
      %s27 = ssub.s32 %s22, 1
      %s28 = ssub.s32 %s22, 2
      %s35 = sadd.s32 1, %s30
      %p36 = scmp.ge.s32.totalorder %s35, 3
      %s37 = scalar_select %p36, 0, %s35
      %s38 = sadd.s32 1, %s29
      %s39 = scalar_select %p36, %s38, %s29
      %p40 = scmp.ge.s32.totalorder %s39, 2
      %s41 = scalar_select %p40, 0, %s39
      %s42 = ssub.s32 %s29, %s41
      %s43 = ssub.s32 %s30, %s37
      %s44 = sor.u32 %s42, %s43
      %p45 = scmp.eq.s32.totalorder %s44, 0
      %s47 = sadd.s32 %s46, 1
      %s48 = scalar_select %p45, %s46, %s47
      %p51 = pneg %p45
      %p52 = scmp.eq.s32.totalorder %s22, 5
      %p53 = por %p51, %p52
      %p54 = scmp.ne.s32.totalorder %s46, %s49
      %p55 = scmp.eq.s32.totalorder %s22, 0
      %p56 = por %p54, %p55
      %p57 = scmp.ne.s32.totalorder %s46, %s49
      %p58 = scmp.eq.s32.totalorder %s27, 5
      %p59 = por %p57, %p58
      %p60 = scmp.ne.s32.totalorder %s49, %s50
      %p61 = scmp.eq.s32.totalorder %s27, 0
      %p62 = por %p60, %p61
      %p63 = scmp.ne.s32.totalorder %s49, %s50
      %p64 = scmp.eq.s32.totalorder %s28, 5
      %p65 = por %p63, %p64
      %p67 = scmp.ne.s32.totalorder %s50, %s66
      %p68 = scmp.eq.s32.totalorder %s28, 0
      %p69 = por %p67, %p68
      %s70 = sadd.s32 %s30, 1
      %s71 = smul.u32 %s70, 3
      %s72 = sadd.s32 %s37, 1
      %s73 = smul.u32 %s72, 3
      %s74 = ssub.s32 %s29, %s41
      %s75 = ssub.s32 %s71, %s73
      %s76 = sor.u32 %s74, %s75
      %p77 = scmp.eq.s32.totalorder %s76, 0
      %s79 = sadd.s32 %s78, 1
      %s80 = scalar_select %p77, %s78, %s79
      %p83 = pneg %p77
      %p84 = scmp.eq.s32.totalorder %s22, 5
      %p85 = por %p83, %p84
      %p86 = scmp.ne.s32.totalorder %s78, %s81
      %p87 = scmp.eq.s32.totalorder %s22, 0
      %p88 = por %p86, %p87
      %p89 = scmp.ne.s32.totalorder %s78, %s81
      %p90 = scmp.eq.s32.totalorder %s27, 5
      %p91 = por %p89, %p90
      %p92 = scmp.ne.s32.totalorder %s81, %s82
      %p93 = scmp.eq.s32.totalorder %s27, 0
      %p94 = por %p92, %p93
      %p95 = scmp.ne.s32.totalorder %s81, %s82
      %p96 = scmp.eq.s32.totalorder %s28, 5
      %p97 = por %p95, %p96
      %p99 = scmp.ne.s32.totalorder %s82, %s98
      %p100 = scmp.eq.s32.totalorder %s28, 0
      %p101 = por %p99, %p100
      %s103 = sadd.s32 %s102, 1
      %p106 = scmp.eq.s32.totalorder %s22, 5
      %p107 = scmp.ne.s32.totalorder %s102, %s104
      %p108 = scmp.eq.s32.totalorder %s22, 0
      %p109 = por %p107, %p108
      %p110 = scmp.ne.s32.totalorder %s102, %s104
      %p111 = scmp.eq.s32.totalorder %s27, 5
      %p112 = por %p110, %p111
      %p113 = scmp.ne.s32.totalorder %s104, %s105
      %p114 = scmp.eq.s32.totalorder %s27, 0
      %p115 = por %p113, %p114
      %p116 = scmp.ne.s32.totalorder %s104, %s105
      %p117 = scmp.eq.s32.totalorder %s28, 5
      %p118 = por %p116, %p117
      %p120 = scmp.ne.s32.totalorder %s105, %s119
      %p121 = scmp.eq.s32.totalorder %s28, 0
      %p122 = por %p120, %p121
      %s124 = sadd.s32 %s123, 1
      %p127 = scmp.eq.s32.totalorder %s22, 5
      %p128 = scmp.ne.s32.totalorder %s123, %s125
      %p129 = scmp.eq.s32.totalorder %s22, 0
      %p130 = por %p128, %p129
      %p131 = scmp.ne.s32.totalorder %s123, %s125
      %p132 = scmp.eq.s32.totalorder %s27, 5
      %p133 = por %p131, %p132
      %p134 = scmp.ne.s32.totalorder %s125, %s126
      %p135 = scmp.eq.s32.totalorder %s27, 0
      %p136 = por %p134, %p135
      %p137 = scmp.ne.s32.totalorder %s125, %s126
      %p138 = scmp.eq.s32.totalorder %s28, 5
      %p139 = por %p137, %p138
      %p141 = scmp.ne.s32.totalorder %s126, %s140
      %p142 = scmp.eq.s32.totalorder %s28, 0
      %p143 = por %p141, %p142
      %s145 = sadd.s32 %s144, 1
      %p148 = scmp.eq.s32.totalorder %s22, 5
      %p149 = scmp.ne.s32.totalorder %s144, %s146
      %p150 = scmp.eq.s32.totalorder %s22, 0
      %p151 = por %p149, %p150
      %p152 = scmp.ne.s32.totalorder %s144, %s146
      %p153 = scmp.eq.s32.totalorder %s27, 5
      %p154 = por %p152, %p153
      %p155 = scmp.ne.s32.totalorder %s146, %s147
      %p156 = scmp.eq.s32.totalorder %s27, 0
      %p157 = por %p155, %p156
      %p158 = scmp.ne.s32.totalorder %s146, %s147
      %p159 = scmp.eq.s32.totalorder %s28, 5
      %p160 = por %p158, %p159
      %p162 = scmp.ne.s32.totalorder %s147, %s161
      %p163 = scmp.eq.s32.totalorder %s28, 0
      %p164 = por %p162, %p163
      %s166 = sadd.s32 %s165, 1
      %p169 = scmp.eq.s32.totalorder %s22, 5
      %p170 = scmp.ne.s32.totalorder %s165, %s167
      %p171 = scmp.eq.s32.totalorder %s22, 0
      %p172 = por %p170, %p171
      %p173 = scmp.ne.s32.totalorder %s165, %s167
      %p174 = scmp.eq.s32.totalorder %s27, 5
      %p175 = por %p173, %p174
      %p176 = scmp.ne.s32.totalorder %s167, %s168
      %p177 = scmp.eq.s32.totalorder %s27, 0
      %p178 = por %p176, %p177
      %p179 = scmp.ne.s32.totalorder %s167, %s168
      %p180 = scmp.eq.s32.totalorder %s28, 5
      %p181 = por %p179, %p180
      %p183 = scmp.ne.s32.totalorder %s168, %s182
      %p184 = scmp.eq.s32.totalorder %s28, 0
      %p185 = por %p183, %p184
      %s186 = ssub.s32 %s29, %s41
      %s187 = ssub.s32 %s30, %s37
      %s188 = sor.u32 %s186, %s187
      %p189 = scmp.eq.s32.totalorder %s188, 0
      %s191 = sadd.s32 %s190, 1
      %s192 = scalar_select %p189, %s190, %s191
      %p195 = pneg %p189
      %p196 = scmp.eq.s32.totalorder %s22, 5
      %p197 = por %p195, %p196
      %p198 = scmp.ne.s32.totalorder %s190, %s193
      %p199 = scmp.eq.s32.totalorder %s22, 0
      %p200 = por %p198, %p199
      %p201 = scmp.ne.s32.totalorder %s190, %s193
      %p202 = scmp.eq.s32.totalorder %s27, 5
      %p203 = por %p201, %p202
      %p204 = scmp.ne.s32.totalorder %s193, %s194
      %p205 = scmp.eq.s32.totalorder %s27, 0
      %p206 = por %p204, %p205
      %p207 = scmp.ne.s32.totalorder %s193, %s194
      %p208 = scmp.eq.s32.totalorder %s28, 5
      %p209 = por %p207, %p208
      %p211 = scmp.ne.s32.totalorder %s194, %s210
      %p212 = scmp.eq.s32.totalorder %s28, 0
      %p213 = por %p211, %p212
      %p214 = scmp.le.s32.totalorder 1, %s22
      %p215 = scmp.lt.s32.totalorder %s22, 7
      %p216 = pnand %p214, %p215
      %p217 = pneg %p216
      // Predicated region
      $region9: #{tpu_custom_call.1} parent=5 // pred_check
        _
      $region10: #{tpu_custom_call.1} parent=5 // pred_check_branch
        %219 = sbr.rel (%p216) target = $region12
      $region11: #{tpu_custom_call.1} parent=5 // pred_region
        %s220 = ssub.s32 %s22, 1
        // Predicated region
        $region13: #{tpu_custom_call.1} parent=11 // pred_check
          %p221 = pneg %p115
        $region14: #{tpu_custom_call.1} parent=11 // pred_check_branch
          %223 = sbr.rel (%p221) target = $region16
        $region15: #{tpu_custom_call.1} parent=11 // pred_region
          %225 = vsyncadd [#allocation8], 0
          %s226 = sshll.u32 %s2, 4
          %s227 = int_to_ptr.hbm [resolvable:$true] %s226
          %s228 = sshll.u32 [#allocation9], 4
          %s229 = int_to_ptr.vmem [resolvable:$true] %s228
          %234 = dma.hbm_to_vmem [thread:$0]  %s227, 9216, %s229, [#allocation8], 64, 64, 4
        $region16: #{tpu_custom_call.1} parent=11 // pred_fallthru
          _
        // Predicated region
        $region17: #{tpu_custom_call.1} parent=11 // pred_check
          %p235 = pneg %p136
        $region18: #{tpu_custom_call.1} parent=11 // pred_check_branch
          %237 = sbr.rel (%p235) target = $region20
        $region19: #{tpu_custom_call.1} parent=11 // pred_region
          _
        $region20: #{tpu_custom_call.1} parent=11 // pred_fallthru
          _
        // Predicated region
        $region21: #{tpu_custom_call.1} parent=11 // pred_check
          %p238 = pneg %p157
        $region22: #{tpu_custom_call.1} parent=11 // pred_check_branch
          %240 = sbr.rel (%p238) target = $region24
        $region23: #{tpu_custom_call.1} parent=11 // pred_region
          %242 = vsyncadd [#allocation11], 0
          %s243 = sshll.u32 %s4, 4
          %s244 = int_to_ptr.hbm [resolvable:$true] %s243
          %s245 = sshll.u32 [#allocation10], 4
          %s246 = int_to_ptr.vmem [resolvable:$true] %s245
          %251 = dma.hbm_to_vmem [thread:$0]  %s244, 1024, %s246, [#allocation11], 64, 64, 4
        $region24: #{tpu_custom_call.1} parent=11 // pred_fallthru
          _
        // Predicated region
        $region25: #{tpu_custom_call.1} parent=11 // pred_check
          %p252 = pneg %p178
        $region26: #{tpu_custom_call.1} parent=11 // pred_check_branch
          %254 = sbr.rel (%p252) target = $region28
        $region27: #{tpu_custom_call.1} parent=11 // pred_region
          _
        $region28: #{tpu_custom_call.1} parent=11 // pred_fallthru
          _
      $region12: #{tpu_custom_call.1} parent=5 // pred_fallthru
        _
      %p255 = scmp.lt.s32.totalorder %s22, 6
      // Predicated region
      $region29: #{tpu_custom_call.1} parent=5 // pred_check
        %p256 = pneg %p255
      $region30: #{tpu_custom_call.1} parent=5 // pred_check_branch
        %258 = sbr.rel (%p256) target = $region32
      $region31: #{tpu_custom_call.1} parent=5 // pred_region
        // Predicated region
        $region33: #{tpu_custom_call.1} parent=31 // pred_check
          %p259 = pneg %p56
        $region34: #{tpu_custom_call.1} parent=31 // pred_check_branch
          %261 = sbr.rel (%p259) target = $region36
        $region35: #{tpu_custom_call.1} parent=31 // pred_region
          %s262 = sand.u32 %s46, 1
          %s263 = scalar_lea.sflag [#allocation5], %s262
          %s264 = sand.u32 %s46, 1
          %s265 = smul.addr %s264, 84
          %s266 = scalar_lea.vmem [#allocation4], %s265
          %s267 = smul.u32 21, %s30
          %s268 = ssub.s32 70, %s267
          %p269 = scmp.lt.s32.totalorder %s268, 21
          %s270 = scalar_select %p269, %s268, 21
          %s271 = smul.u32 4, %s270
          %s272 = ssub.s32 84, %s271
          %s273 = sshll.u32 %s272, 4
          %274 = vsyncadd %s263, %s273
          %p275 = scmp.ne.s32.totalorder 0, %s271
          %s276 = smul.addr %s29, 70
          %s277 = sadd.s32 %s267, %s276
          %s278 = smul.addr %s277, 4
          %s279 = scalar_lea.hbm %s0, %s278
          %s280 = smul.u32 4, %s270
          %s281 = sshll.u32 %s279, 4
          %s282 = int_to_ptr.hbm [resolvable:$true] %s281
          %s283 = sshll.u32 %s266, 4
          %s284 = int_to_ptr.vmem [resolvable:$true] %s283
          %s285 = sshll.u32 %s280, 4
          %289 = dma.hbm_to_vmem [thread:$0]  (%p275), %s282, %s285, %s284, %s263, 64, 64, 4
        $region36: #{tpu_custom_call.1} parent=31 // pred_fallthru
          _
        // Predicated region
        $region37: #{tpu_custom_call.1} parent=31 // pred_check
          %p290 = pneg %p88
        $region38: #{tpu_custom_call.1} parent=31 // pred_check_branch
          %292 = sbr.rel (%p290) target = $region40
        $region39: #{tpu_custom_call.1} parent=31 // pred_region
          %s293 = sand.u32 %s22, 1
          %s294 = scalar_lea.sflag [#allocation8], %s293
          %s295 = sand.u32 %s78, 1
          %s296 = smul.addr %s295, 28
          %s297 = scalar_lea.vmem [#allocation7], %s296
          %s298 = sadd.s32 %s30, 1
          %s299 = smul.u32 %s298, 3
          %s300 = smul.u32 7, %s299
          %302 = vsyncadd %s294, 0
          %s303 = smul.addr %s29, 70
          %s304 = sadd.s32 %s300, %s303
          %s305 = smul.addr %s304, 4
          %s306 = scalar_lea.hbm %s1, %s305
          %s307 = sshll.u32 %s306, 4
          %s308 = int_to_ptr.hbm [resolvable:$true] %s307
          %s309 = sshll.u32 %s297, 4
          %s310 = int_to_ptr.vmem [resolvable:$true] %s309
          %315 = dma.hbm_to_vmem [thread:$0]  %s308, 448, %s310, %s294, 64, 64, 4
        $region40: #{tpu_custom_call.1} parent=31 // pred_fallthru
          _
      $region32: #{tpu_custom_call.1} parent=5 // pred_fallthru
        _
      %p316 = scmp.le.s32.totalorder 1, %s22
      %p317 = scmp.lt.s32.totalorder %s22, 7
      %p318 = pnand %p316, %p317
      %p319 = pneg %p318
      // Predicated region
      $region41: #{tpu_custom_call.1} parent=5 // pred_check
        _
      $region42: #{tpu_custom_call.1} parent=5 // pred_check_branch
        %321 = sbr.rel (%p318) target = $region44
      $region43: #{tpu_custom_call.1} parent=5 // pred_region
        %s322 = ssub.s32 %s22, 1
        %s323 = sand.u32 %s49, 1
        %s324 = scalar_lea.sflag [#allocation5], %s323
        %s325 = sand.u32 %s49, 1
        %s326 = smul.addr %s325, 84
        %s327 = scalar_lea.vmem [#allocation4], %s326
        // Predicated region
        $region45: #{tpu_custom_call.1} parent=43 // pred_check
          %p328 = pneg %p62
        $region46: #{tpu_custom_call.1} parent=43 // pred_check_branch
          %330 = sbr.rel (%p328) target = $region48
        $region47: #{tpu_custom_call.1} parent=43 // pred_region
          %332 = dma.done %s324, 1344
        $region48: #{tpu_custom_call.1} parent=43 // pred_fallthru
          _
        %s333 = sand.u32 %s27, 1
        %s334 = scalar_lea.sflag [#allocation8], %s333
        %s335 = sand.u32 %s81, 1
        %s336 = smul.addr %s335, 28
        %s337 = scalar_lea.vmem [#allocation7], %s336
        // Predicated region
        $region49: #{tpu_custom_call.1} parent=43 // pred_check
          %p338 = pneg %p94
        $region50: #{tpu_custom_call.1} parent=43 // pred_check_branch
          %340 = sbr.rel (%p338) target = $region52
        $region51: #{tpu_custom_call.1} parent=43 // pred_region
          %342 = dma.done %s334, 448
        $region52: #{tpu_custom_call.1} parent=43 // pred_fallthru
          _
        // Predicated region
        $region53: #{tpu_custom_call.1} parent=43 // pred_check
          %p343 = pneg %p115
        $region54: #{tpu_custom_call.1} parent=43 // pred_check_branch
          %345 = sbr.rel (%p343) target = $region56
        $region55: #{tpu_custom_call.1} parent=43 // pred_region
          %347 = dma.done [#allocation8], 9216
        $region56: #{tpu_custom_call.1} parent=43 // pred_fallthru
          _
        // Predicated region
        $region57: #{tpu_custom_call.1} parent=43 // pred_check
          %p348 = pneg %p157
        $region58: #{tpu_custom_call.1} parent=43 // pred_check_branch
          %350 = sbr.rel (%p348) target = $region60
        $region59: #{tpu_custom_call.1} parent=43 // pred_region
          %352 = dma.done [#allocation11], 1024
        $region60: #{tpu_custom_call.1} parent=43 // pred_fallthru
          _
        %s353 = sand.u32 %s49, 1
        %s354 = scalar_lea.sflag [#allocation5], %s353
        %s355 = sand.u32 %s49, 1
        %s356 = smul.addr %s355, 84
        %s357 = scalar_lea.vmem [#allocation4], %s356
        %p358 = pneg %p62
        %p359 = pneg %p59
        %s360 = sand.u32 %s27, 1
        %s361 = scalar_lea.sflag [#allocation8], %s360
        %s362 = sand.u32 %s81, 1
        %s363 = smul.addr %s362, 28
        %s364 = scalar_lea.vmem [#allocation7], %s363
        %p365 = pneg %p94
        %p366 = pneg %p91
        %p367 = pneg %p115
        %p368 = pneg %p112
        %p369 = pneg %p136
        %p370 = pneg %p133
        %p371 = pneg %p157
        %p372 = pneg %p154
        %p373 = pneg %p178
        %p374 = pneg %p175
        %p375 = pneg %p206
        %p376 = pneg %p203
        %s377 = sand.u32 %s193, 1
        %s378 = scalar_lea.sflag [#allocation6], %s377
        %s379 = sand.u32 %s193, 1
        %s380 = smul.addr %s379, 168
        %s381 = scalar_lea.vmem [#allocation12], %s380
        %s382 = smul.u32 21, %s32
        %s383 = ssub.s32 70, %s382
        %p384 = scmp.lt.s32.totalorder %s383, 21
        %s385 = scalar_select %p384, %s383, 21
        %s386 = smul.u32 4, %s385
        %s387 = sadd.s32 %s32, 1
        %s388 = smul.u32 %s387, 3
        %s389 = smul.u32 7, %s388
        %s390 = smul.u32 21, %s32
        %v391 = vld [vmem:[%s327] sm:$0xf]
        %v392 = vld [vmem:[%s327 + $0x4] sm:$0xf]
        %v393 = vld [vmem:[%s327 + $0x8] sm:$0xf]
        %v394 = vld [vmem:[%s327 + $0xc] sm:$0xf]
        %v395 = vld [vmem:[%s327 + $0x10] sm:$0xf]
        %v396 = vld [vmem:[%s327 + $0x14] sm:$0xf]
        %v397 = vld [vmem:[%s327 + $0x18] sm:$0xf]
        %v398 = vld [vmem:[%s327 + $0x1c] sm:$0xf]
        %v399 = vld [vmem:[%s327 + $0x20] sm:$0xf]
        %v400 = vld [vmem:[%s327 + $0x24] sm:$0xf]
        %v401 = vld [vmem:[%s327 + $0x28] sm:$0xf]
        %v402 = vld [vmem:[%s327 + $0x2c] sm:$0xf]
        %v403 = vld [vmem:[%s327 + $0x30] sm:$0xf]
        %v404 = vld [vmem:[%s327 + $0x34] sm:$0xf]
        %v405 = vld [vmem:[%s327 + $0x38] sm:$0xf]
        %v406 = vld [vmem:[%s327 + $0x3c] sm:$0xf]
        %v407 = vld [vmem:[%s327 + $0x40] sm:$0xf]
        %v408 = vld [vmem:[%s327 + $0x44] sm:$0xf]
        %v409 = vld [vmem:[%s327 + $0x48] sm:$0xf]
        %v410 = vld [vmem:[%s327 + $0x4c] sm:$0xf]
        %v411 = vld [vmem:[%s327 + $0x50] sm:$0xf]
        %412 = vst [vmem:[#allocation2] sm:$0xf] %v391
        %413 = vst [vmem:[#allocation2 + $0x4] sm:$0xf] %v392
        %414 = vst [vmem:[#allocation2 + $0x8] sm:$0xf] %v393
        %415 = vst [vmem:[#allocation2 + $0xc] sm:$0xf] %v394
        %416 = vst [vmem:[#allocation2 + $0x10] sm:$0xf] %v395
        %417 = vst [vmem:[#allocation2 + $0x14] sm:$0xf] %v396
        %418 = vst [vmem:[#allocation2 + $0x18] sm:$0xf] %v397
        %419 = vst [vmem:[#allocation2 + $0x1c] sm:$0xf] %v398
        %420 = vst [vmem:[#allocation2 + $0x20] sm:$0xf] %v399
        %421 = vst [vmem:[#allocation2 + $0x24] sm:$0xf] %v400
        %422 = vst [vmem:[#allocation2 + $0x28] sm:$0xf] %v401
        %423 = vst [vmem:[#allocation2 + $0x2c] sm:$0xf] %v402
        %424 = vst [vmem:[#allocation2 + $0x30] sm:$0xf] %v403
        %425 = vst [vmem:[#allocation2 + $0x34] sm:$0xf] %v404
        %426 = vst [vmem:[#allocation2 + $0x38] sm:$0xf] %v405
        %427 = vst [vmem:[#allocation2 + $0x3c] sm:$0xf] %v406
        %428 = vst [vmem:[#allocation2 + $0x40] sm:$0xf] %v407
        %429 = vst [vmem:[#allocation2 + $0x44] sm:$0xf] %v408
        %430 = vst [vmem:[#allocation2 + $0x48] sm:$0xf] %v409
        %431 = vst [vmem:[#allocation2 + $0x4c] sm:$0xf] %v410
        %432 = vst [vmem:[#allocation2 + $0x50] sm:$0xf] %v411
        %v433 = vld [vmem:[%s337] sm:$0xf]
        %v434 = vld [vmem:[%s337 + $0x4] sm:$0xf]
        %v435 = vld [vmem:[%s337 + $0x8] sm:$0xf]
        %v436 = vld [vmem:[%s337 + $0xc] sm:$0xf]
        %v437 = vld [vmem:[%s337 + $0x10] sm:$0xf]
        %v438 = vld [vmem:[%s337 + $0x14] sm:$0xf]
        %v439 = vld [vmem:[%s337 + $0x18] sm:$0xf]
        %440 = vst [vmem:[#allocation2 + $0x54] sm:$0xf] %v433
        %441 = vst [vmem:[#allocation2 + $0x58] sm:$0xf] %v434
        %442 = vst [vmem:[#allocation2 + $0x5c] sm:$0xf] %v435
        %443 = vst [vmem:[#allocation2 + $0x60] sm:$0xf] %v436
        %444 = vst [vmem:[#allocation2 + $0x64] sm:$0xf] %v437
        %445 = vst [vmem:[#allocation2 + $0x68] sm:$0xf] %v438
        %446 = vst [vmem:[#allocation2 + $0x6c] sm:$0xf] %v439
        %v447 = vld [vmem:[#allocation2] sm:$0xf]
        %v448 = vld [vmem:[#allocation2 + $0x4] sm:$0xf]
        %v449 = vld [vmem:[#allocation2 + $0x8] sm:$0xf]
        %v450 = vld [vmem:[#allocation2 + $0xc] sm:$0xf]
        %v451 = vld [vmem:[#allocation2 + $0x10] sm:$0xf]
        %v452 = vld [vmem:[#allocation2 + $0x14] sm:$0xf]
        %v453 = vld [vmem:[#allocation2 + $0x18] sm:$0xf]
        %v454 = vld [vmem:[#allocation2 + $0x1c] sm:$0xf]
        %v455 = vld [vmem:[#allocation2 + $0x20] sm:$0xf]
        %v456 = vld [vmem:[#allocation2 + $0x24] sm:$0xf]
        %v457 = vld [vmem:[#allocation2 + $0x28] sm:$0xf]
        %v458 = vld [vmem:[#allocation2 + $0x2c] sm:$0xf]
        %v459 = vld [vmem:[#allocation2 + $0x30] sm:$0xf]
        %v460 = vld [vmem:[#allocation2 + $0x34] sm:$0xf]
        %v461 = vld [vmem:[#allocation2 + $0x38] sm:$0xf]
        %v462 = vld [vmem:[#allocation2 + $0x3c] sm:$0xf]
        %v463 = vld [vmem:[#allocation2 + $0x40] sm:$0xf]
        %v464 = vld [vmem:[#allocation2 + $0x44] sm:$0xf]
        %v465 = vld [vmem:[#allocation2 + $0x48] sm:$0xf]
        %v466 = vld [vmem:[#allocation2 + $0x4c] sm:$0xf]
        %v467 = vld [vmem:[#allocation2 + $0x50] sm:$0xf]
        %468 = vst [vmem:[#allocation3] sm:$0xf] %v447
        %469 = vst [vmem:[#allocation3 + $0x24] sm:$0xf] %v448
        %470 = vst [vmem:[#allocation3 + $0x48] sm:$0xf] %v449
        %471 = vst [vmem:[#allocation3 + $0x6c] sm:$0xf] %v450
        %472 = vst [vmem:[#allocation3 + $0x90] sm:$0xf] %v451
        %473 = vst [vmem:[#allocation3 + $0xb4] sm:$0xf] %v452
        %474 = vst [vmem:[#allocation3 + $0xd8] sm:$0xf] %v453
        %475 = vst [vmem:[#allocation3 + $0xfc] sm:$0xf] %v454
        %476 = vst [vmem:[#allocation3 + $0x120] sm:$0xf] %v455
        %477 = vst [vmem:[#allocation3 + $0x144] sm:$0xf] %v456
        %478 = vst [vmem:[#allocation3 + $0x168] sm:$0xf] %v457
        %479 = vst [vmem:[#allocation3 + $0x18c] sm:$0xf] %v458
        %480 = vst [vmem:[#allocation3 + $0x1b0] sm:$0xf] %v459
        %481 = vst [vmem:[#allocation3 + $0x1d4] sm:$0xf] %v460
        %482 = vst [vmem:[#allocation3 + $0x1f8] sm:$0xf] %v461
        %483 = vst [vmem:[#allocation3 + $0x21c] sm:$0xf] %v462
        %484 = vst [vmem:[#allocation3 + $0x240] sm:$0xf] %v463
        %485 = vst [vmem:[#allocation3 + $0x264] sm:$0xf] %v464
        %486 = vst [vmem:[#allocation3 + $0x288] sm:$0xf] %v465
        %487 = vst [vmem:[#allocation3 + $0x2ac] sm:$0xf] %v466
        %488 = vst [vmem:[#allocation3 + $0x2d0] sm:$0xf] %v467
        %v489 = vld [vmem:[#allocation2] sm:$0xf]
        %v490 = vld [vmem:[#allocation2 + $0x4] sm:$0xf]
        %v491 = vld [vmem:[#allocation2 + $0x8] sm:$0xf]
        %v492 = vld [vmem:[#allocation2 + $0xc] sm:$0xf]
        %v493 = vld [vmem:[#allocation2 + $0x10] sm:$0xf]
        %v494 = vld [vmem:[#allocation2 + $0x14] sm:$0xf]
        %v495 = vld [vmem:[#allocation2 + $0x18] sm:$0xf]
        %v496 = vld [vmem:[#allocation2 + $0x1c] sm:$0xf]
        %v497 = vld [vmem:[#allocation2 + $0x20] sm:$0xf]
        %v498 = vld [vmem:[#allocation2 + $0x24] sm:$0xf]
        %v499 = vld [vmem:[#allocation2 + $0x28] sm:$0xf]
        %v500 = vld [vmem:[#allocation2 + $0x2c] sm:$0xf]
        %v501 = vld [vmem:[#allocation2 + $0x30] sm:$0xf]
        %v502 = vld [vmem:[#allocation2 + $0x34] sm:$0xf]
        %v503 = vld [vmem:[#allocation2 + $0x38] sm:$0xf]
        %v504 = vld [vmem:[#allocation2 + $0x3c] sm:$0xf]
        %v505 = vld [vmem:[#allocation2 + $0x40] sm:$0xf]
        %v506 = vld [vmem:[#allocation2 + $0x44] sm:$0xf]
        %v507 = vld [vmem:[#allocation2 + $0x48] sm:$0xf]
        %v508 = vld [vmem:[#allocation2 + $0x4c] sm:$0xf]
        %v509 = vld [vmem:[#allocation2 + $0x50] sm:$0xf]
        %v510 = vld [vmem:[#allocation2 + $0x54] sm:$0x1]
        %vm511 = vsmask.f32 3328
        %vm512 = vsmask.f32 7440
        %vm513 = vmor %vm511, %vm512
        %v515 = vshrl.u32 %v489, 16
        %v517 = vrot.slane %v515, 4
        %v518 = vshll.u32 %v489, 16
        %v520 = vrot.slane %v518, 5
        %v521 = vor.u32 %v517, %v520
        %v522 = vrot.slane %v521, 4
        %v524 = vshll.u32 %v490, 16
        %v526 = vrot.slane %v524, 5
        %v527 = vsel %vm513, %v522, %v526
        %v528 = vshrl.u32 %v490, 16
        %v530 = vrot.slane %v528, 4
        %v531 = vor.u32 %v530, %v526
        %v532 = vrot.slane %v531, 4
        %v534 = vshll.u32 %v491, 16
        %v536 = vrot.slane %v534, 5
        %v537 = vsel %vm513, %v532, %v536
        %v538 = vshrl.u32 %v491, 16
        %v540 = vrot.slane %v538, 4
        %v541 = vor.u32 %v540, %v536
        %v542 = vrot.slane %v541, 4
        %v544 = vshll.u32 %v492, 16
        %v546 = vrot.slane %v544, 5
        %v547 = vsel %vm513, %v542, %v546
        %v548 = vshrl.u32 %v492, 16
        %v550 = vrot.slane %v548, 4
        %v551 = vor.u32 %v550, %v546
        %v552 = vrot.slane %v551, 4
        %v554 = vshll.u32 %v493, 16
        %v556 = vrot.slane %v554, 5
        %v557 = vsel %vm513, %v552, %v556
        %v558 = vshrl.u32 %v493, 16
        %v560 = vrot.slane %v558, 4
        %v561 = vor.u32 %v560, %v556
        %v562 = vrot.slane %v561, 4
        %v564 = vshll.u32 %v494, 16
        %v566 = vrot.slane %v564, 5
        %v567 = vsel %vm513, %v562, %v566
        %v568 = vshrl.u32 %v494, 16
        %v570 = vrot.slane %v568, 4
        %v571 = vor.u32 %v570, %v566
        %v572 = vrot.slane %v571, 4
        %v574 = vshll.u32 %v495, 16
        %v576 = vrot.slane %v574, 5
        %v577 = vsel %vm513, %v572, %v576
        %v578 = vshrl.u32 %v495, 16
        %v580 = vrot.slane %v578, 4
        %v581 = vor.u32 %v580, %v576
        %v582 = vrot.slane %v581, 4
        %v584 = vshll.u32 %v496, 16
        %v586 = vrot.slane %v584, 5
        %v587 = vsel %vm513, %v582, %v586
        %v588 = vshrl.u32 %v496, 16
        %v590 = vrot.slane %v588, 4
        %v591 = vor.u32 %v590, %v586
        %v592 = vrot.slane %v591, 4
        %v594 = vshll.u32 %v497, 16
        %v596 = vrot.slane %v594, 5
        %v597 = vsel %vm513, %v592, %v596
        %v598 = vshrl.u32 %v497, 16
        %v600 = vrot.slane %v598, 4
        %v601 = vor.u32 %v600, %v596
        %v602 = vrot.slane %v601, 4
        %v604 = vshll.u32 %v498, 16
        %v606 = vrot.slane %v604, 5
        %v607 = vsel %vm513, %v602, %v606
        %v608 = vshrl.u32 %v498, 16
        %v610 = vrot.slane %v608, 4
        %v611 = vor.u32 %v610, %v606
        %v612 = vrot.slane %v611, 4
        %v614 = vshll.u32 %v499, 16
        %v616 = vrot.slane %v614, 5
        %v617 = vsel %vm513, %v612, %v616
        %v618 = vshrl.u32 %v499, 16
        %v620 = vrot.slane %v618, 4
        %v621 = vor.u32 %v620, %v616
        %v622 = vrot.slane %v621, 4
        %v624 = vshll.u32 %v500, 16
        %v626 = vrot.slane %v624, 5
        %v627 = vsel %vm513, %v622, %v626
        %v628 = vshrl.u32 %v500, 16
        %v630 = vrot.slane %v628, 4
        %v631 = vor.u32 %v630, %v626
        %v632 = vrot.slane %v631, 4
        %v634 = vshll.u32 %v501, 16
        %v636 = vrot.slane %v634, 5
        %v637 = vsel %vm513, %v632, %v636
        %v638 = vshrl.u32 %v501, 16
        %v640 = vrot.slane %v638, 4
        %v641 = vor.u32 %v640, %v636
        %v642 = vrot.slane %v641, 4
        %v644 = vshll.u32 %v502, 16
        %v646 = vrot.slane %v644, 5
        %v647 = vsel %vm513, %v642, %v646
        %v648 = vshrl.u32 %v502, 16
        %v650 = vrot.slane %v648, 4
        %v651 = vor.u32 %v650, %v646
        %v652 = vrot.slane %v651, 4
        %v654 = vshll.u32 %v503, 16
        %v656 = vrot.slane %v654, 5
        %v657 = vsel %vm513, %v652, %v656
        %v658 = vshrl.u32 %v503, 16
        %v660 = vrot.slane %v658, 4
        %v661 = vor.u32 %v660, %v656
        %v662 = vrot.slane %v661, 4
        %v664 = vshll.u32 %v504, 16
        %v666 = vrot.slane %v664, 5
        %v667 = vsel %vm513, %v662, %v666
        %v668 = vshrl.u32 %v504, 16
        %v670 = vrot.slane %v668, 4
        %v671 = vor.u32 %v670, %v666
        %v672 = vrot.slane %v671, 4
        %v674 = vshll.u32 %v505, 16
        %v676 = vrot.slane %v674, 5
        %v677 = vsel %vm513, %v672, %v676
        %v678 = vshrl.u32 %v505, 16
        %v680 = vrot.slane %v678, 4
        %v681 = vor.u32 %v680, %v676
        %v682 = vrot.slane %v681, 4
        %v684 = vshll.u32 %v506, 16
        %v686 = vrot.slane %v684, 5
        %v687 = vsel %vm513, %v682, %v686
        %v688 = vshrl.u32 %v506, 16
        %v690 = vrot.slane %v688, 4
        %v691 = vor.u32 %v690, %v686
        %v692 = vrot.slane %v691, 4
        %v694 = vshll.u32 %v507, 16
        %v696 = vrot.slane %v694, 5
        %v697 = vsel %vm513, %v692, %v696
        %v698 = vshrl.u32 %v507, 16
        %v700 = vrot.slane %v698, 4
        %v701 = vor.u32 %v700, %v696
        %v702 = vrot.slane %v701, 4
        %v704 = vshll.u32 %v508, 16
        %v706 = vrot.slane %v704, 5
        %v707 = vsel %vm513, %v702, %v706
        %v708 = vshrl.u32 %v508, 16
        %v710 = vrot.slane %v708, 4
        %v711 = vor.u32 %v710, %v706
        %v712 = vrot.slane %v711, 4
        %v714 = vshll.u32 %v509, 16
        %v716 = vrot.slane %v714, 5
        %v717 = vsel %vm513, %v712, %v716
        %v718 = vshrl.u32 %v509, 16
        %v720 = vrot.slane %v718, 4
        %v721 = vor.u32 %v720, %v716
        %v722 = vrot.slane %v721, 4
        %v724 = vshll.u32 %v510, 16
        %v726 = vrot.slane %v724, 5
        %v727 = vsel %vm513, %v722, %v726
        %749 = vst [vmem:[#allocation3 + $0x4] sm:$0xf] %v527
        %750 = vst [vmem:[#allocation3 + $0x28] sm:$0xf] %v537
        %751 = vst [vmem:[#allocation3 + $0x4c] sm:$0xf] %v547
        %752 = vst [vmem:[#allocation3 + $0x70] sm:$0xf] %v557
        %753 = vst [vmem:[#allocation3 + $0x94] sm:$0xf] %v567
        %754 = vst [vmem:[#allocation3 + $0xb8] sm:$0xf] %v577
        %755 = vst [vmem:[#allocation3 + $0xdc] sm:$0xf] %v587
        %756 = vst [vmem:[#allocation3 + $0x100] sm:$0xf] %v597
        %757 = vst [vmem:[#allocation3 + $0x124] sm:$0xf] %v607
        %758 = vst [vmem:[#allocation3 + $0x148] sm:$0xf] %v617
        %759 = vst [vmem:[#allocation3 + $0x16c] sm:$0xf] %v627
        %760 = vst [vmem:[#allocation3 + $0x190] sm:$0xf] %v637
        %761 = vst [vmem:[#allocation3 + $0x1b4] sm:$0xf] %v647
        %762 = vst [vmem:[#allocation3 + $0x1d8] sm:$0xf] %v657
        %763 = vst [vmem:[#allocation3 + $0x1fc] sm:$0xf] %v667
        %764 = vst [vmem:[#allocation3 + $0x220] sm:$0xf] %v677
        %765 = vst [vmem:[#allocation3 + $0x244] sm:$0xf] %v687
        %766 = vst [vmem:[#allocation3 + $0x268] sm:$0xf] %v697
        %767 = vst [vmem:[#allocation3 + $0x28c] sm:$0xf] %v707
        %768 = vst [vmem:[#allocation3 + $0x2b0] sm:$0xf] %v717
        %769 = vst [vmem:[#allocation3 + $0x2d4] sm:$0xf] %v727
        %v770 = vld [vmem:[#allocation2] sm:$0xe]
        %v771 = vld [vmem:[#allocation2 + $0x4] sm:$0xf]
        %v772 = vld [vmem:[#allocation2 + $0x8] sm:$0xf]
        %v773 = vld [vmem:[#allocation2 + $0xc] sm:$0xf]
        %v774 = vld [vmem:[#allocation2 + $0x10] sm:$0xf]
        %v775 = vld [vmem:[#allocation2 + $0x14] sm:$0xf]
        %v776 = vld [vmem:[#allocation2 + $0x18] sm:$0xf]
        %v777 = vld [vmem:[#allocation2 + $0x1c] sm:$0xf]
        %v778 = vld [vmem:[#allocation2 + $0x20] sm:$0xf]
        %v779 = vld [vmem:[#allocation2 + $0x24] sm:$0xf]
        %v780 = vld [vmem:[#allocation2 + $0x28] sm:$0xf]
        %v781 = vld [vmem:[#allocation2 + $0x2c] sm:$0xf]
        %v782 = vld [vmem:[#allocation2 + $0x30] sm:$0xf]
        %v783 = vld [vmem:[#allocation2 + $0x34] sm:$0xf]
        %v784 = vld [vmem:[#allocation2 + $0x38] sm:$0xf]
        %v785 = vld [vmem:[#allocation2 + $0x3c] sm:$0xf]
        %v786 = vld [vmem:[#allocation2 + $0x40] sm:$0xf]
        %v787 = vld [vmem:[#allocation2 + $0x44] sm:$0xf]
        %v788 = vld [vmem:[#allocation2 + $0x48] sm:$0xf]
        %v789 = vld [vmem:[#allocation2 + $0x4c] sm:$0xf]
        %v790 = vld [vmem:[#allocation2 + $0x50] sm:$0xf]
        %v791 = vld [vmem:[#allocation2 + $0x54] sm:$0x1]
        %vm814 = vcmask 1042432
        %vm815 = vcmask 1046532
        %vm816 = vmor %vm814, %vm815
        %v817 = vrot.slane %v770, 5
        %v818 = vrot.slane %v817, 4
        %v819 = vrot.slane %v771, 5
        %v820 = vsel %vm816, %v818, %v819
        %v821 = vrot.slane %v819, 4
        %v822 = vrot.slane %v772, 5
        %v823 = vsel %vm816, %v821, %v822
        %v824 = vrot.slane %v822, 4
        %v825 = vrot.slane %v773, 5
        %v826 = vsel %vm816, %v824, %v825
        %v827 = vrot.slane %v825, 4
        %v828 = vrot.slane %v774, 5
        %v829 = vsel %vm816, %v827, %v828
        %v830 = vrot.slane %v828, 4
        %v831 = vrot.slane %v775, 5
        %v832 = vsel %vm816, %v830, %v831
        %v833 = vrot.slane %v831, 4
        %v834 = vrot.slane %v776, 5
        %v835 = vsel %vm816, %v833, %v834
        %v836 = vrot.slane %v834, 4
        %v837 = vrot.slane %v777, 5
        %v838 = vsel %vm816, %v836, %v837
        %v839 = vrot.slane %v837, 4
        %v840 = vrot.slane %v778, 5
        %v841 = vsel %vm816, %v839, %v840
        %v842 = vrot.slane %v840, 4
        %v843 = vrot.slane %v779, 5
        %v844 = vsel %vm816, %v842, %v843
        %v845 = vrot.slane %v843, 4
        %v846 = vrot.slane %v780, 5
        %v847 = vsel %vm816, %v845, %v846
        %v848 = vrot.slane %v846, 4
        %v849 = vrot.slane %v781, 5
        %v850 = vsel %vm816, %v848, %v849
        %v851 = vrot.slane %v849, 4
        %v852 = vrot.slane %v782, 5
        %v853 = vsel %vm816, %v851, %v852
        %v854 = vrot.slane %v852, 4
        %v855 = vrot.slane %v783, 5
        %v856 = vsel %vm816, %v854, %v855
        %v857 = vrot.slane %v855, 4
        %v858 = vrot.slane %v784, 5
        %v859 = vsel %vm816, %v857, %v858
        %v860 = vrot.slane %v858, 4
        %v861 = vrot.slane %v785, 5
        %v862 = vsel %vm816, %v860, %v861
        %v863 = vrot.slane %v861, 4
        %v864 = vrot.slane %v786, 5
        %v865 = vsel %vm816, %v863, %v864
        %v866 = vrot.slane %v864, 4
        %v867 = vrot.slane %v787, 5
        %v868 = vsel %vm816, %v866, %v867
        %v869 = vrot.slane %v867, 4
        %v870 = vrot.slane %v788, 5
        %v871 = vsel %vm816, %v869, %v870
        %v872 = vrot.slane %v870, 4
        %v873 = vrot.slane %v789, 5
        %v874 = vsel %vm816, %v872, %v873
        %v875 = vrot.slane %v873, 4
        %v876 = vrot.slane %v790, 5
        %v877 = vsel %vm816, %v875, %v876
        %v878 = vrot.slane %v876, 4
        %v879 = vrot.slane %v791, 5
        %v880 = vsel %vm816, %v878, %v879
        %902 = vst [vmem:[#allocation3 + $0x8] sm:$0xf] %v820
        %903 = vst [vmem:[#allocation3 + $0x2c] sm:$0xf] %v823
        %904 = vst [vmem:[#allocation3 + $0x50] sm:$0xf] %v826
        %905 = vst [vmem:[#allocation3 + $0x74] sm:$0xf] %v829
        %906 = vst [vmem:[#allocation3 + $0x98] sm:$0xf] %v832
        %907 = vst [vmem:[#allocation3 + $0xbc] sm:$0xf] %v835
        %908 = vst [vmem:[#allocation3 + $0xe0] sm:$0xf] %v838
        %909 = vst [vmem:[#allocation3 + $0x104] sm:$0xf] %v841
        %910 = vst [vmem:[#allocation3 + $0x128] sm:$0xf] %v844
        %911 = vst [vmem:[#allocation3 + $0x14c] sm:$0xf] %v847
        %912 = vst [vmem:[#allocation3 + $0x170] sm:$0xf] %v850
        %913 = vst [vmem:[#allocation3 + $0x194] sm:$0xf] %v853
        %914 = vst [vmem:[#allocation3 + $0x1b8] sm:$0xf] %v856
        %915 = vst [vmem:[#allocation3 + $0x1dc] sm:$0xf] %v859
        %916 = vst [vmem:[#allocation3 + $0x200] sm:$0xf] %v862
        %917 = vst [vmem:[#allocation3 + $0x224] sm:$0xf] %v865
        %918 = vst [vmem:[#allocation3 + $0x248] sm:$0xf] %v868
        %919 = vst [vmem:[#allocation3 + $0x26c] sm:$0xf] %v871
        %920 = vst [vmem:[#allocation3 + $0x290] sm:$0xf] %v874
        %921 = vst [vmem:[#allocation3 + $0x2b4] sm:$0xf] %v877
        %922 = vst [vmem:[#allocation3 + $0x2d8] sm:$0xf] %v880
        %v923 = vld [vmem:[#allocation2 + $0xc] sm:$0xf]
        %v924 = vld [vmem:[#allocation2 + $0x10] sm:$0xf]
        %v925 = vld [vmem:[#allocation2 + $0x14] sm:$0xf]
        %v926 = vld [vmem:[#allocation2 + $0x18] sm:$0xf]
        %v927 = vld [vmem:[#allocation2 + $0x1c] sm:$0xf]
        %v928 = vld [vmem:[#allocation2 + $0x20] sm:$0xf]
        %v929 = vld [vmem:[#allocation2 + $0x24] sm:$0xf]
        %v930 = vld [vmem:[#allocation2 + $0x28] sm:$0xf]
        %v931 = vld [vmem:[#allocation2 + $0x2c] sm:$0xf]
        %v932 = vld [vmem:[#allocation2 + $0x30] sm:$0xf]
        %v933 = vld [vmem:[#allocation2 + $0x34] sm:$0xf]
        %v934 = vld [vmem:[#allocation2 + $0x38] sm:$0xf]
        %v935 = vld [vmem:[#allocation2 + $0x3c] sm:$0xf]
        %v936 = vld [vmem:[#allocation2 + $0x40] sm:$0xf]
        %v937 = vld [vmem:[#allocation2 + $0x44] sm:$0xf]
        %v938 = vld [vmem:[#allocation2 + $0x48] sm:$0xf]
        %v939 = vld [vmem:[#allocation2 + $0x4c] sm:$0xf]
        %v940 = vld [vmem:[#allocation2 + $0x50] sm:$0xf]
        %v941 = vld [vmem:[#allocation2 + $0x54] sm:$0xf]
        %v942 = vld [vmem:[#allocation2 + $0x58] sm:$0xf]
        %v943 = vld [vmem:[#allocation2 + $0x5c] sm:$0xf]
        %944 = vst [vmem:[#allocation3 + $0xc] sm:$0xf] %v923
        %945 = vst [vmem:[#allocation3 + $0x30] sm:$0xf] %v924
        %946 = vst [vmem:[#allocation3 + $0x54] sm:$0xf] %v925
        %947 = vst [vmem:[#allocation3 + $0x78] sm:$0xf] %v926
        %948 = vst [vmem:[#allocation3 + $0x9c] sm:$0xf] %v927
        %949 = vst [vmem:[#allocation3 + $0xc0] sm:$0xf] %v928
        %950 = vst [vmem:[#allocation3 + $0xe4] sm:$0xf] %v929
        %951 = vst [vmem:[#allocation3 + $0x108] sm:$0xf] %v930
        %952 = vst [vmem:[#allocation3 + $0x12c] sm:$0xf] %v931
        %953 = vst [vmem:[#allocation3 + $0x150] sm:$0xf] %v932
        %954 = vst [vmem:[#allocation3 + $0x174] sm:$0xf] %v933
        %955 = vst [vmem:[#allocation3 + $0x198] sm:$0xf] %v934
        %956 = vst [vmem:[#allocation3 + $0x1bc] sm:$0xf] %v935
        %957 = vst [vmem:[#allocation3 + $0x1e0] sm:$0xf] %v936
        %958 = vst [vmem:[#allocation3 + $0x204] sm:$0xf] %v937
        %959 = vst [vmem:[#allocation3 + $0x228] sm:$0xf] %v938
        %960 = vst [vmem:[#allocation3 + $0x24c] sm:$0xf] %v939
        %961 = vst [vmem:[#allocation3 + $0x270] sm:$0xf] %v940
        %962 = vst [vmem:[#allocation3 + $0x294] sm:$0xf] %v941
        %963 = vst [vmem:[#allocation3 + $0x2b8] sm:$0xf] %v942
        %964 = vst [vmem:[#allocation3 + $0x2dc] sm:$0xf] %v943
        %v965 = vld [vmem:[#allocation2 + $0xc] sm:$0xf]
        %v966 = vld [vmem:[#allocation2 + $0x10] sm:$0xf]
        %v967 = vld [vmem:[#allocation2 + $0x14] sm:$0xf]
        %v968 = vld [vmem:[#allocation2 + $0x18] sm:$0xf]
        %v969 = vld [vmem:[#allocation2 + $0x1c] sm:$0xf]
        %v970 = vld [vmem:[#allocation2 + $0x20] sm:$0xf]
        %v971 = vld [vmem:[#allocation2 + $0x24] sm:$0xf]
        %v972 = vld [vmem:[#allocation2 + $0x28] sm:$0xf]
        %v973 = vld [vmem:[#allocation2 + $0x2c] sm:$0xf]
        %v974 = vld [vmem:[#allocation2 + $0x30] sm:$0xf]
        %v975 = vld [vmem:[#allocation2 + $0x34] sm:$0xf]
        %v976 = vld [vmem:[#allocation2 + $0x38] sm:$0xf]
        %v977 = vld [vmem:[#allocation2 + $0x3c] sm:$0xf]
        %v978 = vld [vmem:[#allocation2 + $0x40] sm:$0xf]
        %v979 = vld [vmem:[#allocation2 + $0x44] sm:$0xf]
        %v980 = vld [vmem:[#allocation2 + $0x48] sm:$0xf]
        %v981 = vld [vmem:[#allocation2 + $0x4c] sm:$0xf]
        %v982 = vld [vmem:[#allocation2 + $0x50] sm:$0xf]
        %v983 = vld [vmem:[#allocation2 + $0x54] sm:$0xf]
        %v984 = vld [vmem:[#allocation2 + $0x58] sm:$0xf]
        %v985 = vld [vmem:[#allocation2 + $0x5c] sm:$0xf]
        %v986 = vld [vmem:[#allocation2 + $0x60] sm:$0x1]
        %v988 = vshrl.u32 %v965, 16
        %v990 = vrot.slane %v988, 4
        %v991 = vshll.u32 %v965, 16
        %v993 = vrot.slane %v991, 5
        %v994 = vor.u32 %v990, %v993
        %v995 = vrot.slane %v994, 4
        %v997 = vshll.u32 %v966, 16
        %v999 = vrot.slane %v997, 5
        %v1000 = vsel %vm513, %v995, %v999
        %v1001 = vshrl.u32 %v966, 16
        %v1003 = vrot.slane %v1001, 4
        %v1004 = vor.u32 %v1003, %v999
        %v1005 = vrot.slane %v1004, 4
        %v1007 = vshll.u32 %v967, 16
        %v1009 = vrot.slane %v1007, 5
        %v1010 = vsel %vm513, %v1005, %v1009
        %v1011 = vshrl.u32 %v967, 16
        %v1013 = vrot.slane %v1011, 4
        %v1014 = vor.u32 %v1013, %v1009
        %v1015 = vrot.slane %v1014, 4
        %v1017 = vshll.u32 %v968, 16
        %v1019 = vrot.slane %v1017, 5
        %v1020 = vsel %vm513, %v1015, %v1019
        %v1021 = vshrl.u32 %v968, 16
        %v1023 = vrot.slane %v1021, 4
        %v1024 = vor.u32 %v1023, %v1019
        %v1025 = vrot.slane %v1024, 4
        %v1027 = vshll.u32 %v969, 16
        %v1029 = vrot.slane %v1027, 5
        %v1030 = vsel %vm513, %v1025, %v1029
        %v1031 = vshrl.u32 %v969, 16
        %v1033 = vrot.slane %v1031, 4
        %v1034 = vor.u32 %v1033, %v1029
        %v1035 = vrot.slane %v1034, 4
        %v1037 = vshll.u32 %v970, 16
        %v1039 = vrot.slane %v1037, 5
        %v1040 = vsel %vm513, %v1035, %v1039
        %v1041 = vshrl.u32 %v970, 16
        %v1043 = vrot.slane %v1041, 4
        %v1044 = vor.u32 %v1043, %v1039
        %v1045 = vrot.slane %v1044, 4
        %v1047 = vshll.u32 %v971, 16
        %v1049 = vrot.slane %v1047, 5
        %v1050 = vsel %vm513, %v1045, %v1049
        %v1051 = vshrl.u32 %v971, 16
        %v1053 = vrot.slane %v1051, 4
        %v1054 = vor.u32 %v1053, %v1049
        %v1055 = vrot.slane %v1054, 4
        %v1057 = vshll.u32 %v972, 16
        %v1059 = vrot.slane %v1057, 5
        %v1060 = vsel %vm513, %v1055, %v1059
        %v1061 = vshrl.u32 %v972, 16
        %v1063 = vrot.slane %v1061, 4
        %v1064 = vor.u32 %v1063, %v1059
        %v1065 = vrot.slane %v1064, 4
        %v1067 = vshll.u32 %v973, 16
        %v1069 = vrot.slane %v1067, 5
        %v1070 = vsel %vm513, %v1065, %v1069
        %v1071 = vshrl.u32 %v973, 16
        %v1073 = vrot.slane %v1071, 4
        %v1074 = vor.u32 %v1073, %v1069
        %v1075 = vrot.slane %v1074, 4
        %v1077 = vshll.u32 %v974, 16
        %v1079 = vrot.slane %v1077, 5
        %v1080 = vsel %vm513, %v1075, %v1079
        %v1081 = vshrl.u32 %v974, 16
        %v1083 = vrot.slane %v1081, 4
        %v1084 = vor.u32 %v1083, %v1079
        %v1085 = vrot.slane %v1084, 4
        %v1087 = vshll.u32 %v975, 16
        %v1089 = vrot.slane %v1087, 5
        %v1090 = vsel %vm513, %v1085, %v1089
        %v1091 = vshrl.u32 %v975, 16
        %v1093 = vrot.slane %v1091, 4
        %v1094 = vor.u32 %v1093, %v1089
        %v1095 = vrot.slane %v1094, 4
        %v1097 = vshll.u32 %v976, 16
        %v1099 = vrot.slane %v1097, 5
        %v1100 = vsel %vm513, %v1095, %v1099
        %v1101 = vshrl.u32 %v976, 16
        %v1103 = vrot.slane %v1101, 4
        %v1104 = vor.u32 %v1103, %v1099
        %v1105 = vrot.slane %v1104, 4
        %v1107 = vshll.u32 %v977, 16
        %v1109 = vrot.slane %v1107, 5
        %v1110 = vsel %vm513, %v1105, %v1109
        %v1111 = vshrl.u32 %v977, 16
        %v1113 = vrot.slane %v1111, 4
        %v1114 = vor.u32 %v1113, %v1109
        %v1115 = vrot.slane %v1114, 4
        %v1117 = vshll.u32 %v978, 16
        %v1119 = vrot.slane %v1117, 5
        %v1120 = vsel %vm513, %v1115, %v1119
        %v1121 = vshrl.u32 %v978, 16
        %v1123 = vrot.slane %v1121, 4
        %v1124 = vor.u32 %v1123, %v1119
        %v1125 = vrot.slane %v1124, 4
        %v1127 = vshll.u32 %v979, 16
        %v1129 = vrot.slane %v1127, 5
        %v1130 = vsel %vm513, %v1125, %v1129
        %v1131 = vshrl.u32 %v979, 16
        %v1133 = vrot.slane %v1131, 4
        %v1134 = vor.u32 %v1133, %v1129
        %v1135 = vrot.slane %v1134, 4
        %v1137 = vshll.u32 %v980, 16
        %v1139 = vrot.slane %v1137, 5
        %v1140 = vsel %vm513, %v1135, %v1139
        %v1141 = vshrl.u32 %v980, 16
        %v1143 = vrot.slane %v1141, 4
        %v1144 = vor.u32 %v1143, %v1139
        %v1145 = vrot.slane %v1144, 4
        %v1147 = vshll.u32 %v981, 16
        %v1149 = vrot.slane %v1147, 5
        %v1150 = vsel %vm513, %v1145, %v1149
        %v1151 = vshrl.u32 %v981, 16
        %v1153 = vrot.slane %v1151, 4
        %v1154 = vor.u32 %v1153, %v1149
        %v1155 = vrot.slane %v1154, 4
        %v1157 = vshll.u32 %v982, 16
        %v1159 = vrot.slane %v1157, 5
        %v1160 = vsel %vm513, %v1155, %v1159
        %v1161 = vshrl.u32 %v982, 16
        %v1163 = vrot.slane %v1161, 4
        %v1164 = vor.u32 %v1163, %v1159
        %v1165 = vrot.slane %v1164, 4
        %v1167 = vshll.u32 %v983, 16
        %v1169 = vrot.slane %v1167, 5
        %v1170 = vsel %vm513, %v1165, %v1169
        %v1171 = vshrl.u32 %v983, 16
        %v1173 = vrot.slane %v1171, 4
        %v1174 = vor.u32 %v1173, %v1169
        %v1175 = vrot.slane %v1174, 4
        %v1177 = vshll.u32 %v984, 16
        %v1179 = vrot.slane %v1177, 5
        %v1180 = vsel %vm513, %v1175, %v1179
        %v1181 = vshrl.u32 %v984, 16
        %v1183 = vrot.slane %v1181, 4
        %v1184 = vor.u32 %v1183, %v1179
        %v1185 = vrot.slane %v1184, 4
        %v1187 = vshll.u32 %v985, 16
        %v1189 = vrot.slane %v1187, 5
        %v1190 = vsel %vm513, %v1185, %v1189
        %v1191 = vshrl.u32 %v985, 16
        %v1193 = vrot.slane %v1191, 4
        %v1194 = vor.u32 %v1193, %v1189
        %v1195 = vrot.slane %v1194, 4
        %v1197 = vshll.u32 %v986, 16
        %v1199 = vrot.slane %v1197, 5
        %v1200 = vsel %vm513, %v1195, %v1199
        %1222 = vst [vmem:[#allocation3 + $0x10] sm:$0xf] %v1000
        %1223 = vst [vmem:[#allocation3 + $0x34] sm:$0xf] %v1010
        %1224 = vst [vmem:[#allocation3 + $0x58] sm:$0xf] %v1020
        %1225 = vst [vmem:[#allocation3 + $0x7c] sm:$0xf] %v1030
        %1226 = vst [vmem:[#allocation3 + $0xa0] sm:$0xf] %v1040
        %1227 = vst [vmem:[#allocation3 + $0xc4] sm:$0xf] %v1050
        %1228 = vst [vmem:[#allocation3 + $0xe8] sm:$0xf] %v1060
        %1229 = vst [vmem:[#allocation3 + $0x10c] sm:$0xf] %v1070
        %1230 = vst [vmem:[#allocation3 + $0x130] sm:$0xf] %v1080
        %1231 = vst [vmem:[#allocation3 + $0x154] sm:$0xf] %v1090
        %1232 = vst [vmem:[#allocation3 + $0x178] sm:$0xf] %v1100
        %1233 = vst [vmem:[#allocation3 + $0x19c] sm:$0xf] %v1110
        %1234 = vst [vmem:[#allocation3 + $0x1c0] sm:$0xf] %v1120
        %1235 = vst [vmem:[#allocation3 + $0x1e4] sm:$0xf] %v1130
        %1236 = vst [vmem:[#allocation3 + $0x208] sm:$0xf] %v1140
        %1237 = vst [vmem:[#allocation3 + $0x22c] sm:$0xf] %v1150
        %1238 = vst [vmem:[#allocation3 + $0x250] sm:$0xf] %v1160
        %1239 = vst [vmem:[#allocation3 + $0x274] sm:$0xf] %v1170
        %1240 = vst [vmem:[#allocation3 + $0x298] sm:$0xf] %v1180
        %1241 = vst [vmem:[#allocation3 + $0x2bc] sm:$0xf] %v1190
        %1242 = vst [vmem:[#allocation3 + $0x2e0] sm:$0xf] %v1200
        %v1243 = vld [vmem:[#allocation2 + $0xc] sm:$0xe]
        %v1244 = vld [vmem:[#allocation2 + $0x10] sm:$0xf]
        %v1245 = vld [vmem:[#allocation2 + $0x14] sm:$0xf]
        %v1246 = vld [vmem:[#allocation2 + $0x18] sm:$0xf]
        %v1247 = vld [vmem:[#allocation2 + $0x1c] sm:$0xf]
        %v1248 = vld [vmem:[#allocation2 + $0x20] sm:$0xf]
        %v1249 = vld [vmem:[#allocation2 + $0x24] sm:$0xf]
        %v1250 = vld [vmem:[#allocation2 + $0x28] sm:$0xf]
        %v1251 = vld [vmem:[#allocation2 + $0x2c] sm:$0xf]
        %v1252 = vld [vmem:[#allocation2 + $0x30] sm:$0xf]
        %v1253 = vld [vmem:[#allocation2 + $0x34] sm:$0xf]
        %v1254 = vld [vmem:[#allocation2 + $0x38] sm:$0xf]
        %v1255 = vld [vmem:[#allocation2 + $0x3c] sm:$0xf]
        %v1256 = vld [vmem:[#allocation2 + $0x40] sm:$0xf]
        %v1257 = vld [vmem:[#allocation2 + $0x44] sm:$0xf]
        %v1258 = vld [vmem:[#allocation2 + $0x48] sm:$0xf]
        %v1259 = vld [vmem:[#allocation2 + $0x4c] sm:$0xf]
        %v1260 = vld [vmem:[#allocation2 + $0x50] sm:$0xf]
        %v1261 = vld [vmem:[#allocation2 + $0x54] sm:$0xf]
        %v1262 = vld [vmem:[#allocation2 + $0x58] sm:$0xf]
        %v1263 = vld [vmem:[#allocation2 + $0x5c] sm:$0xf]
        %v1264 = vld [vmem:[#allocation2 + $0x60] sm:$0x1]
        %v1287 = vrot.slane %v1243, 5
        %v1288 = vrot.slane %v1287, 4
        %v1289 = vrot.slane %v1244, 5
        %v1290 = vsel %vm816, %v1288, %v1289
        %v1291 = vrot.slane %v1289, 4
        %v1292 = vrot.slane %v1245, 5
        %v1293 = vsel %vm816, %v1291, %v1292
        %v1294 = vrot.slane %v1292, 4
        %v1295 = vrot.slane %v1246, 5
        %v1296 = vsel %vm816, %v1294, %v1295
        %v1297 = vrot.slane %v1295, 4
        %v1298 = vrot.slane %v1247, 5
        %v1299 = vsel %vm816, %v1297, %v1298
        %v1300 = vrot.slane %v1298, 4
        %v1301 = vrot.slane %v1248, 5
        %v1302 = vsel %vm816, %v1300, %v1301
        %v1303 = vrot.slane %v1301, 4
        %v1304 = vrot.slane %v1249, 5
        %v1305 = vsel %vm816, %v1303, %v1304
        %v1306 = vrot.slane %v1304, 4
        %v1307 = vrot.slane %v1250, 5
        %v1308 = vsel %vm816, %v1306, %v1307
        %v1309 = vrot.slane %v1307, 4
        %v1310 = vrot.slane %v1251, 5
        %v1311 = vsel %vm816, %v1309, %v1310
        %v1312 = vrot.slane %v1310, 4
        %v1313 = vrot.slane %v1252, 5
        %v1314 = vsel %vm816, %v1312, %v1313
        %v1315 = vrot.slane %v1313, 4
        %v1316 = vrot.slane %v1253, 5
        %v1317 = vsel %vm816, %v1315, %v1316
        %v1318 = vrot.slane %v1316, 4
        %v1319 = vrot.slane %v1254, 5
        %v1320 = vsel %vm816, %v1318, %v1319
        %v1321 = vrot.slane %v1319, 4
        %v1322 = vrot.slane %v1255, 5
        %v1323 = vsel %vm816, %v1321, %v1322
        %v1324 = vrot.slane %v1322, 4
        %v1325 = vrot.slane %v1256, 5
        %v1326 = vsel %vm816, %v1324, %v1325
        %v1327 = vrot.slane %v1325, 4
        %v1328 = vrot.slane %v1257, 5
        %v1329 = vsel %vm816, %v1327, %v1328
        %v1330 = vrot.slane %v1328, 4
        %v1331 = vrot.slane %v1258, 5
        %v1332 = vsel %vm816, %v1330, %v1331
        %v1333 = vrot.slane %v1331, 4
        %v1334 = vrot.slane %v1259, 5
        %v1335 = vsel %vm816, %v1333, %v1334
        %v1336 = vrot.slane %v1334, 4
        %v1337 = vrot.slane %v1260, 5
        %v1338 = vsel %vm816, %v1336, %v1337
        %v1339 = vrot.slane %v1337, 4
        %v1340 = vrot.slane %v1261, 5
        %v1341 = vsel %vm816, %v1339, %v1340
        %v1342 = vrot.slane %v1340, 4
        %v1343 = vrot.slane %v1262, 5
        %v1344 = vsel %vm816, %v1342, %v1343
        %v1345 = vrot.slane %v1343, 4
        %v1346 = vrot.slane %v1263, 5
        %v1347 = vsel %vm816, %v1345, %v1346
        %v1348 = vrot.slane %v1346, 4
        %v1349 = vrot.slane %v1264, 5
        %v1350 = vsel %vm816, %v1348, %v1349
        %1372 = vst [vmem:[#allocation3 + $0x14] sm:$0xf] %v1290
        %1373 = vst [vmem:[#allocation3 + $0x38] sm:$0xf] %v1293
        %1374 = vst [vmem:[#allocation3 + $0x5c] sm:$0xf] %v1296
        %1375 = vst [vmem:[#allocation3 + $0x80] sm:$0xf] %v1299
        %1376 = vst [vmem:[#allocation3 + $0xa4] sm:$0xf] %v1302
        %1377 = vst [vmem:[#allocation3 + $0xc8] sm:$0xf] %v1305
        %1378 = vst [vmem:[#allocation3 + $0xec] sm:$0xf] %v1308
        %1379 = vst [vmem:[#allocation3 + $0x110] sm:$0xf] %v1311
        %1380 = vst [vmem:[#allocation3 + $0x134] sm:$0xf] %v1314
        %1381 = vst [vmem:[#allocation3 + $0x158] sm:$0xf] %v1317
        %1382 = vst [vmem:[#allocation3 + $0x17c] sm:$0xf] %v1320
        %1383 = vst [vmem:[#allocation3 + $0x1a0] sm:$0xf] %v1323
        %1384 = vst [vmem:[#allocation3 + $0x1c4] sm:$0xf] %v1326
        %1385 = vst [vmem:[#allocation3 + $0x1e8] sm:$0xf] %v1329
        %1386 = vst [vmem:[#allocation3 + $0x20c] sm:$0xf] %v1332
        %1387 = vst [vmem:[#allocation3 + $0x230] sm:$0xf] %v1335
        %1388 = vst [vmem:[#allocation3 + $0x254] sm:$0xf] %v1338
        %1389 = vst [vmem:[#allocation3 + $0x278] sm:$0xf] %v1341
        %1390 = vst [vmem:[#allocation3 + $0x29c] sm:$0xf] %v1344
        %1391 = vst [vmem:[#allocation3 + $0x2c0] sm:$0xf] %v1347
        %1392 = vst [vmem:[#allocation3 + $0x2e4] sm:$0xf] %v1350
        %v1393 = vld [vmem:[#allocation2 + $0x18] sm:$0xf]
        %v1394 = vld [vmem:[#allocation2 + $0x1c] sm:$0xf]
        %v1395 = vld [vmem:[#allocation2 + $0x20] sm:$0xf]
        %v1396 = vld [vmem:[#allocation2 + $0x24] sm:$0xf]
        %v1397 = vld [vmem:[#allocation2 + $0x28] sm:$0xf]
        %v1398 = vld [vmem:[#allocation2 + $0x2c] sm:$0xf]
        %v1399 = vld [vmem:[#allocation2 + $0x30] sm:$0xf]
        %v1400 = vld [vmem:[#allocation2 + $0x34] sm:$0xf]
        %v1401 = vld [vmem:[#allocation2 + $0x38] sm:$0xf]
        %v1402 = vld [vmem:[#allocation2 + $0x3c] sm:$0xf]
        %v1403 = vld [vmem:[#allocation2 + $0x40] sm:$0xf]
        %v1404 = vld [vmem:[#allocation2 + $0x44] sm:$0xf]
        %v1405 = vld [vmem:[#allocation2 + $0x48] sm:$0xf]
        %v1406 = vld [vmem:[#allocation2 + $0x4c] sm:$0xf]
        %v1407 = vld [vmem:[#allocation2 + $0x50] sm:$0xf]
        %v1408 = vld [vmem:[#allocation2 + $0x54] sm:$0xf]
        %v1409 = vld [vmem:[#allocation2 + $0x58] sm:$0xf]
        %v1410 = vld [vmem:[#allocation2 + $0x5c] sm:$0xf]
        %v1411 = vld [vmem:[#allocation2 + $0x60] sm:$0xf]
        %v1412 = vld [vmem:[#allocation2 + $0x64] sm:$0xf]
        %v1413 = vld [vmem:[#allocation2 + $0x68] sm:$0xf]
        %1414 = vst [vmem:[#allocation3 + $0x18] sm:$0xf] %v1393
        %1415 = vst [vmem:[#allocation3 + $0x3c] sm:$0xf] %v1394
        %1416 = vst [vmem:[#allocation3 + $0x60] sm:$0xf] %v1395
        %1417 = vst [vmem:[#allocation3 + $0x84] sm:$0xf] %v1396
        %1418 = vst [vmem:[#allocation3 + $0xa8] sm:$0xf] %v1397
        %1419 = vst [vmem:[#allocation3 + $0xcc] sm:$0xf] %v1398
        %1420 = vst [vmem:[#allocation3 + $0xf0] sm:$0xf] %v1399
        %1421 = vst [vmem:[#allocation3 + $0x114] sm:$0xf] %v1400
        %1422 = vst [vmem:[#allocation3 + $0x138] sm:$0xf] %v1401
        %1423 = vst [vmem:[#allocation3 + $0x15c] sm:$0xf] %v1402
        %1424 = vst [vmem:[#allocation3 + $0x180] sm:$0xf] %v1403
        %1425 = vst [vmem:[#allocation3 + $0x1a4] sm:$0xf] %v1404
        %1426 = vst [vmem:[#allocation3 + $0x1c8] sm:$0xf] %v1405
        %1427 = vst [vmem:[#allocation3 + $0x1ec] sm:$0xf] %v1406
        %1428 = vst [vmem:[#allocation3 + $0x210] sm:$0xf] %v1407
        %1429 = vst [vmem:[#allocation3 + $0x234] sm:$0xf] %v1408
        %1430 = vst [vmem:[#allocation3 + $0x258] sm:$0xf] %v1409
        %1431 = vst [vmem:[#allocation3 + $0x27c] sm:$0xf] %v1410
        %1432 = vst [vmem:[#allocation3 + $0x2a0] sm:$0xf] %v1411
        %1433 = vst [vmem:[#allocation3 + $0x2c4] sm:$0xf] %v1412
        %1434 = vst [vmem:[#allocation3 + $0x2e8] sm:$0xf] %v1413
        %v1435 = vld [vmem:[#allocation2 + $0x18] sm:$0xf]
        %v1436 = vld [vmem:[#allocation2 + $0x1c] sm:$0xf]
        %v1437 = vld [vmem:[#allocation2 + $0x20] sm:$0xf]
        %v1438 = vld [vmem:[#allocation2 + $0x24] sm:$0xf]
        %v1439 = vld [vmem:[#allocation2 + $0x28] sm:$0xf]
        %v1440 = vld [vmem:[#allocation2 + $0x2c] sm:$0xf]
        %v1441 = vld [vmem:[#allocation2 + $0x30] sm:$0xf]
        %v1442 = vld [vmem:[#allocation2 + $0x34] sm:$0xf]
        %v1443 = vld [vmem:[#allocation2 + $0x38] sm:$0xf]
        %v1444 = vld [vmem:[#allocation2 + $0x3c] sm:$0xf]
        %v1445 = vld [vmem:[#allocation2 + $0x40] sm:$0xf]
        %v1446 = vld [vmem:[#allocation2 + $0x44] sm:$0xf]
        %v1447 = vld [vmem:[#allocation2 + $0x48] sm:$0xf]
        %v1448 = vld [vmem:[#allocation2 + $0x4c] sm:$0xf]
        %v1449 = vld [vmem:[#allocation2 + $0x50] sm:$0xf]
        %v1450 = vld [vmem:[#allocation2 + $0x54] sm:$0xf]
        %v1451 = vld [vmem:[#allocation2 + $0x58] sm:$0xf]
        %v1452 = vld [vmem:[#allocation2 + $0x5c] sm:$0xf]
        %v1453 = vld [vmem:[#allocation2 + $0x60] sm:$0xf]
        %v1454 = vld [vmem:[#allocation2 + $0x64] sm:$0xf]
        %v1455 = vld [vmem:[#allocation2 + $0x68] sm:$0xf]
        %v1456 = vld [vmem:[#allocation2 + $0x6c] sm:$0x1]
        %v1458 = vshrl.u32 %v1435, 16
        %v1460 = vrot.slane %v1458, 4
        %v1461 = vshll.u32 %v1435, 16
        %v1463 = vrot.slane %v1461, 5
        %v1464 = vor.u32 %v1460, %v1463
        %v1465 = vrot.slane %v1464, 4
        %v1467 = vshll.u32 %v1436, 16
        %v1469 = vrot.slane %v1467, 5
        %v1470 = vsel %vm513, %v1465, %v1469
        %v1471 = vshrl.u32 %v1436, 16
        %v1473 = vrot.slane %v1471, 4
        %v1474 = vor.u32 %v1473, %v1469
        %v1475 = vrot.slane %v1474, 4
        %v1477 = vshll.u32 %v1437, 16
        %v1479 = vrot.slane %v1477, 5
        %v1480 = vsel %vm513, %v1475, %v1479
        %v1481 = vshrl.u32 %v1437, 16
        %v1483 = vrot.slane %v1481, 4
        %v1484 = vor.u32 %v1483, %v1479
        %v1485 = vrot.slane %v1484, 4
        %v1487 = vshll.u32 %v1438, 16
        %v1489 = vrot.slane %v1487, 5
        %v1490 = vsel %vm513, %v1485, %v1489
        %v1491 = vshrl.u32 %v1438, 16
        %v1493 = vrot.slane %v1491, 4
        %v1494 = vor.u32 %v1493, %v1489
        %v1495 = vrot.slane %v1494, 4
        %v1497 = vshll.u32 %v1439, 16
        %v1499 = vrot.slane %v1497, 5
        %v1500 = vsel %vm513, %v1495, %v1499
        %v1501 = vshrl.u32 %v1439, 16
        %v1503 = vrot.slane %v1501, 4
        %v1504 = vor.u32 %v1503, %v1499
        %v1505 = vrot.slane %v1504, 4
        %v1507 = vshll.u32 %v1440, 16
        %v1509 = vrot.slane %v1507, 5
        %v1510 = vsel %vm513, %v1505, %v1509
        %v1511 = vshrl.u32 %v1440, 16
        %v1513 = vrot.slane %v1511, 4
        %v1514 = vor.u32 %v1513, %v1509
        %v1515 = vrot.slane %v1514, 4
        %v1517 = vshll.u32 %v1441, 16
        %v1519 = vrot.slane %v1517, 5
        %v1520 = vsel %vm513, %v1515, %v1519
        %v1521 = vshrl.u32 %v1441, 16
        %v1523 = vrot.slane %v1521, 4
        %v1524 = vor.u32 %v1523, %v1519
        %v1525 = vrot.slane %v1524, 4
        %v1527 = vshll.u32 %v1442, 16
        %v1529 = vrot.slane %v1527, 5
        %v1530 = vsel %vm513, %v1525, %v1529
        %v1531 = vshrl.u32 %v1442, 16
        %v1533 = vrot.slane %v1531, 4
        %v1534 = vor.u32 %v1533, %v1529
        %v1535 = vrot.slane %v1534, 4
        %v1537 = vshll.u32 %v1443, 16
        %v1539 = vrot.slane %v1537, 5
        %v1540 = vsel %vm513, %v1535, %v1539
        %v1541 = vshrl.u32 %v1443, 16
        %v1543 = vrot.slane %v1541, 4
        %v1544 = vor.u32 %v1543, %v1539
        %v1545 = vrot.slane %v1544, 4
        %v1547 = vshll.u32 %v1444, 16
        %v1549 = vrot.slane %v1547, 5
        %v1550 = vsel %vm513, %v1545, %v1549
        %v1551 = vshrl.u32 %v1444, 16
        %v1553 = vrot.slane %v1551, 4
        %v1554 = vor.u32 %v1553, %v1549
        %v1555 = vrot.slane %v1554, 4
        %v1557 = vshll.u32 %v1445, 16
        %v1559 = vrot.slane %v1557, 5
        %v1560 = vsel %vm513, %v1555, %v1559
        %v1561 = vshrl.u32 %v1445, 16
        %v1563 = vrot.slane %v1561, 4
        %v1564 = vor.u32 %v1563, %v1559
        %v1565 = vrot.slane %v1564, 4
        %v1567 = vshll.u32 %v1446, 16
        %v1569 = vrot.slane %v1567, 5
        %v1570 = vsel %vm513, %v1565, %v1569
        %v1571 = vshrl.u32 %v1446, 16
        %v1573 = vrot.slane %v1571, 4
        %v1574 = vor.u32 %v1573, %v1569
        %v1575 = vrot.slane %v1574, 4
        %v1577 = vshll.u32 %v1447, 16
        %v1579 = vrot.slane %v1577, 5
        %v1580 = vsel %vm513, %v1575, %v1579
        %v1581 = vshrl.u32 %v1447, 16
        %v1583 = vrot.slane %v1581, 4
        %v1584 = vor.u32 %v1583, %v1579
        %v1585 = vrot.slane %v1584, 4
        %v1587 = vshll.u32 %v1448, 16
        %v1589 = vrot.slane %v1587, 5
        %v1590 = vsel %vm513, %v1585, %v1589
        %v1591 = vshrl.u32 %v1448, 16
        %v1593 = vrot.slane %v1591, 4
        %v1594 = vor.u32 %v1593, %v1589
        %v1595 = vrot.slane %v1594, 4
        %v1597 = vshll.u32 %v1449, 16
        %v1599 = vrot.slane %v1597, 5
        %v1600 = vsel %vm513, %v1595, %v1599
        %v1601 = vshrl.u32 %v1449, 16
        %v1603 = vrot.slane %v1601, 4
        %v1604 = vor.u32 %v1603, %v1599
        %v1605 = vrot.slane %v1604, 4
        %v1607 = vshll.u32 %v1450, 16
        %v1609 = vrot.slane %v1607, 5
        %v1610 = vsel %vm513, %v1605, %v1609
        %v1611 = vshrl.u32 %v1450, 16
        %v1613 = vrot.slane %v1611, 4
        %v1614 = vor.u32 %v1613, %v1609
        %v1615 = vrot.slane %v1614, 4
        %v1617 = vshll.u32 %v1451, 16
        %v1619 = vrot.slane %v1617, 5
        %v1620 = vsel %vm513, %v1615, %v1619
        %v1621 = vshrl.u32 %v1451, 16
        %v1623 = vrot.slane %v1621, 4
        %v1624 = vor.u32 %v1623, %v1619
        %v1625 = vrot.slane %v1624, 4
        %v1627 = vshll.u32 %v1452, 16
        %v1629 = vrot.slane %v1627, 5
        %v1630 = vsel %vm513, %v1625, %v1629
        %v1631 = vshrl.u32 %v1452, 16
        %v1633 = vrot.slane %v1631, 4
        %v1634 = vor.u32 %v1633, %v1629
        %v1635 = vrot.slane %v1634, 4
        %v1637 = vshll.u32 %v1453, 16
        %v1639 = vrot.slane %v1637, 5
        %v1640 = vsel %vm513, %v1635, %v1639
        %v1641 = vshrl.u32 %v1453, 16
        %v1643 = vrot.slane %v1641, 4
        %v1644 = vor.u32 %v1643, %v1639
        %v1645 = vrot.slane %v1644, 4
        %v1647 = vshll.u32 %v1454, 16
        %v1649 = vrot.slane %v1647, 5
        %v1650 = vsel %vm513, %v1645, %v1649
        %v1651 = vshrl.u32 %v1454, 16
        %v1653 = vrot.slane %v1651, 4
        %v1654 = vor.u32 %v1653, %v1649
        %v1655 = vrot.slane %v1654, 4
        %v1657 = vshll.u32 %v1455, 16
        %v1659 = vrot.slane %v1657, 5
        %v1660 = vsel %vm513, %v1655, %v1659
        %v1661 = vshrl.u32 %v1455, 16
        %v1663 = vrot.slane %v1661, 4
        %v1664 = vor.u32 %v1663, %v1659
        %v1665 = vrot.slane %v1664, 4
        %v1667 = vshll.u32 %v1456, 16
        %v1669 = vrot.slane %v1667, 5
        %v1670 = vsel %vm513, %v1665, %v1669
        %1692 = vst [vmem:[#allocation3 + $0x1c] sm:$0xf] %v1470
        %1693 = vst [vmem:[#allocation3 + $0x40] sm:$0xf] %v1480
        %1694 = vst [vmem:[#allocation3 + $0x64] sm:$0xf] %v1490
        %1695 = vst [vmem:[#allocation3 + $0x88] sm:$0xf] %v1500
        %1696 = vst [vmem:[#allocation3 + $0xac] sm:$0xf] %v1510
        %1697 = vst [vmem:[#allocation3 + $0xd0] sm:$0xf] %v1520
        %1698 = vst [vmem:[#allocation3 + $0xf4] sm:$0xf] %v1530
        %1699 = vst [vmem:[#allocation3 + $0x118] sm:$0xf] %v1540
        %1700 = vst [vmem:[#allocation3 + $0x13c] sm:$0xf] %v1550
        %1701 = vst [vmem:[#allocation3 + $0x160] sm:$0xf] %v1560
        %1702 = vst [vmem:[#allocation3 + $0x184] sm:$0xf] %v1570
        %1703 = vst [vmem:[#allocation3 + $0x1a8] sm:$0xf] %v1580
        %1704 = vst [vmem:[#allocation3 + $0x1cc] sm:$0xf] %v1590
        %1705 = vst [vmem:[#allocation3 + $0x1f0] sm:$0xf] %v1600
        %1706 = vst [vmem:[#allocation3 + $0x214] sm:$0xf] %v1610
        %1707 = vst [vmem:[#allocation3 + $0x238] sm:$0xf] %v1620
        %1708 = vst [vmem:[#allocation3 + $0x25c] sm:$0xf] %v1630
        %1709 = vst [vmem:[#allocation3 + $0x280] sm:$0xf] %v1640
        %1710 = vst [vmem:[#allocation3 + $0x2a4] sm:$0xf] %v1650
        %1711 = vst [vmem:[#allocation3 + $0x2c8] sm:$0xf] %v1660
        %1712 = vst [vmem:[#allocation3 + $0x2ec] sm:$0xf] %v1670
        %v1713 = vld [vmem:[#allocation2 + $0x18] sm:$0xe]
        %v1714 = vld [vmem:[#allocation2 + $0x1c] sm:$0xf]
        %v1715 = vld [vmem:[#allocation2 + $0x20] sm:$0xf]
        %v1716 = vld [vmem:[#allocation2 + $0x24] sm:$0xf]
        %v1717 = vld [vmem:[#allocation2 + $0x28] sm:$0xf]
        %v1718 = vld [vmem:[#allocation2 + $0x2c] sm:$0xf]
        %v1719 = vld [vmem:[#allocation2 + $0x30] sm:$0xf]
        %v1720 = vld [vmem:[#allocation2 + $0x34] sm:$0xf]
        %v1721 = vld [vmem:[#allocation2 + $0x38] sm:$0xf]
        %v1722 = vld [vmem:[#allocation2 + $0x3c] sm:$0xf]
        %v1723 = vld [vmem:[#allocation2 + $0x40] sm:$0xf]
        %v1724 = vld [vmem:[#allocation2 + $0x44] sm:$0xf]
        %v1725 = vld [vmem:[#allocation2 + $0x48] sm:$0xf]
        %v1726 = vld [vmem:[#allocation2 + $0x4c] sm:$0xf]
        %v1727 = vld [vmem:[#allocation2 + $0x50] sm:$0xf]
        %v1728 = vld [vmem:[#allocation2 + $0x54] sm:$0xf]
        %v1729 = vld [vmem:[#allocation2 + $0x58] sm:$0xf]
        %v1730 = vld [vmem:[#allocation2 + $0x5c] sm:$0xf]
        %v1731 = vld [vmem:[#allocation2 + $0x60] sm:$0xf]
        %v1732 = vld [vmem:[#allocation2 + $0x64] sm:$0xf]
        %v1733 = vld [vmem:[#allocation2 + $0x68] sm:$0xf]
        %v1734 = vld [vmem:[#allocation2 + $0x6c] sm:$0x1]
        %v1757 = vrot.slane %v1713, 5
        %v1758 = vrot.slane %v1757, 4
        %v1759 = vrot.slane %v1714, 5
        %v1760 = vsel %vm816, %v1758, %v1759
        %v1761 = vrot.slane %v1759, 4
        %v1762 = vrot.slane %v1715, 5
        %v1763 = vsel %vm816, %v1761, %v1762
        %v1764 = vrot.slane %v1762, 4
        %v1765 = vrot.slane %v1716, 5
        %v1766 = vsel %vm816, %v1764, %v1765
        %v1767 = vrot.slane %v1765, 4
        %v1768 = vrot.slane %v1717, 5
        %v1769 = vsel %vm816, %v1767, %v1768
        %v1770 = vrot.slane %v1768, 4
        %v1771 = vrot.slane %v1718, 5
        %v1772 = vsel %vm816, %v1770, %v1771
        %v1773 = vrot.slane %v1771, 4
        %v1774 = vrot.slane %v1719, 5
        %v1775 = vsel %vm816, %v1773, %v1774
        %v1776 = vrot.slane %v1774, 4
        %v1777 = vrot.slane %v1720, 5
        %v1778 = vsel %vm816, %v1776, %v1777
        %v1779 = vrot.slane %v1777, 4
        %v1780 = vrot.slane %v1721, 5
        %v1781 = vsel %vm816, %v1779, %v1780
        %v1782 = vrot.slane %v1780, 4
        %v1783 = vrot.slane %v1722, 5
        %v1784 = vsel %vm816, %v1782, %v1783
        %v1785 = vrot.slane %v1783, 4
        %v1786 = vrot.slane %v1723, 5
        %v1787 = vsel %vm816, %v1785, %v1786
        %v1788 = vrot.slane %v1786, 4
        %v1789 = vrot.slane %v1724, 5
        %v1790 = vsel %vm816, %v1788, %v1789
        %v1791 = vrot.slane %v1789, 4
        %v1792 = vrot.slane %v1725, 5
        %v1793 = vsel %vm816, %v1791, %v1792
        %v1794 = vrot.slane %v1792, 4
        %v1795 = vrot.slane %v1726, 5
        %v1796 = vsel %vm816, %v1794, %v1795
        %v1797 = vrot.slane %v1795, 4
        %v1798 = vrot.slane %v1727, 5
        %v1799 = vsel %vm816, %v1797, %v1798
        %v1800 = vrot.slane %v1798, 4
        %v1801 = vrot.slane %v1728, 5
        %v1802 = vsel %vm816, %v1800, %v1801
        %v1803 = vrot.slane %v1801, 4
        %v1804 = vrot.slane %v1729, 5
        %v1805 = vsel %vm816, %v1803, %v1804
        %v1806 = vrot.slane %v1804, 4
        %v1807 = vrot.slane %v1730, 5
        %v1808 = vsel %vm816, %v1806, %v1807
        %v1809 = vrot.slane %v1807, 4
        %v1810 = vrot.slane %v1731, 5
        %v1811 = vsel %vm816, %v1809, %v1810
        %v1812 = vrot.slane %v1810, 4
        %v1813 = vrot.slane %v1732, 5
        %v1814 = vsel %vm816, %v1812, %v1813
        %v1815 = vrot.slane %v1813, 4
        %v1816 = vrot.slane %v1733, 5
        %v1817 = vsel %vm816, %v1815, %v1816
        %v1818 = vrot.slane %v1816, 4
        %v1819 = vrot.slane %v1734, 5
        %v1820 = vsel %vm816, %v1818, %v1819
        %1842 = vst [vmem:[#allocation3 + $0x20] sm:$0xf] %v1760
        %1843 = vst [vmem:[#allocation3 + $0x44] sm:$0xf] %v1763
        %1844 = vst [vmem:[#allocation3 + $0x68] sm:$0xf] %v1766
        %1845 = vst [vmem:[#allocation3 + $0x8c] sm:$0xf] %v1769
        %1846 = vst [vmem:[#allocation3 + $0xb0] sm:$0xf] %v1772
        %1847 = vst [vmem:[#allocation3 + $0xd4] sm:$0xf] %v1775
        %1848 = vst [vmem:[#allocation3 + $0xf8] sm:$0xf] %v1778
        %1849 = vst [vmem:[#allocation3 + $0x11c] sm:$0xf] %v1781
        %1850 = vst [vmem:[#allocation3 + $0x140] sm:$0xf] %v1784
        %1851 = vst [vmem:[#allocation3 + $0x164] sm:$0xf] %v1787
        %1852 = vst [vmem:[#allocation3 + $0x188] sm:$0xf] %v1790
        %1853 = vst [vmem:[#allocation3 + $0x1ac] sm:$0xf] %v1793
        %1854 = vst [vmem:[#allocation3 + $0x1d0] sm:$0xf] %v1796
        %1855 = vst [vmem:[#allocation3 + $0x1f4] sm:$0xf] %v1799
        %1856 = vst [vmem:[#allocation3 + $0x218] sm:$0xf] %v1802
        %1857 = vst [vmem:[#allocation3 + $0x23c] sm:$0xf] %v1805
        %1858 = vst [vmem:[#allocation3 + $0x260] sm:$0xf] %v1808
        %1859 = vst [vmem:[#allocation3 + $0x284] sm:$0xf] %v1811
        %1860 = vst [vmem:[#allocation3 + $0x2a8] sm:$0xf] %v1814
        %1861 = vst [vmem:[#allocation3 + $0x2cc] sm:$0xf] %v1817
        %1862 = vst [vmem:[#allocation3 + $0x2f0] sm:$0xf] %v1820
        %v1863 = vld [vmem:[#allocation3] sm:$0xff]
        %v1864 = vld [vmem:[#allocation3 + $0x8] sm:$0xff]
        %v1865 = vld [vmem:[#allocation3 + $0x10] sm:$0xff]
        %v1866 = vld [vmem:[#allocation3 + $0x18] sm:$0xff]
        %v1867 = vld [vmem:[#allocation3 + $0x20] sm:$0xf]
        %v1868 = vld [vmem:[#allocation3 + $0x24] sm:$0xff]
        %v1869 = vld [vmem:[#allocation3 + $0x2c] sm:$0xff]
        %v1870 = vld [vmem:[#allocation3 + $0x34] sm:$0xff]
        %v1871 = vld [vmem:[#allocation3 + $0x3c] sm:$0xff]
        %v1872 = vld [vmem:[#allocation3 + $0x44] sm:$0xf]
        %v1873 = vld [vmem:[#allocation3 + $0x48] sm:$0xff]
        %v1874 = vld [vmem:[#allocation3 + $0x50] sm:$0xff]
        %v1875 = vld [vmem:[#allocation3 + $0x58] sm:$0xff]
        %v1876 = vld [vmem:[#allocation3 + $0x60] sm:$0xff]
        %v1877 = vld [vmem:[#allocation3 + $0x68] sm:$0xf]
        %v1878 = vld [vmem:[#allocation3 + $0x6c] sm:$0xff]
        %v1879 = vld [vmem:[#allocation3 + $0x74] sm:$0xff]
        %v1880 = vld [vmem:[#allocation3 + $0x7c] sm:$0xff]
        %v1881 = vld [vmem:[#allocation3 + $0x84] sm:$0xff]
        %v1882 = vld [vmem:[#allocation3 + $0x8c] sm:$0xf]
        %v1883 = vld [vmem:[#allocation3 + $0x90] sm:$0xff]
        %v1884 = vld [vmem:[#allocation3 + $0x98] sm:$0xff]
        %v1885 = vld [vmem:[#allocation3 + $0xa0] sm:$0xff]
        %v1886 = vld [vmem:[#allocation3 + $0xa8] sm:$0xff]
        %v1887 = vld [vmem:[#allocation3 + $0xb0] sm:$0xf]
        %v1888 = vld [vmem:[#allocation3 + $0xb4] sm:$0xff]
        %v1889 = vld [vmem:[#allocation3 + $0xbc] sm:$0xff]
        %v1890 = vld [vmem:[#allocation3 + $0xc4] sm:$0xff]
        %v1891 = vld [vmem:[#allocation3 + $0xcc] sm:$0xff]
        %v1892 = vld [vmem:[#allocation3 + $0xd4] sm:$0xf]
        %v1893 = vld [vmem:[#allocation3 + $0xd8] sm:$0xff]
        %v1894 = vld [vmem:[#allocation3 + $0xe0] sm:$0xff]
        %v1895 = vld [vmem:[#allocation3 + $0xe8] sm:$0xff]
        %v1896 = vld [vmem:[#allocation3 + $0xf0] sm:$0xff]
        %v1897 = vld [vmem:[#allocation3 + $0xf8] sm:$0xf]
        %v1898 = vld [vmem:[#allocation3 + $0xfc] sm:$0xff]
        %v1899 = vld [vmem:[#allocation3 + $0x104] sm:$0xff]
        %v1900 = vld [vmem:[#allocation3 + $0x10c] sm:$0xff]
        %v1901 = vld [vmem:[#allocation3 + $0x114] sm:$0xff]
        %v1902 = vld [vmem:[#allocation3 + $0x11c] sm:$0xf]
        %v1903 = vld [vmem:[#allocation3 + $0x120] sm:$0xff]
        %v1904 = vld [vmem:[#allocation3 + $0x128] sm:$0xff]
        %v1905 = vld [vmem:[#allocation3 + $0x130] sm:$0xff]
        %v1906 = vld [vmem:[#allocation3 + $0x138] sm:$0xff]
        %v1907 = vld [vmem:[#allocation3 + $0x140] sm:$0xf]
        %v1908 = vld [vmem:[#allocation3 + $0x144] sm:$0xff]
        %v1909 = vld [vmem:[#allocation3 + $0x14c] sm:$0xff]
        %v1910 = vld [vmem:[#allocation3 + $0x154] sm:$0xff]
        %v1911 = vld [vmem:[#allocation3 + $0x15c] sm:$0xff]
        %v1912 = vld [vmem:[#allocation3 + $0x164] sm:$0xf]
        %v1913 = vld [vmem:[#allocation3 + $0x168] sm:$0xff]
        %v1914 = vld [vmem:[#allocation3 + $0x170] sm:$0xff]
        %v1915 = vld [vmem:[#allocation3 + $0x178] sm:$0xff]
        %v1916 = vld [vmem:[#allocation3 + $0x180] sm:$0xff]
        %v1917 = vld [vmem:[#allocation3 + $0x188] sm:$0xf]
        %v1918 = vld [vmem:[#allocation3 + $0x18c] sm:$0xff]
        %v1919 = vld [vmem:[#allocation3 + $0x194] sm:$0xff]
        %v1920 = vld [vmem:[#allocation3 + $0x19c] sm:$0xff]
        %v1921 = vld [vmem:[#allocation3 + $0x1a4] sm:$0xff]
        %v1922 = vld [vmem:[#allocation3 + $0x1ac] sm:$0xf]
        %v1923 = vld [vmem:[#allocation3 + $0x1b0] sm:$0xff]
        %v1924 = vld [vmem:[#allocation3 + $0x1b8] sm:$0xff]
        %v1925 = vld [vmem:[#allocation3 + $0x1c0] sm:$0xff]
        %v1926 = vld [vmem:[#allocation3 + $0x1c8] sm:$0xff]
        %v1927 = vld [vmem:[#allocation3 + $0x1d0] sm:$0xf]
        %v1928 = vld [vmem:[#allocation3 + $0x1d4] sm:$0xff]
        %v1929 = vld [vmem:[#allocation3 + $0x1dc] sm:$0xff]
        %v1930 = vld [vmem:[#allocation3 + $0x1e4] sm:$0xff]
        %v1931 = vld [vmem:[#allocation3 + $0x1ec] sm:$0xff]
        %v1932 = vld [vmem:[#allocation3 + $0x1f4] sm:$0xf]
        %v1933 = vld [vmem:[#allocation3 + $0x1f8] sm:$0xff]
        %v1934 = vld [vmem:[#allocation3 + $0x200] sm:$0xff]
        %v1935 = vld [vmem:[#allocation3 + $0x208] sm:$0xff]
        %v1936 = vld [vmem:[#allocation3 + $0x210] sm:$0xff]
        %v1937 = vld [vmem:[#allocation3 + $0x218] sm:$0xf]
        %v1938 = vld [vmem:[#allocation3 + $0x21c] sm:$0xff]
        %v1939 = vld [vmem:[#allocation3 + $0x224] sm:$0xff]
        %v1940 = vld [vmem:[#allocation3 + $0x22c] sm:$0xff]
        %v1941 = vld [vmem:[#allocation3 + $0x234] sm:$0xff]
        %v1942 = vld [vmem:[#allocation3 + $0x23c] sm:$0xf]
        %v1943 = vld [vmem:[#allocation3 + $0x240] sm:$0xff]
        %v1944 = vld [vmem:[#allocation3 + $0x248] sm:$0xff]
        %v1945 = vld [vmem:[#allocation3 + $0x250] sm:$0xff]
        %v1946 = vld [vmem:[#allocation3 + $0x258] sm:$0xff]
        %v1947 = vld [vmem:[#allocation3 + $0x260] sm:$0xf]
        %v1948 = vld [vmem:[#allocation3 + $0x264] sm:$0xff]
        %v1949 = vld [vmem:[#allocation3 + $0x26c] sm:$0xff]
        %v1950 = vld [vmem:[#allocation3 + $0x274] sm:$0xff]
        %v1951 = vld [vmem:[#allocation3 + $0x27c] sm:$0xff]
        %v1952 = vld [vmem:[#allocation3 + $0x284] sm:$0xf]
        %v1953 = vld [vmem:[#allocation3 + $0x288] sm:$0xff]
        %v1954 = vld [vmem:[#allocation3 + $0x290] sm:$0xff]
        %v1955 = vld [vmem:[#allocation3 + $0x298] sm:$0xff]
        %v1956 = vld [vmem:[#allocation3 + $0x2a0] sm:$0xff]
        %v1957 = vld [vmem:[#allocation3 + $0x2a8] sm:$0xf]
        %v1958 = vld [vmem:[#allocation3 + $0x2ac] sm:$0xff]
        %v1959 = vld [vmem:[#allocation3 + $0x2b4] sm:$0xff]
        %v1960 = vld [vmem:[#allocation3 + $0x2bc] sm:$0xff]
        %v1961 = vld [vmem:[#allocation3 + $0x2c4] sm:$0xff]
        %v1962 = vld [vmem:[#allocation3 + $0x2cc] sm:$0xf]
        %v1963 = vld [vmem:[#allocation3 + $0x2d0] sm:$0xff]
        %v1964 = vld [vmem:[#allocation3 + $0x2d8] sm:$0xff]
        %v1965 = vld [vmem:[#allocation3 + $0x2e0] sm:$0xff]
        %v1966 = vld [vmem:[#allocation3 + $0x2e8] sm:$0xff]
        %v1967 = vld [vmem:[#allocation3 + $0x2f0] sm:$0xf]
        %v1968 = vld [vmem:[#allocation9] sm:$0xf]
        %v1969 = vld [vmem:[#allocation9 + $0x4] sm:$0xf]
        %v1970 = vld [vmem:[#allocation9 + $0x8] sm:$0xf]
        %v1971 = vld [vmem:[#allocation9 + $0xc] sm:$0xf]
        %v1972 = vld [vmem:[#allocation9 + $0x10] sm:$0xf]
        %v1973 = vld [vmem:[#allocation9 + $0x14] sm:$0xf]
        %v1974 = vld [vmem:[#allocation9 + $0x18] sm:$0xf]
        %v1975 = vld [vmem:[#allocation9 + $0x1c] sm:$0xf]
        %v1976 = vld [vmem:[#allocation9 + $0x20] sm:$0xf]
        %v1977 = vld [vmem:[#allocation9 + $0x24] sm:$0xf]
        %v1978 = vld [vmem:[#allocation9 + $0x28] sm:$0xf]
        %v1979 = vld [vmem:[#allocation9 + $0x2c] sm:$0xf]
        %v1980 = vld [vmem:[#allocation9 + $0x30] sm:$0xf]
        %v1981 = vld [vmem:[#allocation9 + $0x34] sm:$0xf]
        %v1982 = vld [vmem:[#allocation9 + $0x38] sm:$0xf]
        %v1983 = vld [vmem:[#allocation9 + $0x3c] sm:$0xf]
        %v1984 = vld [vmem:[#allocation9 + $0x40] sm:$0xf]
        %v1985 = vld [vmem:[#allocation9 + $0x44] sm:$0xf]
        %v1986 = vld [vmem:[#allocation9 + $0x48] sm:$0xf]
        %v1987 = vld [vmem:[#allocation9 + $0x4c] sm:$0xf]
        %v1988 = vld [vmem:[#allocation9 + $0x50] sm:$0xf]
        %v1989 = vld [vmem:[#allocation9 + $0x54] sm:$0xf]
        %v1990 = vld [vmem:[#allocation9 + $0x58] sm:$0xf]
        %v1991 = vld [vmem:[#allocation9 + $0x5c] sm:$0xf]
        %v1992 = vld [vmem:[#allocation9 + $0x60] sm:$0xf]
        %v1993 = vld [vmem:[#allocation9 + $0x64] sm:$0xf]
        %v1994 = vld [vmem:[#allocation9 + $0x68] sm:$0xf]
        %v1995 = vld [vmem:[#allocation9 + $0x6c] sm:$0xf]
        %v1996 = vld [vmem:[#allocation9 + $0x70] sm:$0xf]
        %v1997 = vld [vmem:[#allocation9 + $0x74] sm:$0xf]
        %v1998 = vld [vmem:[#allocation9 + $0x78] sm:$0xf]
        %v1999 = vld [vmem:[#allocation9 + $0x7c] sm:$0xf]
        %v2000 = vld [vmem:[#allocation9 + $0x80] sm:$0xf]
        %v2001 = vld [vmem:[#allocation9 + $0x84] sm:$0xf]
        %v2002 = vld [vmem:[#allocation9 + $0x88] sm:$0xf]
        %v2003 = vld [vmem:[#allocation9 + $0x8c] sm:$0xf]
        %v2004 = vld [vmem:[#allocation9 + $0x90] sm:$0xf]
        %v2005 = vld [vmem:[#allocation9 + $0x94] sm:$0xf]
        %v2006 = vld [vmem:[#allocation9 + $0x98] sm:$0xf]
        %v2007 = vld [vmem:[#allocation9 + $0x9c] sm:$0xf]
        %v2008 = vld [vmem:[#allocation9 + $0xa0] sm:$0xf]
        %v2009 = vld [vmem:[#allocation9 + $0xa4] sm:$0xf]
        %v2010 = vld [vmem:[#allocation9 + $0xa8] sm:$0xf]
        %v2011 = vld [vmem:[#allocation9 + $0xac] sm:$0xf]
        %v2012 = vld [vmem:[#allocation9 + $0xb0] sm:$0xf]
        %v2013 = vld [vmem:[#allocation9 + $0xb4] sm:$0xf]
        %v2014 = vld [vmem:[#allocation9 + $0xb8] sm:$0xf]
        %v2015 = vld [vmem:[#allocation9 + $0xbc] sm:$0xf]
        %v2016 = vld [vmem:[#allocation9 + $0xc0] sm:$0xf]
        %v2017 = vld [vmem:[#allocation9 + $0xc4] sm:$0xf]
        %v2018 = vld [vmem:[#allocation9 + $0xc8] sm:$0xf]
        %v2019 = vld [vmem:[#allocation9 + $0xcc] sm:$0xf]
        %v2020 = vld [vmem:[#allocation9 + $0xd0] sm:$0xf]
        %v2021 = vld [vmem:[#allocation9 + $0xd4] sm:$0xf]
        %v2022 = vld [vmem:[#allocation9 + $0xd8] sm:$0xf]
        %v2023 = vld [vmem:[#allocation9 + $0xdc] sm:$0xf]
        %v2024 = vld [vmem:[#allocation9 + $0xe0] sm:$0xf]
        %v2025 = vld [vmem:[#allocation9 + $0xe4] sm:$0xf]
        %v2026 = vld [vmem:[#allocation9 + $0xe8] sm:$0xf]
        %v2027 = vld [vmem:[#allocation9 + $0xec] sm:$0xf]
        %v2028 = vld [vmem:[#allocation9 + $0xf0] sm:$0xf]
        %v2029 = vld [vmem:[#allocation9 + $0xf4] sm:$0xf]
        %v2030 = vld [vmem:[#allocation9 + $0xf8] sm:$0xf]
        %v2031 = vld [vmem:[#allocation9 + $0xfc] sm:$0xf]
        %v2032 = vld [vmem:[#allocation9 + $0x100] sm:$0xf]
        %v2033 = vld [vmem:[#allocation9 + $0x104] sm:$0xf]
        %v2034 = vld [vmem:[#allocation9 + $0x108] sm:$0xf]
        %v2035 = vld [vmem:[#allocation9 + $0x10c] sm:$0xf]
        %v2036 = vld [vmem:[#allocation9 + $0x110] sm:$0xf]
        %v2037 = vld [vmem:[#allocation9 + $0x114] sm:$0xf]
        %v2038 = vld [vmem:[#allocation9 + $0x118] sm:$0xf]
        %v2039 = vld [vmem:[#allocation9 + $0x11c] sm:$0xf]
        %v2040 = vld [vmem:[#allocation9 + $0x120] sm:$0xf]
        %v2041 = vld [vmem:[#allocation9 + $0x124] sm:$0xf]
        %v2042 = vld [vmem:[#allocation9 + $0x128] sm:$0xf]
        %v2043 = vld [vmem:[#allocation9 + $0x12c] sm:$0xf]
        %v2044 = vld [vmem:[#allocation9 + $0x130] sm:$0xf]
        %v2045 = vld [vmem:[#allocation9 + $0x134] sm:$0xf]
        %v2046 = vld [vmem:[#allocation9 + $0x138] sm:$0xf]
        %v2047 = vld [vmem:[#allocation9 + $0x13c] sm:$0xf]
        %v2048 = vld [vmem:[#allocation9 + $0x140] sm:$0xf]
        %v2049 = vld [vmem:[#allocation9 + $0x144] sm:$0xf]
        %v2050 = vld [vmem:[#allocation9 + $0x148] sm:$0xf]
        %v2051 = vld [vmem:[#allocation9 + $0x14c] sm:$0xf]
        %v2052 = vld [vmem:[#allocation9 + $0x150] sm:$0xf]
        %v2053 = vld [vmem:[#allocation9 + $0x154] sm:$0xf]
        %v2054 = vld [vmem:[#allocation9 + $0x158] sm:$0xf]
        %v2055 = vld [vmem:[#allocation9 + $0x15c] sm:$0xf]
        %v2056 = vld [vmem:[#allocation9 + $0x160] sm:$0xf]
        %v2057 = vld [vmem:[#allocation9 + $0x164] sm:$0xf]
        %v2058 = vld [vmem:[#allocation9 + $0x168] sm:$0xf]
        %v2059 = vld [vmem:[#allocation9 + $0x16c] sm:$0xf]
        %v2060 = vld [vmem:[#allocation9 + $0x170] sm:$0xf]
        %v2061 = vld [vmem:[#allocation9 + $0x174] sm:$0xf]
        %v2062 = vld [vmem:[#allocation9 + $0x178] sm:$0xf]
        %v2063 = vld [vmem:[#allocation9 + $0x17c] sm:$0xf]
        %v2064 = vld [vmem:[#allocation9 + $0x180] sm:$0xf]
        %v2065 = vld [vmem:[#allocation9 + $0x184] sm:$0xf]
        %v2066 = vld [vmem:[#allocation9 + $0x188] sm:$0xf]
        %v2067 = vld [vmem:[#allocation9 + $0x18c] sm:$0xf]
        %v2068 = vld [vmem:[#allocation9 + $0x190] sm:$0xf]
        %v2069 = vld [vmem:[#allocation9 + $0x194] sm:$0xf]
        %v2070 = vld [vmem:[#allocation9 + $0x198] sm:$0xf]
        %v2071 = vld [vmem:[#allocation9 + $0x19c] sm:$0xf]
        %v2072 = vld [vmem:[#allocation9 + $0x1a0] sm:$0xf]
        %v2073 = vld [vmem:[#allocation9 + $0x1a4] sm:$0xf]
        %v2074 = vld [vmem:[#allocation9 + $0x1a8] sm:$0xf]
        %v2075 = vld [vmem:[#allocation9 + $0x1ac] sm:$0xf]
        %v2076 = vld [vmem:[#allocation9 + $0x1b0] sm:$0xf]
        %v2077 = vld [vmem:[#allocation9 + $0x1b4] sm:$0xf]
        %v2078 = vld [vmem:[#allocation9 + $0x1b8] sm:$0xf]
        %v2079 = vld [vmem:[#allocation9 + $0x1bc] sm:$0xf]
        %v2080 = vld [vmem:[#allocation9 + $0x1c0] sm:$0xf]
        %v2081 = vld [vmem:[#allocation9 + $0x1c4] sm:$0xf]
        %v2082 = vld [vmem:[#allocation9 + $0x1c8] sm:$0xf]
        %v2083 = vld [vmem:[#allocation9 + $0x1cc] sm:$0xf]
        %v2084 = vld [vmem:[#allocation9 + $0x1d0] sm:$0xf]
        %v2085 = vld [vmem:[#allocation9 + $0x1d4] sm:$0xf]
        %v2086 = vld [vmem:[#allocation9 + $0x1d8] sm:$0xf]
        %v2087 = vld [vmem:[#allocation9 + $0x1dc] sm:$0xf]
        %v2088 = vld [vmem:[#allocation9 + $0x1e0] sm:$0xf]
        %v2089 = vld [vmem:[#allocation9 + $0x1e4] sm:$0xf]
        %v2090 = vld [vmem:[#allocation9 + $0x1e8] sm:$0xf]
        %v2091 = vld [vmem:[#allocation9 + $0x1ec] sm:$0xf]
        %v2092 = vld [vmem:[#allocation9 + $0x1f0] sm:$0xf]
        %v2093 = vld [vmem:[#allocation9 + $0x1f4] sm:$0xf]
        %v2094 = vld [vmem:[#allocation9 + $0x1f8] sm:$0xf]
        %v2095 = vld [vmem:[#allocation9 + $0x1fc] sm:$0xf]
        %v2096 = vld [vmem:[#allocation9 + $0x200] sm:$0xf]
        %v2097 = vld [vmem:[#allocation9 + $0x204] sm:$0xf]
        %v2098 = vld [vmem:[#allocation9 + $0x208] sm:$0xf]
        %v2099 = vld [vmem:[#allocation9 + $0x20c] sm:$0xf]
        %v2100 = vld [vmem:[#allocation9 + $0x210] sm:$0xf]
        %v2101 = vld [vmem:[#allocation9 + $0x214] sm:$0xf]
        %v2102 = vld [vmem:[#allocation9 + $0x218] sm:$0xf]
        %v2103 = vld [vmem:[#allocation9 + $0x21c] sm:$0xf]
        %v2104 = vld [vmem:[#allocation9 + $0x220] sm:$0xf]
        %v2105 = vld [vmem:[#allocation9 + $0x224] sm:$0xf]
        %v2106 = vld [vmem:[#allocation9 + $0x228] sm:$0xf]
        %v2107 = vld [vmem:[#allocation9 + $0x22c] sm:$0xf]
        %v2108 = vld [vmem:[#allocation9 + $0x230] sm:$0xf]
        %v2109 = vld [vmem:[#allocation9 + $0x234] sm:$0xf]
        %v2110 = vld [vmem:[#allocation9 + $0x238] sm:$0xf]
        %v2111 = vld [vmem:[#allocation9 + $0x23c] sm:$0xf]
        %v2112 = vld [vmem:[%s3] sm:$0x1]
        %v2114 = vperm.slane %v2112, 0
        %v2221 = vunpack.c.l.b16 %v1863
        %v2222 = vunpack.c.h.b16 %v1863
        %v2223 = vunpack.c.l.b16 %v1864
        %v2224 = vunpack.c.h.b16 %v1864
        %v2225 = vunpack.c.l.b16 %v1865
        %v2226 = vunpack.c.h.b16 %v1865
        %v2227 = vunpack.c.l.b16 %v1866
        %v2228 = vunpack.c.h.b16 %v1866
        %v2229 = vunpack.c.l.b16 %v1867
        %v2230 = vunpack.c.l.b16 %v1868
        %v2231 = vunpack.c.h.b16 %v1868
        %v2232 = vunpack.c.l.b16 %v1869
        %v2233 = vunpack.c.h.b16 %v1869
        %v2234 = vunpack.c.l.b16 %v1870
        %v2235 = vunpack.c.h.b16 %v1870
        %v2236 = vunpack.c.l.b16 %v1871
        %v2237 = vunpack.c.h.b16 %v1871
        %v2238 = vunpack.c.l.b16 %v1872
        %v2239 = vunpack.c.l.b16 %v1873
        %v2240 = vunpack.c.h.b16 %v1873
        %v2241 = vunpack.c.l.b16 %v1874
        %v2242 = vunpack.c.h.b16 %v1874
        %v2243 = vunpack.c.l.b16 %v1875
        %v2244 = vunpack.c.h.b16 %v1875
        %v2245 = vunpack.c.l.b16 %v1876
        %v2246 = vunpack.c.h.b16 %v1876
        %v2247 = vunpack.c.l.b16 %v1877
        %v2248 = vunpack.c.l.b16 %v1878
        %v2249 = vunpack.c.h.b16 %v1878
        %v2250 = vunpack.c.l.b16 %v1879
        %v2251 = vunpack.c.h.b16 %v1879
        %v2252 = vunpack.c.l.b16 %v1880
        %v2253 = vunpack.c.h.b16 %v1880
        %v2254 = vunpack.c.l.b16 %v1881
        %v2255 = vunpack.c.h.b16 %v1881
        %v2256 = vunpack.c.l.b16 %v1882
        %v2257 = vunpack.c.l.b16 %v1883
        %v2258 = vunpack.c.h.b16 %v1883
        %v2259 = vunpack.c.l.b16 %v1884
        %v2260 = vunpack.c.h.b16 %v1884
        %v2261 = vunpack.c.l.b16 %v1885
        %v2262 = vunpack.c.h.b16 %v1885
        %v2263 = vunpack.c.l.b16 %v1886
        %v2264 = vunpack.c.h.b16 %v1886
        %v2265 = vunpack.c.l.b16 %v1887
        %v2266 = vunpack.c.l.b16 %v1888
        %v2267 = vunpack.c.h.b16 %v1888
        %v2268 = vunpack.c.l.b16 %v1889
        %v2269 = vunpack.c.h.b16 %v1889
        %v2270 = vunpack.c.l.b16 %v1890
        %v2271 = vunpack.c.h.b16 %v1890
        %v2272 = vunpack.c.l.b16 %v1891
        %v2273 = vunpack.c.h.b16 %v1891
        %v2274 = vunpack.c.l.b16 %v1892
        %v2275 = vunpack.c.l.b16 %v1893
        %v2276 = vunpack.c.h.b16 %v1893
        %v2277 = vunpack.c.l.b16 %v1894
        %v2278 = vunpack.c.h.b16 %v1894
        %v2279 = vunpack.c.l.b16 %v1895
        %v2280 = vunpack.c.h.b16 %v1895
        %v2281 = vunpack.c.l.b16 %v1896
        %v2282 = vunpack.c.h.b16 %v1896
        %v2283 = vunpack.c.l.b16 %v1897
        %v2284 = vunpack.c.l.b16 %v1898
        %v2285 = vunpack.c.h.b16 %v1898
        %v2286 = vunpack.c.l.b16 %v1899
        %v2287 = vunpack.c.h.b16 %v1899
        %v2288 = vunpack.c.l.b16 %v1900
        %v2289 = vunpack.c.h.b16 %v1900
        %v2290 = vunpack.c.l.b16 %v1901
        %v2291 = vunpack.c.h.b16 %v1901
        %v2292 = vunpack.c.l.b16 %v1902
        %v2293 = vunpack.c.l.b16 %v1903
        %v2294 = vunpack.c.h.b16 %v1903
        %v2295 = vunpack.c.l.b16 %v1904
        %v2296 = vunpack.c.h.b16 %v1904
        %v2297 = vunpack.c.l.b16 %v1905
        %v2298 = vunpack.c.h.b16 %v1905
        %v2299 = vunpack.c.l.b16 %v1906
        %v2300 = vunpack.c.h.b16 %v1906
        %v2301 = vunpack.c.l.b16 %v1907
        %v2302 = vunpack.c.l.b16 %v1908
        %v2303 = vunpack.c.h.b16 %v1908
        %v2304 = vunpack.c.l.b16 %v1909
        %v2305 = vunpack.c.h.b16 %v1909
        %v2306 = vunpack.c.l.b16 %v1910
        %v2307 = vunpack.c.h.b16 %v1910
        %v2308 = vunpack.c.l.b16 %v1911
        %v2309 = vunpack.c.h.b16 %v1911
        %v2310 = vunpack.c.l.b16 %v1912
        %v2311 = vunpack.c.l.b16 %v1913
        %v2312 = vunpack.c.h.b16 %v1913
        %v2313 = vunpack.c.l.b16 %v1914
        %v2314 = vunpack.c.h.b16 %v1914
        %v2315 = vunpack.c.l.b16 %v1915
        %v2316 = vunpack.c.h.b16 %v1915
        %v2317 = vunpack.c.l.b16 %v1916
        %v2318 = vunpack.c.h.b16 %v1916
        %v2319 = vunpack.c.l.b16 %v1917
        %v2320 = vunpack.c.l.b16 %v1918
        %v2321 = vunpack.c.h.b16 %v1918
        %v2322 = vunpack.c.l.b16 %v1919
        %v2323 = vunpack.c.h.b16 %v1919
        %v2324 = vunpack.c.l.b16 %v1920
        %v2325 = vunpack.c.h.b16 %v1920
        %v2326 = vunpack.c.l.b16 %v1921
        %v2327 = vunpack.c.h.b16 %v1921
        %v2328 = vunpack.c.l.b16 %v1922
        %v2329 = vunpack.c.l.b16 %v1923
        %v2330 = vunpack.c.h.b16 %v1923
        %v2331 = vunpack.c.l.b16 %v1924
        %v2332 = vunpack.c.h.b16 %v1924
        %v2333 = vunpack.c.l.b16 %v1925
        %v2334 = vunpack.c.h.b16 %v1925
        %v2335 = vunpack.c.l.b16 %v1926
        %v2336 = vunpack.c.h.b16 %v1926
        %v2337 = vunpack.c.l.b16 %v1927
        %v2338 = vunpack.c.l.b16 %v1928
        %v2339 = vunpack.c.h.b16 %v1928
        %v2340 = vunpack.c.l.b16 %v1929
        %v2341 = vunpack.c.h.b16 %v1929
        %v2342 = vunpack.c.l.b16 %v1930
        %v2343 = vunpack.c.h.b16 %v1930
        %v2344 = vunpack.c.l.b16 %v1931
        %v2345 = vunpack.c.h.b16 %v1931
        %v2346 = vunpack.c.l.b16 %v1932
        %v2347 = vunpack.c.l.b16 %v1933
        %v2348 = vunpack.c.h.b16 %v1933
        %v2349 = vunpack.c.l.b16 %v1934
        %v2350 = vunpack.c.h.b16 %v1934
        %v2351 = vunpack.c.l.b16 %v1935
        %v2352 = vunpack.c.h.b16 %v1935
        %v2353 = vunpack.c.l.b16 %v1936
        %v2354 = vunpack.c.h.b16 %v1936
        %v2355 = vunpack.c.l.b16 %v1937
        %v2356 = vunpack.c.l.b16 %v1938
        %v2357 = vunpack.c.h.b16 %v1938
        %v2358 = vunpack.c.l.b16 %v1939
        %v2359 = vunpack.c.h.b16 %v1939
        %v2360 = vunpack.c.l.b16 %v1940
        %v2361 = vunpack.c.h.b16 %v1940
        %v2362 = vunpack.c.l.b16 %v1941
        %v2363 = vunpack.c.h.b16 %v1941
        %v2364 = vunpack.c.l.b16 %v1942
        %v2365 = vunpack.c.l.b16 %v1943
        %v2366 = vunpack.c.h.b16 %v1943
        %v2367 = vunpack.c.l.b16 %v1944
        %v2368 = vunpack.c.h.b16 %v1944
        %v2369 = vunpack.c.l.b16 %v1945
        %v2370 = vunpack.c.h.b16 %v1945
        %v2371 = vunpack.c.l.b16 %v1946
        %v2372 = vunpack.c.h.b16 %v1946
        %v2373 = vunpack.c.l.b16 %v1947
        %v2374 = vunpack.c.l.b16 %v1948
        %v2375 = vunpack.c.h.b16 %v1948
        %v2376 = vunpack.c.l.b16 %v1949
        %v2377 = vunpack.c.h.b16 %v1949
        %v2378 = vunpack.c.l.b16 %v1950
        %v2379 = vunpack.c.h.b16 %v1950
        %v2380 = vunpack.c.l.b16 %v1951
        %v2381 = vunpack.c.h.b16 %v1951
        %v2382 = vunpack.c.l.b16 %v1952
        %v2383 = vunpack.c.l.b16 %v1953
        %v2384 = vunpack.c.h.b16 %v1953
        %v2385 = vunpack.c.l.b16 %v1954
        %v2386 = vunpack.c.h.b16 %v1954
        %v2387 = vunpack.c.l.b16 %v1955
        %v2388 = vunpack.c.h.b16 %v1955
        %v2389 = vunpack.c.l.b16 %v1956
        %v2390 = vunpack.c.h.b16 %v1956
        %v2391 = vunpack.c.l.b16 %v1957
        %v2392 = vunpack.c.l.b16 %v1958
        %v2393 = vunpack.c.h.b16 %v1958
        %v2394 = vunpack.c.l.b16 %v1959
        %v2395 = vunpack.c.h.b16 %v1959
        %v2396 = vunpack.c.l.b16 %v1960
        %v2397 = vunpack.c.h.b16 %v1960
        %v2398 = vunpack.c.l.b16 %v1961
        %v2399 = vunpack.c.h.b16 %v1961
        %v2400 = vunpack.c.l.b16 %v1962
        %v2401 = vunpack.c.l.b16 %v1963
        %v2402 = vunpack.c.h.b16 %v1963
        %v2403 = vunpack.c.l.b16 %v1964
        %v2404 = vunpack.c.h.b16 %v1964
        %v2405 = vunpack.c.l.b16 %v1965
        %v2406 = vunpack.c.h.b16 %v1965
        %v2407 = vunpack.c.l.b16 %v1966
        %v2408 = vunpack.c.h.b16 %v1966
        %v2409 = vunpack.c.l.b16 %v1967
        %v2410 = vpack.c.b16 %v2230, %v2221
        %v2411 = vpack.c.b16 %v2231, %v2222
        %v2412 = vpack.c.b16 %v2232, %v2223
        %v2413 = vpack.c.b16 %v2233, %v2224
        %v2414 = vpack.c.b16 %v2234, %v2225
        %v2415 = vpack.c.b16 %v2235, %v2226
        %v2416 = vpack.c.b16 %v2236, %v2227
        %v2417 = vpack.c.b16 %v2237, %v2228
        %v2418 = vpack.c.b16 %v2238, %v2229
        %v2419 = vpack.c.b16 %v2248, %v2239
        %v2420 = vpack.c.b16 %v2249, %v2240
        %v2421 = vpack.c.b16 %v2250, %v2241
        %v2422 = vpack.c.b16 %v2251, %v2242
        %v2423 = vpack.c.b16 %v2252, %v2243
        %v2424 = vpack.c.b16 %v2253, %v2244
        %v2425 = vpack.c.b16 %v2254, %v2245
        %v2426 = vpack.c.b16 %v2255, %v2246
        %v2427 = vpack.c.b16 %v2256, %v2247
        %v2428 = vpack.c.b16 %v2266, %v2257
        %v2429 = vpack.c.b16 %v2267, %v2258
        %v2430 = vpack.c.b16 %v2268, %v2259
        %v2431 = vpack.c.b16 %v2269, %v2260
        %v2432 = vpack.c.b16 %v2270, %v2261
        %v2433 = vpack.c.b16 %v2271, %v2262
        %v2434 = vpack.c.b16 %v2272, %v2263
        %v2435 = vpack.c.b16 %v2273, %v2264
        %v2436 = vpack.c.b16 %v2274, %v2265
        %v2437 = vpack.c.b16 %v2284, %v2275
        %v2438 = vpack.c.b16 %v2285, %v2276
        %v2439 = vpack.c.b16 %v2286, %v2277
        %v2440 = vpack.c.b16 %v2287, %v2278
        %v2441 = vpack.c.b16 %v2288, %v2279
        %v2442 = vpack.c.b16 %v2289, %v2280
        %v2443 = vpack.c.b16 %v2290, %v2281
        %v2444 = vpack.c.b16 %v2291, %v2282
        %v2445 = vpack.c.b16 %v2292, %v2283
        %v2446 = vpack.c.b16 %v2302, %v2293
        %v2447 = vpack.c.b16 %v2303, %v2294
        %v2448 = vpack.c.b16 %v2304, %v2295
        %v2449 = vpack.c.b16 %v2305, %v2296
        %v2450 = vpack.c.b16 %v2306, %v2297
        %v2451 = vpack.c.b16 %v2307, %v2298
        %v2452 = vpack.c.b16 %v2308, %v2299
        %v2453 = vpack.c.b16 %v2309, %v2300
        %v2454 = vpack.c.b16 %v2310, %v2301
        %v2455 = vpack.c.b16 %v2320, %v2311
        %v2456 = vpack.c.b16 %v2321, %v2312
        %v2457 = vpack.c.b16 %v2322, %v2313
        %v2458 = vpack.c.b16 %v2323, %v2314
        %v2459 = vpack.c.b16 %v2324, %v2315
        %v2460 = vpack.c.b16 %v2325, %v2316
        %v2461 = vpack.c.b16 %v2326, %v2317
        %v2462 = vpack.c.b16 %v2327, %v2318
        %v2463 = vpack.c.b16 %v2328, %v2319
        %v2464 = vpack.c.b16 %v2338, %v2329
        %v2465 = vpack.c.b16 %v2339, %v2330
        %v2466 = vpack.c.b16 %v2340, %v2331
        %v2467 = vpack.c.b16 %v2341, %v2332
        %v2468 = vpack.c.b16 %v2342, %v2333
        %v2469 = vpack.c.b16 %v2343, %v2334
        %v2470 = vpack.c.b16 %v2344, %v2335
        %v2471 = vpack.c.b16 %v2345, %v2336
        %v2472 = vpack.c.b16 %v2346, %v2337
        %v2473 = vpack.c.b16 %v2356, %v2347
        %v2474 = vpack.c.b16 %v2357, %v2348
        %v2475 = vpack.c.b16 %v2358, %v2349
        %v2476 = vpack.c.b16 %v2359, %v2350
        %v2477 = vpack.c.b16 %v2360, %v2351
        %v2478 = vpack.c.b16 %v2361, %v2352
        %v2479 = vpack.c.b16 %v2362, %v2353
        %v2480 = vpack.c.b16 %v2363, %v2354
        %v2481 = vpack.c.b16 %v2364, %v2355
        %v2482 = vpack.c.b16 %v2374, %v2365
        %v2483 = vpack.c.b16 %v2375, %v2366
        %v2484 = vpack.c.b16 %v2376, %v2367
        %v2485 = vpack.c.b16 %v2377, %v2368
        %v2486 = vpack.c.b16 %v2378, %v2369
        %v2487 = vpack.c.b16 %v2379, %v2370
        %v2488 = vpack.c.b16 %v2380, %v2371
        %v2489 = vpack.c.b16 %v2381, %v2372
        %v2490 = vpack.c.b16 %v2382, %v2373
        %v2491 = vpack.c.b16 %v2392, %v2383
        %v2492 = vpack.c.b16 %v2393, %v2384
        %v2493 = vpack.c.b16 %v2394, %v2385
        %v2494 = vpack.c.b16 %v2395, %v2386
        %v2495 = vpack.c.b16 %v2396, %v2387
        %v2496 = vpack.c.b16 %v2397, %v2388
        %v2497 = vpack.c.b16 %v2398, %v2389
        %v2498 = vpack.c.b16 %v2399, %v2390
        %v2499 = vpack.c.b16 %v2400, %v2391
        %v2500 = vpack.c.b16 %v2401, %v2401
        %v2501 = vpack.c.b16 %v2402, %v2402
        %v2502 = vpack.c.b16 %v2403, %v2403
        %v2503 = vpack.c.b16 %v2404, %v2404
        %v2504 = vpack.c.b16 %v2405, %v2405
        %v2505 = vpack.c.b16 %v2406, %v2406
        %v2506 = vpack.c.b16 %v2407, %v2407
        %v2507 = vpack.c.b16 %v2408, %v2408
        %v2508 = vpack.c.b16 %v2409, %v2409
        %v2752 = vunpack.c.l.b16 %v1968
        %v2753 = vunpack.c.l.b16 %v1969
        %v2754 = vunpack.c.l.b16 %v1970
        %v2755 = vunpack.c.l.b16 %v1971
        %v2756 = vunpack.c.l.b16 %v1972
        %v2757 = vunpack.c.l.b16 %v1973
        %v2758 = vunpack.c.l.b16 %v1974
        %v2759 = vunpack.c.l.b16 %v1975
        %v2760 = vunpack.c.l.b16 %v1976
        %v2761 = vunpack.c.l.b16 %v1977
        %v2762 = vunpack.c.l.b16 %v1978
        %v2763 = vunpack.c.l.b16 %v1979
        %v2764 = vunpack.c.l.b16 %v1980
        %v2765 = vunpack.c.l.b16 %v1981
        %v2766 = vunpack.c.l.b16 %v1982
        %v2767 = vunpack.c.l.b16 %v1983
        %v2768 = vunpack.c.l.b16 %v1984
        %v2769 = vunpack.c.l.b16 %v1985
        %v2770 = vunpack.c.l.b16 %v1986
        %v2771 = vunpack.c.l.b16 %v1987
        %v2772 = vunpack.c.l.b16 %v1988
        %v2773 = vunpack.c.l.b16 %v1989
        %v2774 = vunpack.c.l.b16 %v1990
        %v2775 = vunpack.c.l.b16 %v1991
        %v2776 = vunpack.c.l.b16 %v1992
        %v2777 = vunpack.c.l.b16 %v1993
        %v2778 = vunpack.c.l.b16 %v1994
        %v2779 = vunpack.c.l.b16 %v1995
        %v2780 = vunpack.c.l.b16 %v1996
        %v2781 = vunpack.c.l.b16 %v1997
        %v2782 = vunpack.c.l.b16 %v1998
        %v2783 = vunpack.c.l.b16 %v1999
        %v2784 = vunpack.c.l.b16 %v2000
        %v2785 = vunpack.c.l.b16 %v2001
        %v2786 = vunpack.c.l.b16 %v2002
        %v2787 = vunpack.c.l.b16 %v2003
        %v2788 = vunpack.c.l.b16 %v2004
        %v2789 = vunpack.c.l.b16 %v2005
        %v2790 = vunpack.c.l.b16 %v2006
        %v2791 = vunpack.c.l.b16 %v2007
        %v2792 = vunpack.c.l.b16 %v2008
        %v2793 = vunpack.c.l.b16 %v2009
        %v2794 = vunpack.c.l.b16 %v2010
        %v2795 = vunpack.c.l.b16 %v2011
        %v2796 = vunpack.c.l.b16 %v2012
        %v2797 = vunpack.c.l.b16 %v2013
        %v2798 = vunpack.c.l.b16 %v2014
        %v2799 = vunpack.c.l.b16 %v2015
        %v2800 = vunpack.c.l.b16 %v2016
        %v2801 = vunpack.c.l.b16 %v2017
        %v2802 = vunpack.c.l.b16 %v2018
        %v2803 = vunpack.c.l.b16 %v2019
        %v2804 = vunpack.c.l.b16 %v2020
        %v2805 = vunpack.c.l.b16 %v2021
        %v2806 = vunpack.c.l.b16 %v2022
        %v2807 = vunpack.c.l.b16 %v2023
        %v2808 = vunpack.c.l.b16 %v2024
        %v2809 = vunpack.c.l.b16 %v2025
        %v2810 = vunpack.c.l.b16 %v2026
        %v2811 = vunpack.c.l.b16 %v2027
        %v2812 = vunpack.c.l.b16 %v2028
        %v2813 = vunpack.c.l.b16 %v2029
        %v2814 = vunpack.c.l.b16 %v2030
        %v2815 = vunpack.c.l.b16 %v2031
        %v2816 = vunpack.c.l.b16 %v2032
        %v2817 = vunpack.c.l.b16 %v2033
        %v2818 = vunpack.c.l.b16 %v2034
        %v2819 = vunpack.c.l.b16 %v2035
        %v2820 = vunpack.c.l.b16 %v2036
        %v2821 = vunpack.c.l.b16 %v2037
        %v2822 = vunpack.c.l.b16 %v2038
        %v2823 = vunpack.c.l.b16 %v2039
        %v2824 = vunpack.c.l.b16 %v2040
        %v2825 = vunpack.c.l.b16 %v2041
        %v2826 = vunpack.c.l.b16 %v2042
        %v2827 = vunpack.c.l.b16 %v2043
        %v2828 = vunpack.c.l.b16 %v2044
        %v2829 = vunpack.c.l.b16 %v2045
        %v2830 = vunpack.c.l.b16 %v2046
        %v2831 = vunpack.c.l.b16 %v2047
        %v2832 = vunpack.c.l.b16 %v2048
        %v2833 = vunpack.c.l.b16 %v2049
        %v2834 = vunpack.c.l.b16 %v2050
        %v2835 = vunpack.c.l.b16 %v2051
        %v2836 = vunpack.c.l.b16 %v2052
        %v2837 = vunpack.c.l.b16 %v2053
        %v2838 = vunpack.c.l.b16 %v2054
        %v2839 = vunpack.c.l.b16 %v2055
        %v2840 = vunpack.c.l.b16 %v2056
        %v2841 = vunpack.c.l.b16 %v2057
        %v2842 = vunpack.c.l.b16 %v2058
        %v2843 = vunpack.c.l.b16 %v2059
        %v2844 = vunpack.c.l.b16 %v2060
        %v2845 = vunpack.c.l.b16 %v2061
        %v2846 = vunpack.c.l.b16 %v2062
        %v2847 = vunpack.c.l.b16 %v2063
        %v2848 = vunpack.c.l.b16 %v2064
        %v2849 = vunpack.c.l.b16 %v2065
        %v2850 = vunpack.c.l.b16 %v2066
        %v2851 = vunpack.c.l.b16 %v2067
        %v2852 = vunpack.c.l.b16 %v2068
        %v2853 = vunpack.c.l.b16 %v2069
        %v2854 = vunpack.c.l.b16 %v2070
        %v2855 = vunpack.c.l.b16 %v2071
        %v2856 = vunpack.c.l.b16 %v2072
        %v2857 = vunpack.c.l.b16 %v2073
        %v2858 = vunpack.c.l.b16 %v2074
        %v2859 = vunpack.c.l.b16 %v2075
        %v2860 = vunpack.c.l.b16 %v2076
        %v2861 = vunpack.c.l.b16 %v2077
        %v2862 = vunpack.c.l.b16 %v2078
        %v2863 = vunpack.c.l.b16 %v2079
        %v2864 = vunpack.c.l.b16 %v2080
        %v2865 = vunpack.c.l.b16 %v2081
        %v2866 = vunpack.c.l.b16 %v2082
        %v2867 = vunpack.c.l.b16 %v2083
        %v2868 = vunpack.c.l.b16 %v2084
        %v2869 = vunpack.c.l.b16 %v2085
        %v2870 = vunpack.c.l.b16 %v2086
        %v2871 = vunpack.c.l.b16 %v2087
        %v2872 = vunpack.c.l.b16 %v2088
        %v2873 = vunpack.c.l.b16 %v2089
        %v2874 = vunpack.c.l.b16 %v2090
        %v2875 = vunpack.c.l.b16 %v2091
        %v2876 = vunpack.c.l.b16 %v2092
        %v2877 = vunpack.c.l.b16 %v2093
        %v2878 = vunpack.c.l.b16 %v2094
        %v2879 = vunpack.c.l.b16 %v2095
        %v2880 = vunpack.c.l.b16 %v2096
        %v2881 = vunpack.c.l.b16 %v2097
        %v2882 = vunpack.c.l.b16 %v2098
        %v2883 = vunpack.c.l.b16 %v2099
        %v2884 = vunpack.c.l.b16 %v2100
        %v2885 = vunpack.c.l.b16 %v2101
        %v2886 = vunpack.c.l.b16 %v2102
        %v2887 = vunpack.c.l.b16 %v2103
        %v2888 = vunpack.c.l.b16 %v2104
        %v2889 = vunpack.c.l.b16 %v2105
        %v2890 = vunpack.c.l.b16 %v2106
        %v2891 = vunpack.c.l.b16 %v2107
        %v2892 = vunpack.c.l.b16 %v2108
        %v2893 = vunpack.c.l.b16 %v2109
        %v2894 = vunpack.c.l.b16 %v2110
        %v2895 = vunpack.c.l.b16 %v2111
        %v2896 = vpack.c.b16 %v2753, %v2752
        %v2897 = vpack.c.b16 %v2755, %v2754
        %v2898 = vpack.c.b16 %v2757, %v2756
        %v2899 = vpack.c.b16 %v2759, %v2758
        %v2900 = vpack.c.b16 %v2761, %v2760
        %v2901 = vpack.c.b16 %v2763, %v2762
        %v2902 = vpack.c.b16 %v2765, %v2764
        %v2903 = vpack.c.b16 %v2767, %v2766
        %v2904 = vpack.c.b16 %v2769, %v2768
        %v2905 = vpack.c.b16 %v2771, %v2770
        %v2906 = vpack.c.b16 %v2773, %v2772
        %v2907 = vpack.c.b16 %v2775, %v2774
        %v2908 = vpack.c.b16 %v2777, %v2776
        %v2909 = vpack.c.b16 %v2779, %v2778
        %v2910 = vpack.c.b16 %v2781, %v2780
        %v2911 = vpack.c.b16 %v2783, %v2782
        %v2912 = vpack.c.b16 %v2785, %v2784
        %v2913 = vpack.c.b16 %v2787, %v2786
        %v2914 = vpack.c.b16 %v2789, %v2788
        %v2915 = vpack.c.b16 %v2791, %v2790
        %v2916 = vpack.c.b16 %v2793, %v2792
        %v2917 = vpack.c.b16 %v2795, %v2794
        %v2918 = vpack.c.b16 %v2797, %v2796
        %v2919 = vpack.c.b16 %v2799, %v2798
        %v2920 = vpack.c.b16 %v2801, %v2800
        %v2921 = vpack.c.b16 %v2803, %v2802
        %v2922 = vpack.c.b16 %v2805, %v2804
        %v2923 = vpack.c.b16 %v2807, %v2806
        %v2924 = vpack.c.b16 %v2809, %v2808
        %v2925 = vpack.c.b16 %v2811, %v2810
        %v2926 = vpack.c.b16 %v2813, %v2812
        %v2927 = vpack.c.b16 %v2815, %v2814
        %v2928 = vpack.c.b16 %v2817, %v2816
        %v2929 = vpack.c.b16 %v2819, %v2818
        %v2930 = vpack.c.b16 %v2821, %v2820
        %v2931 = vpack.c.b16 %v2823, %v2822
        %v2932 = vpack.c.b16 %v2825, %v2824
        %v2933 = vpack.c.b16 %v2827, %v2826
        %v2934 = vpack.c.b16 %v2829, %v2828
        %v2935 = vpack.c.b16 %v2831, %v2830
        %v2936 = vpack.c.b16 %v2833, %v2832
        %v2937 = vpack.c.b16 %v2835, %v2834
        %v2938 = vpack.c.b16 %v2837, %v2836
        %v2939 = vpack.c.b16 %v2839, %v2838
        %v2940 = vpack.c.b16 %v2841, %v2840
        %v2941 = vpack.c.b16 %v2843, %v2842
        %v2942 = vpack.c.b16 %v2845, %v2844
        %v2943 = vpack.c.b16 %v2847, %v2846
        %v2944 = vpack.c.b16 %v2849, %v2848
        %v2945 = vpack.c.b16 %v2851, %v2850
        %v2946 = vpack.c.b16 %v2853, %v2852
        %v2947 = vpack.c.b16 %v2855, %v2854
        %v2948 = vpack.c.b16 %v2857, %v2856
        %v2949 = vpack.c.b16 %v2859, %v2858
        %v2950 = vpack.c.b16 %v2861, %v2860
        %v2951 = vpack.c.b16 %v2863, %v2862
        %v2952 = vpack.c.b16 %v2865, %v2864
        %v2953 = vpack.c.b16 %v2867, %v2866
        %v2954 = vpack.c.b16 %v2869, %v2868
        %v2955 = vpack.c.b16 %v2871, %v2870
        %v2956 = vpack.c.b16 %v2873, %v2872
        %v2957 = vpack.c.b16 %v2875, %v2874
        %v2958 = vpack.c.b16 %v2877, %v2876
        %v2959 = vpack.c.b16 %v2879, %v2878
        %v2960 = vpack.c.b16 %v2881, %v2880
        %v2961 = vpack.c.b16 %v2883, %v2882
        %v2962 = vpack.c.b16 %v2885, %v2884
        %v2963 = vpack.c.b16 %v2887, %v2886
        %v2964 = vpack.c.b16 %v2889, %v2888
        %v2965 = vpack.c.b16 %v2891, %v2890
        %v2966 = vpack.c.b16 %v2893, %v2892
        %v2967 = vpack.c.b16 %v2895, %v2894
        %3040 = vmatpush.bf16.msra.mxu0 %v2903
        %3041 = vmatpush.bf16.msra.mxu0 %v2902
        %3042 = vmatpush.bf16.msra.mxu0 %v2901
        %3043 = vmatpush.bf16.msra.mxu0 %v2900
        %3044 = vmatpush.bf16.msra.mxu0 %v2899
        %3045 = vmatpush.bf16.msra.mxu0 %v2898
        %3046 = vmatpush.bf16.msra.mxu0 %v2897
        %3047 = vmatpush.bf16.msra.mxu0 %v2896
        %3048 = vmatmul.bf16.gmra.mxu0 %v2410
        %v3049 = vpop.f32.mrf.mxu0
        %v3050 = vadd.f32 %v2114, %v3049
        %v3051 = vpop.f32.mrf.mxu0
        %v3052 = vadd.f32 %v2114, %v3051
        %3053 = vmatmul.bf16.gmra.mxu0 %v2419
        %v3054 = vpop.f32.mrf.mxu0
        %v3055 = vadd.f32 %v2114, %v3054
        %v3056 = vpop.f32.mrf.mxu0
        %v3057 = vadd.f32 %v2114, %v3056
        %3058 = vmatmul.bf16.gmra.mxu0 %v2428
        %v3059 = vpop.f32.mrf.mxu0
        %v3060 = vadd.f32 %v2114, %v3059
        %v3061 = vpop.f32.mrf.mxu0
        %v3062 = vadd.f32 %v2114, %v3061
        %3063 = vmatmul.bf16.gmra.mxu0 %v2437
        %v3064 = vpop.f32.mrf.mxu0
        %v3065 = vadd.f32 %v2114, %v3064
        %v3066 = vpop.f32.mrf.mxu0
        %v3067 = vadd.f32 %v2114, %v3066
        %3068 = vmatmul.bf16.gmra.mxu0 %v2446
        %v3069 = vpop.f32.mrf.mxu0
        %v3070 = vadd.f32 %v2114, %v3069
        %v3071 = vpop.f32.mrf.mxu0
        %v3072 = vadd.f32 %v2114, %v3071
        %3073 = vmatmul.bf16.gmra.mxu0 %v2455
        %v3074 = vpop.f32.mrf.mxu0
        %v3075 = vadd.f32 %v2114, %v3074
        %v3076 = vpop.f32.mrf.mxu0
        %v3077 = vadd.f32 %v2114, %v3076
        %3078 = vmatmul.bf16.gmra.mxu0 %v2464
        %v3079 = vpop.f32.mrf.mxu0
        %v3080 = vadd.f32 %v2114, %v3079
        %v3081 = vpop.f32.mrf.mxu0
        %v3082 = vadd.f32 %v2114, %v3081
        %3083 = vmatmul.bf16.gmra.mxu0 %v2473
        %v3084 = vpop.f32.mrf.mxu0
        %v3085 = vadd.f32 %v2114, %v3084
        %v3086 = vpop.f32.mrf.mxu0
        %v3087 = vadd.f32 %v2114, %v3086
        %3088 = vmatmul.bf16.gmra.mxu0 %v2482
        %v3089 = vpop.f32.mrf.mxu0
        %v3090 = vadd.f32 %v2114, %v3089
        %v3091 = vpop.f32.mrf.mxu0
        %v3092 = vadd.f32 %v2114, %v3091
        %3093 = vmatmul.bf16.gmra.mxu0 %v2491
        %v3094 = vpop.f32.mrf.mxu0
        %v3095 = vadd.f32 %v2114, %v3094
        %v3096 = vpop.f32.mrf.mxu0
        %v3097 = vadd.f32 %v2114, %v3096
        %3098 = vmatmul.bf16.gmra.mxu0 %v2500
        %v3099 = vpop.f32.mrf.mxu0
        %v3100 = vadd.f32 %v2114, %v3099
        %v3101 = vpop.f32.mrf.mxu0
        %3102 = vdwg.mxu0
        %3103 = vmatpush.bf16.msra.mxu0 %v2911
        %3104 = vmatpush.bf16.msra.mxu0 %v2910
        %3105 = vmatpush.bf16.msra.mxu0 %v2909
        %3106 = vmatpush.bf16.msra.mxu0 %v2908
        %3107 = vmatpush.bf16.msra.mxu0 %v2907
        %3108 = vmatpush.bf16.msra.mxu0 %v2906
        %3109 = vmatpush.bf16.msra.mxu0 %v2905
        %3110 = vmatpush.bf16.msra.mxu0 %v2904
        %3111 = vmatmul.bf16.gmra.mxu0 %v2411
        %v3112 = vpop.f32.mrf.mxu0
        %v3113 = vadd.f32 %v3050, %v3112
        %v3114 = vpop.f32.mrf.mxu0
        %v3115 = vadd.f32 %v3052, %v3114
        %3116 = vmatmul.bf16.gmra.mxu0 %v2420
        %v3117 = vpop.f32.mrf.mxu0
        %v3118 = vadd.f32 %v3055, %v3117
        %v3119 = vpop.f32.mrf.mxu0
        %v3120 = vadd.f32 %v3057, %v3119
        %3121 = vmatmul.bf16.gmra.mxu0 %v2429
        %v3122 = vpop.f32.mrf.mxu0
        %v3123 = vadd.f32 %v3060, %v3122
        %v3124 = vpop.f32.mrf.mxu0
        %v3125 = vadd.f32 %v3062, %v3124
        %3126 = vmatmul.bf16.gmra.mxu0 %v2438
        %v3127 = vpop.f32.mrf.mxu0
        %v3128 = vadd.f32 %v3065, %v3127
        %v3129 = vpop.f32.mrf.mxu0
        %v3130 = vadd.f32 %v3067, %v3129
        %3131 = vmatmul.bf16.gmra.mxu0 %v2447
        %v3132 = vpop.f32.mrf.mxu0
        %v3133 = vadd.f32 %v3070, %v3132
        %v3134 = vpop.f32.mrf.mxu0
        %v3135 = vadd.f32 %v3072, %v3134
        %3136 = vmatmul.bf16.gmra.mxu0 %v2456
        %v3137 = vpop.f32.mrf.mxu0
        %v3138 = vadd.f32 %v3075, %v3137
        %v3139 = vpop.f32.mrf.mxu0
        %v3140 = vadd.f32 %v3077, %v3139
        %3141 = vmatmul.bf16.gmra.mxu0 %v2465
        %v3142 = vpop.f32.mrf.mxu0
        %v3143 = vadd.f32 %v3080, %v3142
        %v3144 = vpop.f32.mrf.mxu0
        %v3145 = vadd.f32 %v3082, %v3144
        %3146 = vmatmul.bf16.gmra.mxu0 %v2474
        %v3147 = vpop.f32.mrf.mxu0
        %v3148 = vadd.f32 %v3085, %v3147
        %v3149 = vpop.f32.mrf.mxu0
        %v3150 = vadd.f32 %v3087, %v3149
        %3151 = vmatmul.bf16.gmra.mxu0 %v2483
        %v3152 = vpop.f32.mrf.mxu0
        %v3153 = vadd.f32 %v3090, %v3152
        %v3154 = vpop.f32.mrf.mxu0
        %v3155 = vadd.f32 %v3092, %v3154
        %3156 = vmatmul.bf16.gmra.mxu0 %v2492
        %v3157 = vpop.f32.mrf.mxu0
        %v3158 = vadd.f32 %v3095, %v3157
        %v3159 = vpop.f32.mrf.mxu0
        %v3160 = vadd.f32 %v3097, %v3159
        %3161 = vmatmul.bf16.gmra.mxu0 %v2501
        %v3162 = vpop.f32.mrf.mxu0
        %v3163 = vadd.f32 %v3100, %v3162
        %v3164 = vpop.f32.mrf.mxu0
        %3165 = vdwg.mxu0
        %3166 = vmatpush.bf16.msra.mxu0 %v2919
        %3167 = vmatpush.bf16.msra.mxu0 %v2918
        %3168 = vmatpush.bf16.msra.mxu0 %v2917
        %3169 = vmatpush.bf16.msra.mxu0 %v2916
        %3170 = vmatpush.bf16.msra.mxu0 %v2915
        %3171 = vmatpush.bf16.msra.mxu0 %v2914
        %3172 = vmatpush.bf16.msra.mxu0 %v2913
        %3173 = vmatpush.bf16.msra.mxu0 %v2912
        %3174 = vmatmul.bf16.gmra.mxu0 %v2412
        %v3175 = vpop.f32.mrf.mxu0
        %v3176 = vadd.f32 %v3113, %v3175
        %v3177 = vpop.f32.mrf.mxu0
        %v3178 = vadd.f32 %v3115, %v3177
        %3179 = vmatmul.bf16.gmra.mxu0 %v2421
        %v3180 = vpop.f32.mrf.mxu0
        %v3181 = vadd.f32 %v3118, %v3180
        %v3182 = vpop.f32.mrf.mxu0
        %v3183 = vadd.f32 %v3120, %v3182
        %3184 = vmatmul.bf16.gmra.mxu0 %v2430
        %v3185 = vpop.f32.mrf.mxu0
        %v3186 = vadd.f32 %v3123, %v3185
        %v3187 = vpop.f32.mrf.mxu0
        %v3188 = vadd.f32 %v3125, %v3187
        %3189 = vmatmul.bf16.gmra.mxu0 %v2439
        %v3190 = vpop.f32.mrf.mxu0
        %v3191 = vadd.f32 %v3128, %v3190
        %v3192 = vpop.f32.mrf.mxu0
        %v3193 = vadd.f32 %v3130, %v3192
        %3194 = vmatmul.bf16.gmra.mxu0 %v2448
        %v3195 = vpop.f32.mrf.mxu0
        %v3196 = vadd.f32 %v3133, %v3195
        %v3197 = vpop.f32.mrf.mxu0
        %v3198 = vadd.f32 %v3135, %v3197
        %3199 = vmatmul.bf16.gmra.mxu0 %v2457
        %v3200 = vpop.f32.mrf.mxu0
        %v3201 = vadd.f32 %v3138, %v3200
        %v3202 = vpop.f32.mrf.mxu0
        %v3203 = vadd.f32 %v3140, %v3202
        %3204 = vmatmul.bf16.gmra.mxu0 %v2466
        %v3205 = vpop.f32.mrf.mxu0
        %v3206 = vadd.f32 %v3143, %v3205
        %v3207 = vpop.f32.mrf.mxu0
        %v3208 = vadd.f32 %v3145, %v3207
        %3209 = vmatmul.bf16.gmra.mxu0 %v2475
        %v3210 = vpop.f32.mrf.mxu0
        %v3211 = vadd.f32 %v3148, %v3210
        %v3212 = vpop.f32.mrf.mxu0
        %v3213 = vadd.f32 %v3150, %v3212
        %3214 = vmatmul.bf16.gmra.mxu0 %v2484
        %v3215 = vpop.f32.mrf.mxu0
        %v3216 = vadd.f32 %v3153, %v3215
        %v3217 = vpop.f32.mrf.mxu0
        %v3218 = vadd.f32 %v3155, %v3217
        %3219 = vmatmul.bf16.gmra.mxu0 %v2493
        %v3220 = vpop.f32.mrf.mxu0
        %v3221 = vadd.f32 %v3158, %v3220
        %v3222 = vpop.f32.mrf.mxu0
        %v3223 = vadd.f32 %v3160, %v3222
        %3224 = vmatmul.bf16.gmra.mxu0 %v2502
        %v3225 = vpop.f32.mrf.mxu0
        %v3226 = vadd.f32 %v3163, %v3225
        %v3227 = vpop.f32.mrf.mxu0
        %3228 = vdwg.mxu0
        %3229 = vmatpush.bf16.msra.mxu0 %v2927
        %3230 = vmatpush.bf16.msra.mxu0 %v2926
        %3231 = vmatpush.bf16.msra.mxu0 %v2925
        %3232 = vmatpush.bf16.msra.mxu0 %v2924
        %3233 = vmatpush.bf16.msra.mxu0 %v2923
        %3234 = vmatpush.bf16.msra.mxu0 %v2922
        %3235 = vmatpush.bf16.msra.mxu0 %v2921
        %3236 = vmatpush.bf16.msra.mxu0 %v2920
        %3237 = vmatmul.bf16.gmra.mxu0 %v2413
        %v3238 = vpop.f32.mrf.mxu0
        %v3239 = vadd.f32 %v3176, %v3238
        %v3240 = vpop.f32.mrf.mxu0
        %v3241 = vadd.f32 %v3178, %v3240
        %3242 = vmatmul.bf16.gmra.mxu0 %v2422
        %v3243 = vpop.f32.mrf.mxu0
        %v3244 = vadd.f32 %v3181, %v3243
        %v3245 = vpop.f32.mrf.mxu0
        %v3246 = vadd.f32 %v3183, %v3245
        %3247 = vmatmul.bf16.gmra.mxu0 %v2431
        %v3248 = vpop.f32.mrf.mxu0
        %v3249 = vadd.f32 %v3186, %v3248
        %v3250 = vpop.f32.mrf.mxu0
        %v3251 = vadd.f32 %v3188, %v3250
        %3252 = vmatmul.bf16.gmra.mxu0 %v2440
        %v3253 = vpop.f32.mrf.mxu0
        %v3254 = vadd.f32 %v3191, %v3253
        %v3255 = vpop.f32.mrf.mxu0
        %v3256 = vadd.f32 %v3193, %v3255
        %3257 = vmatmul.bf16.gmra.mxu0 %v2449
        %v3258 = vpop.f32.mrf.mxu0
        %v3259 = vadd.f32 %v3196, %v3258
        %v3260 = vpop.f32.mrf.mxu0
        %v3261 = vadd.f32 %v3198, %v3260
        %3262 = vmatmul.bf16.gmra.mxu0 %v2458
        %v3263 = vpop.f32.mrf.mxu0
        %v3264 = vadd.f32 %v3201, %v3263
        %v3265 = vpop.f32.mrf.mxu0
        %v3266 = vadd.f32 %v3203, %v3265
        %3267 = vmatmul.bf16.gmra.mxu0 %v2467
        %v3268 = vpop.f32.mrf.mxu0
        %v3269 = vadd.f32 %v3206, %v3268
        %v3270 = vpop.f32.mrf.mxu0
        %v3271 = vadd.f32 %v3208, %v3270
        %3272 = vmatmul.bf16.gmra.mxu0 %v2476
        %v3273 = vpop.f32.mrf.mxu0
        %v3274 = vadd.f32 %v3211, %v3273
        %v3275 = vpop.f32.mrf.mxu0
        %v3276 = vadd.f32 %v3213, %v3275
        %3277 = vmatmul.bf16.gmra.mxu0 %v2485
        %v3278 = vpop.f32.mrf.mxu0
        %v3279 = vadd.f32 %v3216, %v3278
        %v3280 = vpop.f32.mrf.mxu0
        %v3281 = vadd.f32 %v3218, %v3280
        %3282 = vmatmul.bf16.gmra.mxu0 %v2494
        %v3283 = vpop.f32.mrf.mxu0
        %v3284 = vadd.f32 %v3221, %v3283
        %v3285 = vpop.f32.mrf.mxu0
        %v3286 = vadd.f32 %v3223, %v3285
        %3287 = vmatmul.bf16.gmra.mxu0 %v2503
        %v3288 = vpop.f32.mrf.mxu0
        %v3289 = vadd.f32 %v3226, %v3288
        %v3290 = vpop.f32.mrf.mxu0
        %3291 = vdwg.mxu0
        %3292 = vmatpush.bf16.msra.mxu0 %v2935
        %3293 = vmatpush.bf16.msra.mxu0 %v2934
        %3294 = vmatpush.bf16.msra.mxu0 %v2933
        %3295 = vmatpush.bf16.msra.mxu0 %v2932
        %3296 = vmatpush.bf16.msra.mxu0 %v2931
        %3297 = vmatpush.bf16.msra.mxu0 %v2930
        %3298 = vmatpush.bf16.msra.mxu0 %v2929
        %3299 = vmatpush.bf16.msra.mxu0 %v2928
        %3300 = vmatmul.bf16.gmra.mxu0 %v2414
        %v3301 = vpop.f32.mrf.mxu0
        %v3302 = vadd.f32 %v3239, %v3301
        %v3303 = vpop.f32.mrf.mxu0
        %v3304 = vadd.f32 %v3241, %v3303
        %3305 = vmatmul.bf16.gmra.mxu0 %v2423
        %v3306 = vpop.f32.mrf.mxu0
        %v3307 = vadd.f32 %v3244, %v3306
        %v3308 = vpop.f32.mrf.mxu0
        %v3309 = vadd.f32 %v3246, %v3308
        %3310 = vmatmul.bf16.gmra.mxu0 %v2432
        %v3311 = vpop.f32.mrf.mxu0
        %v3312 = vadd.f32 %v3249, %v3311
        %v3313 = vpop.f32.mrf.mxu0
        %v3314 = vadd.f32 %v3251, %v3313
        %3315 = vmatmul.bf16.gmra.mxu0 %v2441
        %v3316 = vpop.f32.mrf.mxu0
        %v3317 = vadd.f32 %v3254, %v3316
        %v3318 = vpop.f32.mrf.mxu0
        %v3319 = vadd.f32 %v3256, %v3318
        %3320 = vmatmul.bf16.gmra.mxu0 %v2450
        %v3321 = vpop.f32.mrf.mxu0
        %v3322 = vadd.f32 %v3259, %v3321
        %v3323 = vpop.f32.mrf.mxu0
        %v3324 = vadd.f32 %v3261, %v3323
        %3325 = vmatmul.bf16.gmra.mxu0 %v2459
        %v3326 = vpop.f32.mrf.mxu0
        %v3327 = vadd.f32 %v3264, %v3326
        %v3328 = vpop.f32.mrf.mxu0
        %v3329 = vadd.f32 %v3266, %v3328
        %3330 = vmatmul.bf16.gmra.mxu0 %v2468
        %v3331 = vpop.f32.mrf.mxu0
        %v3332 = vadd.f32 %v3269, %v3331
        %v3333 = vpop.f32.mrf.mxu0
        %v3334 = vadd.f32 %v3271, %v3333
        %3335 = vmatmul.bf16.gmra.mxu0 %v2477
        %v3336 = vpop.f32.mrf.mxu0
        %v3337 = vadd.f32 %v3274, %v3336
        %v3338 = vpop.f32.mrf.mxu0
        %v3339 = vadd.f32 %v3276, %v3338
        %3340 = vmatmul.bf16.gmra.mxu0 %v2486
        %v3341 = vpop.f32.mrf.mxu0
        %v3342 = vadd.f32 %v3279, %v3341
        %v3343 = vpop.f32.mrf.mxu0
        %v3344 = vadd.f32 %v3281, %v3343
        %3345 = vmatmul.bf16.gmra.mxu0 %v2495
        %v3346 = vpop.f32.mrf.mxu0
        %v3347 = vadd.f32 %v3284, %v3346
        %v3348 = vpop.f32.mrf.mxu0
        %v3349 = vadd.f32 %v3286, %v3348
        %3350 = vmatmul.bf16.gmra.mxu0 %v2504
        %v3351 = vpop.f32.mrf.mxu0
        %v3352 = vadd.f32 %v3289, %v3351
        %v3353 = vpop.f32.mrf.mxu0
        %3354 = vdwg.mxu0
        %3355 = vmatpush.bf16.msra.mxu0 %v2943
        %3356 = vmatpush.bf16.msra.mxu0 %v2942
        %3357 = vmatpush.bf16.msra.mxu0 %v2941
        %3358 = vmatpush.bf16.msra.mxu0 %v2940
        %3359 = vmatpush.bf16.msra.mxu0 %v2939
        %3360 = vmatpush.bf16.msra.mxu0 %v2938
        %3361 = vmatpush.bf16.msra.mxu0 %v2937
        %3362 = vmatpush.bf16.msra.mxu0 %v2936
        %3363 = vmatmul.bf16.gmra.mxu0 %v2415
        %v3364 = vpop.f32.mrf.mxu0
        %v3365 = vadd.f32 %v3302, %v3364
        %v3366 = vpop.f32.mrf.mxu0
        %v3367 = vadd.f32 %v3304, %v3366
        %3368 = vmatmul.bf16.gmra.mxu0 %v2424
        %v3369 = vpop.f32.mrf.mxu0
        %v3370 = vadd.f32 %v3307, %v3369
        %v3371 = vpop.f32.mrf.mxu0
        %v3372 = vadd.f32 %v3309, %v3371
        %3373 = vmatmul.bf16.gmra.mxu0 %v2433
        %v3374 = vpop.f32.mrf.mxu0
        %v3375 = vadd.f32 %v3312, %v3374
        %v3376 = vpop.f32.mrf.mxu0
        %v3377 = vadd.f32 %v3314, %v3376
        %3378 = vmatmul.bf16.gmra.mxu0 %v2442
        %v3379 = vpop.f32.mrf.mxu0
        %v3380 = vadd.f32 %v3317, %v3379
        %v3381 = vpop.f32.mrf.mxu0
        %v3382 = vadd.f32 %v3319, %v3381
        %3383 = vmatmul.bf16.gmra.mxu0 %v2451
        %v3384 = vpop.f32.mrf.mxu0
        %v3385 = vadd.f32 %v3322, %v3384
        %v3386 = vpop.f32.mrf.mxu0
        %v3387 = vadd.f32 %v3324, %v3386
        %3388 = vmatmul.bf16.gmra.mxu0 %v2460
        %v3389 = vpop.f32.mrf.mxu0
        %v3390 = vadd.f32 %v3327, %v3389
        %v3391 = vpop.f32.mrf.mxu0
        %v3392 = vadd.f32 %v3329, %v3391
        %3393 = vmatmul.bf16.gmra.mxu0 %v2469
        %v3394 = vpop.f32.mrf.mxu0
        %v3395 = vadd.f32 %v3332, %v3394
        %v3396 = vpop.f32.mrf.mxu0
        %v3397 = vadd.f32 %v3334, %v3396
        %3398 = vmatmul.bf16.gmra.mxu0 %v2478
        %v3399 = vpop.f32.mrf.mxu0
        %v3400 = vadd.f32 %v3337, %v3399
        %v3401 = vpop.f32.mrf.mxu0
        %v3402 = vadd.f32 %v3339, %v3401
        %3403 = vmatmul.bf16.gmra.mxu0 %v2487
        %v3404 = vpop.f32.mrf.mxu0
        %v3405 = vadd.f32 %v3342, %v3404
        %v3406 = vpop.f32.mrf.mxu0
        %v3407 = vadd.f32 %v3344, %v3406
        %3408 = vmatmul.bf16.gmra.mxu0 %v2496
        %v3409 = vpop.f32.mrf.mxu0
        %v3410 = vadd.f32 %v3347, %v3409
        %v3411 = vpop.f32.mrf.mxu0
        %v3412 = vadd.f32 %v3349, %v3411
        %3413 = vmatmul.bf16.gmra.mxu0 %v2505
        %v3414 = vpop.f32.mrf.mxu0
        %v3415 = vadd.f32 %v3352, %v3414
        %v3416 = vpop.f32.mrf.mxu0
        %3417 = vdwg.mxu0
        %3418 = vmatpush.bf16.msra.mxu0 %v2951
        %3419 = vmatpush.bf16.msra.mxu0 %v2950
        %3420 = vmatpush.bf16.msra.mxu0 %v2949
        %3421 = vmatpush.bf16.msra.mxu0 %v2948
        %3422 = vmatpush.bf16.msra.mxu0 %v2947
        %3423 = vmatpush.bf16.msra.mxu0 %v2946
        %3424 = vmatpush.bf16.msra.mxu0 %v2945
        %3425 = vmatpush.bf16.msra.mxu0 %v2944
        %3426 = vmatmul.bf16.gmra.mxu0 %v2416
        %v3427 = vpop.f32.mrf.mxu0
        %v3428 = vadd.f32 %v3365, %v3427
        %v3429 = vpop.f32.mrf.mxu0
        %v3430 = vadd.f32 %v3367, %v3429
        %3431 = vmatmul.bf16.gmra.mxu0 %v2425
        %v3432 = vpop.f32.mrf.mxu0
        %v3433 = vadd.f32 %v3370, %v3432
        %v3434 = vpop.f32.mrf.mxu0
        %v3435 = vadd.f32 %v3372, %v3434
        %3436 = vmatmul.bf16.gmra.mxu0 %v2434
        %v3437 = vpop.f32.mrf.mxu0
        %v3438 = vadd.f32 %v3375, %v3437
        %v3439 = vpop.f32.mrf.mxu0
        %v3440 = vadd.f32 %v3377, %v3439
        %3441 = vmatmul.bf16.gmra.mxu0 %v2443
        %v3442 = vpop.f32.mrf.mxu0
        %v3443 = vadd.f32 %v3380, %v3442
        %v3444 = vpop.f32.mrf.mxu0
        %v3445 = vadd.f32 %v3382, %v3444
        %3446 = vmatmul.bf16.gmra.mxu0 %v2452
        %v3447 = vpop.f32.mrf.mxu0
        %v3448 = vadd.f32 %v3385, %v3447
        %v3449 = vpop.f32.mrf.mxu0
        %v3450 = vadd.f32 %v3387, %v3449
        %3451 = vmatmul.bf16.gmra.mxu0 %v2461
        %v3452 = vpop.f32.mrf.mxu0
        %v3453 = vadd.f32 %v3390, %v3452
        %v3454 = vpop.f32.mrf.mxu0
        %v3455 = vadd.f32 %v3392, %v3454
        %3456 = vmatmul.bf16.gmra.mxu0 %v2470
        %v3457 = vpop.f32.mrf.mxu0
        %v3458 = vadd.f32 %v3395, %v3457
        %v3459 = vpop.f32.mrf.mxu0
        %v3460 = vadd.f32 %v3397, %v3459
        %3461 = vmatmul.bf16.gmra.mxu0 %v2479
        %v3462 = vpop.f32.mrf.mxu0
        %v3463 = vadd.f32 %v3400, %v3462
        %v3464 = vpop.f32.mrf.mxu0
        %v3465 = vadd.f32 %v3402, %v3464
        %3466 = vmatmul.bf16.gmra.mxu0 %v2488
        %v3467 = vpop.f32.mrf.mxu0
        %v3468 = vadd.f32 %v3405, %v3467
        %v3469 = vpop.f32.mrf.mxu0
        %v3470 = vadd.f32 %v3407, %v3469
        %3471 = vmatmul.bf16.gmra.mxu0 %v2497
        %v3472 = vpop.f32.mrf.mxu0
        %v3473 = vadd.f32 %v3410, %v3472
        %v3474 = vpop.f32.mrf.mxu0
        %v3475 = vadd.f32 %v3412, %v3474
        %3476 = vmatmul.bf16.gmra.mxu0 %v2506
        %v3477 = vpop.f32.mrf.mxu0
        %v3478 = vadd.f32 %v3415, %v3477
        %v3479 = vpop.f32.mrf.mxu0
        %3480 = vdwg.mxu0
        %3481 = vmatpush.bf16.msra.mxu0 %v2959
        %3482 = vmatpush.bf16.msra.mxu0 %v2958
        %3483 = vmatpush.bf16.msra.mxu0 %v2957
        %3484 = vmatpush.bf16.msra.mxu0 %v2956
        %3485 = vmatpush.bf16.msra.mxu0 %v2955
        %3486 = vmatpush.bf16.msra.mxu0 %v2954
        %3487 = vmatpush.bf16.msra.mxu0 %v2953
        %3488 = vmatpush.bf16.msra.mxu0 %v2952
        %3489 = vmatmul.bf16.gmra.mxu0 %v2417
        %v3490 = vpop.f32.mrf.mxu0
        %v3491 = vadd.f32 %v3428, %v3490
        %v3492 = vpop.f32.mrf.mxu0
        %v3493 = vadd.f32 %v3430, %v3492
        %3494 = vmatmul.bf16.gmra.mxu0 %v2426
        %v3495 = vpop.f32.mrf.mxu0
        %v3496 = vadd.f32 %v3433, %v3495
        %v3497 = vpop.f32.mrf.mxu0
        %v3498 = vadd.f32 %v3435, %v3497
        %3499 = vmatmul.bf16.gmra.mxu0 %v2435
        %v3500 = vpop.f32.mrf.mxu0
        %v3501 = vadd.f32 %v3438, %v3500
        %v3502 = vpop.f32.mrf.mxu0
        %v3503 = vadd.f32 %v3440, %v3502
        %3504 = vmatmul.bf16.gmra.mxu0 %v2444
        %v3505 = vpop.f32.mrf.mxu0
        %v3506 = vadd.f32 %v3443, %v3505
        %v3507 = vpop.f32.mrf.mxu0
        %v3508 = vadd.f32 %v3445, %v3507
        %3509 = vmatmul.bf16.gmra.mxu0 %v2453
        %v3510 = vpop.f32.mrf.mxu0
        %v3511 = vadd.f32 %v3448, %v3510
        %v3512 = vpop.f32.mrf.mxu0
        %v3513 = vadd.f32 %v3450, %v3512
        %3514 = vmatmul.bf16.gmra.mxu0 %v2462
        %v3515 = vpop.f32.mrf.mxu0
        %v3516 = vadd.f32 %v3453, %v3515
        %v3517 = vpop.f32.mrf.mxu0
        %v3518 = vadd.f32 %v3455, %v3517
        %3519 = vmatmul.bf16.gmra.mxu0 %v2471
        %v3520 = vpop.f32.mrf.mxu0
        %v3521 = vadd.f32 %v3458, %v3520
        %v3522 = vpop.f32.mrf.mxu0
        %v3523 = vadd.f32 %v3460, %v3522
        %3524 = vmatmul.bf16.gmra.mxu0 %v2480
        %v3525 = vpop.f32.mrf.mxu0
        %v3526 = vadd.f32 %v3463, %v3525
        %v3527 = vpop.f32.mrf.mxu0
        %v3528 = vadd.f32 %v3465, %v3527
        %3529 = vmatmul.bf16.gmra.mxu0 %v2489
        %v3530 = vpop.f32.mrf.mxu0
        %v3531 = vadd.f32 %v3468, %v3530
        %v3532 = vpop.f32.mrf.mxu0
        %v3533 = vadd.f32 %v3470, %v3532
        %3534 = vmatmul.bf16.gmra.mxu0 %v2498
        %v3535 = vpop.f32.mrf.mxu0
        %v3536 = vadd.f32 %v3473, %v3535
        %v3537 = vpop.f32.mrf.mxu0
        %v3538 = vadd.f32 %v3475, %v3537
        %3539 = vmatmul.bf16.gmra.mxu0 %v2507
        %v3540 = vpop.f32.mrf.mxu0
        %v3541 = vadd.f32 %v3478, %v3540
        %v3542 = vpop.f32.mrf.mxu0
        %3543 = vdwg.mxu0
        %3544 = vmatpush.bf16.msra.mxu0 %v2967
        %3545 = vmatpush.bf16.msra.mxu0 %v2966
        %3546 = vmatpush.bf16.msra.mxu0 %v2965
        %3547 = vmatpush.bf16.msra.mxu0 %v2964
        %3548 = vmatpush.bf16.msra.mxu0 %v2963
        %3549 = vmatpush.bf16.msra.mxu0 %v2962
        %3550 = vmatpush.bf16.msra.mxu0 %v2961
        %3551 = vmatpush.bf16.msra.mxu0 %v2960
        %3552 = vmatmul.bf16.gmra.mxu0 %v2418
        %v3553 = vpop.f32.mrf.mxu0
        %v3554 = vadd.f32 %v3491, %v3553
        %v3555 = vpop.f32.mrf.mxu0
        %v3556 = vadd.f32 %v3493, %v3555
        %3557 = vmatmul.bf16.gmra.mxu0 %v2427
        %v3558 = vpop.f32.mrf.mxu0
        %v3559 = vadd.f32 %v3496, %v3558
        %v3560 = vpop.f32.mrf.mxu0
        %v3561 = vadd.f32 %v3498, %v3560
        %3562 = vmatmul.bf16.gmra.mxu0 %v2436
        %v3563 = vpop.f32.mrf.mxu0
        %v3564 = vadd.f32 %v3501, %v3563
        %v3565 = vpop.f32.mrf.mxu0
        %v3566 = vadd.f32 %v3503, %v3565
        %3567 = vmatmul.bf16.gmra.mxu0 %v2445
        %v3568 = vpop.f32.mrf.mxu0
        %v3569 = vadd.f32 %v3506, %v3568
        %v3570 = vpop.f32.mrf.mxu0
        %v3571 = vadd.f32 %v3508, %v3570
        %3572 = vmatmul.bf16.gmra.mxu0 %v2454
        %v3573 = vpop.f32.mrf.mxu0
        %v3574 = vadd.f32 %v3511, %v3573
        %v3575 = vpop.f32.mrf.mxu0
        %v3576 = vadd.f32 %v3513, %v3575
        %3577 = vmatmul.bf16.gmra.mxu0 %v2463
        %v3578 = vpop.f32.mrf.mxu0
        %v3579 = vadd.f32 %v3516, %v3578
        %v3580 = vpop.f32.mrf.mxu0
        %v3581 = vadd.f32 %v3518, %v3580
        %3582 = vmatmul.bf16.gmra.mxu0 %v2472
        %v3583 = vpop.f32.mrf.mxu0
        %v3584 = vadd.f32 %v3521, %v3583
        %v3585 = vpop.f32.mrf.mxu0
        %v3586 = vadd.f32 %v3523, %v3585
        %3587 = vmatmul.bf16.gmra.mxu0 %v2481
        %v3588 = vpop.f32.mrf.mxu0
        %v3589 = vadd.f32 %v3526, %v3588
        %v3590 = vpop.f32.mrf.mxu0
        %v3591 = vadd.f32 %v3528, %v3590
        %3592 = vmatmul.bf16.gmra.mxu0 %v2490
        %v3593 = vpop.f32.mrf.mxu0
        %v3594 = vadd.f32 %v3531, %v3593
        %v3595 = vpop.f32.mrf.mxu0
        %v3596 = vadd.f32 %v3533, %v3595
        %3597 = vmatmul.bf16.gmra.mxu0 %v2499
        %v3598 = vpop.f32.mrf.mxu0
        %v3599 = vadd.f32 %v3536, %v3598
        %v3600 = vpop.f32.mrf.mxu0
        %v3601 = vadd.f32 %v3538, %v3600
        %3602 = vmatmul.bf16.gmra.mxu0 %v2508
        %v3603 = vpop.f32.mrf.mxu0
        %v3604 = vadd.f32 %v3541, %v3603
        %v3605 = vpop.f32.mrf.mxu0
        %3606 = vdwg.mxu0
        %v3607 = vmax.f32 %v3554, 0.0
        %v3608 = vmax.f32 %v3556, 0.0
        %v3609 = vmax.f32 %v3559, 0.0
        %v3610 = vmax.f32 %v3561, 0.0
        %v3611 = vmax.f32 %v3564, 0.0
        %v3612 = vmax.f32 %v3566, 0.0
        %v3613 = vmax.f32 %v3569, 0.0
        %v3614 = vmax.f32 %v3571, 0.0
        %v3615 = vmax.f32 %v3574, 0.0
        %v3616 = vmax.f32 %v3576, 0.0
        %v3617 = vmax.f32 %v3579, 0.0
        %v3618 = vmax.f32 %v3581, 0.0
        %v3619 = vmax.f32 %v3584, 0.0
        %v3620 = vmax.f32 %v3586, 0.0
        %v3621 = vmax.f32 %v3589, 0.0
        %v3622 = vmax.f32 %v3591, 0.0
        %v3623 = vmax.f32 %v3594, 0.0
        %v3624 = vmax.f32 %v3596, 0.0
        %v3625 = vmax.f32 %v3599, 0.0
        %v3626 = vmax.f32 %v3601, 0.0
        %v3627 = vmax.f32 %v3604, 0.0
        %v3628 = vpack.c.bf16 %v3608, %v3607
        %v3629 = vpack.c.bf16 %v3610, %v3609
        %v3630 = vpack.c.bf16 %v3612, %v3611
        %v3631 = vpack.c.bf16 %v3614, %v3613
        %v3632 = vpack.c.bf16 %v3616, %v3615
        %v3633 = vpack.c.bf16 %v3618, %v3617
        %v3634 = vpack.c.bf16 %v3620, %v3619
        %v3635 = vpack.c.bf16 %v3622, %v3621
        %v3636 = vpack.c.bf16 %v3624, %v3623
        %v3637 = vpack.c.bf16 %v3626, %v3625
        %v3638 = vpack.c.bf16 %v3627, %v3627
        %v3639 = vld [vmem:[#allocation10] sm:$0xf]
        %v3640 = vld [vmem:[#allocation10 + $0x4] sm:$0xf]
        %v3641 = vld [vmem:[#allocation10 + $0x8] sm:$0xf]
        %v3642 = vld [vmem:[#allocation10 + $0xc] sm:$0xf]
        %v3643 = vld [vmem:[#allocation10 + $0x10] sm:$0xf]
        %v3644 = vld [vmem:[#allocation10 + $0x14] sm:$0xf]
        %v3645 = vld [vmem:[#allocation10 + $0x18] sm:$0xf]
        %v3646 = vld [vmem:[#allocation10 + $0x1c] sm:$0xf]
        %v3647 = vld [vmem:[#allocation10 + $0x20] sm:$0xf]
        %v3648 = vld [vmem:[#allocation10 + $0x24] sm:$0xf]
        %v3649 = vld [vmem:[#allocation10 + $0x28] sm:$0xf]
        %v3650 = vld [vmem:[#allocation10 + $0x2c] sm:$0xf]
        %v3651 = vld [vmem:[#allocation10 + $0x30] sm:$0xf]
        %v3652 = vld [vmem:[#allocation10 + $0x34] sm:$0xf]
        %v3653 = vld [vmem:[#allocation10 + $0x38] sm:$0xf]
        %v3654 = vld [vmem:[#allocation10 + $0x3c] sm:$0xf]
        %v3655 = vld [vmem:[%s5] sm:$0x1]
        %v3657 = vperm.slane %v3655, 0
        %v3675 = vunpack.c.l.b16 %v3639
        %v3676 = vunpack.c.l.b16 %v3640
        %v3677 = vunpack.c.l.b16 %v3641
        %v3678 = vunpack.c.l.b16 %v3642
        %v3679 = vunpack.c.l.b16 %v3643
        %v3680 = vunpack.c.l.b16 %v3644
        %v3681 = vunpack.c.l.b16 %v3645
        %v3682 = vunpack.c.l.b16 %v3646
        %v3683 = vunpack.c.l.b16 %v3647
        %v3684 = vunpack.c.l.b16 %v3648
        %v3685 = vunpack.c.l.b16 %v3649
        %v3686 = vunpack.c.l.b16 %v3650
        %v3687 = vunpack.c.l.b16 %v3651
        %v3688 = vunpack.c.l.b16 %v3652
        %v3689 = vunpack.c.l.b16 %v3653
        %v3690 = vunpack.c.l.b16 %v3654
        %v3691 = vpack.c.b16 %v3676, %v3675
        %v3692 = vpack.c.b16 %v3678, %v3677
        %v3693 = vpack.c.b16 %v3680, %v3679
        %v3694 = vpack.c.b16 %v3682, %v3681
        %v3695 = vpack.c.b16 %v3684, %v3683
        %v3696 = vpack.c.b16 %v3686, %v3685
        %v3697 = vpack.c.b16 %v3688, %v3687
        %v3698 = vpack.c.b16 %v3690, %v3689
        %3707 = vmatpush.bf16.msra.mxu0 %v3698
        %3708 = vmatpush.bf16.msra.mxu0 %v3697
        %3709 = vmatpush.bf16.msra.mxu0 %v3696
        %3710 = vmatpush.bf16.msra.mxu0 %v3695
        %3711 = vmatpush.bf16.msra.mxu0 %v3694
        %3712 = vmatpush.bf16.msra.mxu0 %v3693
        %3713 = vmatpush.bf16.msra.mxu0 %v3692
        %3714 = vmatpush.bf16.msra.mxu0 %v3691
        %3715 = vmatmul.bf16.gmra.mxu0 %v3628
        %v3716 = vpop.f32.mrf.mxu0
        %v3717 = vadd.f32 %v3657, %v3716
        %v3718 = vpop.f32.mrf.mxu0
        %v3719 = vadd.f32 %v3657, %v3718
        %3720 = vmatmul.bf16.gmra.mxu0 %v3629
        %v3721 = vpop.f32.mrf.mxu0
        %v3722 = vadd.f32 %v3657, %v3721
        %v3723 = vpop.f32.mrf.mxu0
        %v3724 = vadd.f32 %v3657, %v3723
        %3725 = vmatmul.bf16.gmra.mxu0 %v3630
        %v3726 = vpop.f32.mrf.mxu0
        %v3727 = vadd.f32 %v3657, %v3726
        %v3728 = vpop.f32.mrf.mxu0
        %v3729 = vadd.f32 %v3657, %v3728
        %3730 = vmatmul.bf16.gmra.mxu0 %v3631
        %v3731 = vpop.f32.mrf.mxu0
        %v3732 = vadd.f32 %v3657, %v3731
        %v3733 = vpop.f32.mrf.mxu0
        %v3734 = vadd.f32 %v3657, %v3733
        %3735 = vmatmul.bf16.gmra.mxu0 %v3632
        %v3736 = vpop.f32.mrf.mxu0
        %v3737 = vadd.f32 %v3657, %v3736
        %v3738 = vpop.f32.mrf.mxu0
        %v3739 = vadd.f32 %v3657, %v3738
        %3740 = vmatmul.bf16.gmra.mxu0 %v3633
        %v3741 = vpop.f32.mrf.mxu0
        %v3742 = vadd.f32 %v3657, %v3741
        %v3743 = vpop.f32.mrf.mxu0
        %v3744 = vadd.f32 %v3657, %v3743
        %3745 = vmatmul.bf16.gmra.mxu0 %v3634
        %v3746 = vpop.f32.mrf.mxu0
        %v3747 = vadd.f32 %v3657, %v3746
        %v3748 = vpop.f32.mrf.mxu0
        %v3749 = vadd.f32 %v3657, %v3748
        %3750 = vmatmul.bf16.gmra.mxu0 %v3635
        %v3751 = vpop.f32.mrf.mxu0
        %v3752 = vadd.f32 %v3657, %v3751
        %v3753 = vpop.f32.mrf.mxu0
        %v3754 = vadd.f32 %v3657, %v3753
        %3755 = vmatmul.bf16.gmra.mxu0 %v3636
        %v3756 = vpop.f32.mrf.mxu0
        %v3757 = vadd.f32 %v3657, %v3756
        %v3758 = vpop.f32.mrf.mxu0
        %v3759 = vadd.f32 %v3657, %v3758
        %3760 = vmatmul.bf16.gmra.mxu0 %v3637
        %v3761 = vpop.f32.mrf.mxu0
        %v3762 = vadd.f32 %v3657, %v3761
        %v3763 = vpop.f32.mrf.mxu0
        %v3764 = vadd.f32 %v3657, %v3763
        %3765 = vmatmul.bf16.gmra.mxu0 %v3638
        %v3766 = vpop.f32.mrf.mxu0
        %v3767 = vadd.f32 %v3657, %v3766
        %v3768 = vpop.f32.mrf.mxu0
        %3769 = vdwg.mxu0
        %3770 = vst [vmem:[%s381] sm:$0xff] %v3717
        %3771 = vst [vmem:[%s381 + $0x8] sm:$0xff] %v3719
        %3772 = vst [vmem:[%s381 + $0x10] sm:$0xff] %v3722
        %3773 = vst [vmem:[%s381 + $0x18] sm:$0xff] %v3724
        %3774 = vst [vmem:[%s381 + $0x20] sm:$0xff] %v3727
        %3775 = vst [vmem:[%s381 + $0x28] sm:$0xff] %v3729
        %3776 = vst [vmem:[%s381 + $0x30] sm:$0xff] %v3732
        %3777 = vst [vmem:[%s381 + $0x38] sm:$0xff] %v3734
        %3778 = vst [vmem:[%s381 + $0x40] sm:$0xff] %v3737
        %3779 = vst [vmem:[%s381 + $0x48] sm:$0xff] %v3739
        %3780 = vst [vmem:[%s381 + $0x50] sm:$0xff] %v3742
        %3781 = vst [vmem:[%s381 + $0x58] sm:$0xff] %v3744
        %3782 = vst [vmem:[%s381 + $0x60] sm:$0xff] %v3747
        %3783 = vst [vmem:[%s381 + $0x68] sm:$0xff] %v3749
        %3784 = vst [vmem:[%s381 + $0x70] sm:$0xff] %v3752
        %3785 = vst [vmem:[%s381 + $0x78] sm:$0xff] %v3754
        %3786 = vst [vmem:[%s381 + $0x80] sm:$0xff] %v3757
        %3787 = vst [vmem:[%s381 + $0x88] sm:$0xff] %v3759
        %3788 = vst [vmem:[%s381 + $0x90] sm:$0xff] %v3762
        %3789 = vst [vmem:[%s381 + $0x98] sm:$0xff] %v3764
        %3790 = vst [vmem:[%s381 + $0xa0] sm:$0xff] %v3767
        %s3791 = sand.u32 %s193, 1
        %s3792 = scalar_lea.sflag [#allocation6], %s3791
        %s3793 = sand.u32 %s193, 1
        %s3794 = smul.addr %s3793, 168
        %s3795 = scalar_lea.vmem [#allocation12], %s3794
        // Predicated region
        $region61: #{tpu_custom_call.1} parent=43 // pred_check
          %p3796 = pneg %p203
        $region62: #{tpu_custom_call.1} parent=43 // pred_check_branch
          %3798 = sbr.rel (%p3796) target = $region64
        $region63: #{tpu_custom_call.1} parent=43 // pred_region
          %s3799 = smul.u32 21, %s32
          %3801 = vsyncadd %s3792, 0
          %s3802 = smul.addr %s31, 63
          %s3803 = sadd.s32 %s3799, %s3802
          %s3804 = smul.addr %s3803, 8
          %s3805 = scalar_lea.hbm %s6, %s3804
          %s3806 = sshll.u32 %s3795, 4
          %s3807 = int_to_ptr.vmem [resolvable:$true] %s3806
          %s3808 = sshll.u32 %s3805, 4
          %s3809 = int_to_ptr.hbm [resolvable:$true] %s3808
          %3814 = dma.vmem_to_hbm [thread:$0]  %s3807, 2688, %s3809, %s3792, 128, 128, 8
        $region64: #{tpu_custom_call.1} parent=43 // pred_fallthru
          _
      $region44: #{tpu_custom_call.1} parent=5 // pred_fallthru
        _
      %p3815 = scmp.le.s32.totalorder 2, %s22
      // Predicated region
      $region65: #{tpu_custom_call.1} parent=5 // pred_check
        %p3816 = pneg %p3815
      $region66: #{tpu_custom_call.1} parent=5 // pred_check_branch
        %3818 = sbr.rel (%p3816) target = $region68
      $region67: #{tpu_custom_call.1} parent=5 // pred_region
        %s3819 = ssub.s32 %s22, 2
        // Predicated region
        $region69: #{tpu_custom_call.1} parent=67 // pred_check
          %p3820 = pneg %p209
        $region70: #{tpu_custom_call.1} parent=67 // pred_check_branch
          %3822 = sbr.rel (%p3820) target = $region72
        $region71: #{tpu_custom_call.1} parent=67 // pred_region
          %s3823 = sand.u32 %s194, 1
          %s3824 = scalar_lea.sflag [#allocation6], %s3823
          %s3825 = sand.u32 %s194, 1
          %s3826 = smul.addr %s3825, 168
          %s3827 = scalar_lea.vmem [#allocation12], %s3826
          %3829 = dma.done %s3824, 2688
        $region72: #{tpu_custom_call.1} parent=67 // pred_fallthru
          _
      $region68: #{tpu_custom_call.1} parent=5 // pred_fallthru
        _
    $region6: #{tpu_custom_call.1} parent=1 // loop_footer
      %s26 = sadd.s32 1, %s22
    $region7: #{tpu_custom_call.1} parent=1 // loop_footer_branch
      %21 = sbr.rel target = $region3
    $region8: #{tpu_custom_call.1} parent=1 // loop_exit
      _
    %3830 = vsyncpa [#allocation5], 1
    %s3831 = scalar_lea.sflag [#allocation5], 1
    %3832 = vsyncpa %s3831, 1
    %3833 = vsyncpa [#allocation8], 1
    %s3834 = scalar_lea.sflag [#allocation8], 1
    %3835 = vsyncpa %s3834, 1
    %3836 = vsyncpa [#allocation11], 1
    %3837 = vsyncpa [#allocation6], 1
    %s3838 = scalar_lea.sflag [#allocation6], 1
    %3839 = vsyncpa %s3838, 1

</llo_original>
